<compile_context>
chip_gen: v7x
topology: tpu7x:2x2x1
jax: 0.10.0
libtpu: 0.0.40
codegen_flags: <defaults>
</compile_context>

<pallas_src>
import functools

import jax
import jax.numpy as jnp
import numpy as np
from jax.experimental import pallas as pl
from jax.experimental.pallas import tpu as pltpu


TILE_F = 1408      # conv-output features per grid step (multiple of 128)
NOUT_PAD = 128     # lane-dense logits width (sliced back to nOutput outside)
MAX_TILE_N = 256   # cap on batch rows per grid step


# ------------------------------ Pallas kernel ------------------------------ #

def fused_forward_kernel(x_ref, wc_ref, bc_ref, wl_ref, bl_ref, o_ref, acc_ref):
    """One (batch-tile, feature-tile) step of the fused conv+ReLU+linear."""
    j = pl.program_id(1)

    @pl.when(j == 0)
    def _init():
        # Fold the linear bias into the accumulator init (epilogue = pure store).
        acc_ref[...] = jnp.broadcast_to(bl_ref[...], acc_ref.shape)

    # conv (+bias, +ReLU) for this slice of conv-output features:
    #   (TILE_N, 784) @ (784, TILE_F) -> (TILE_N, TILE_F), stays in VMEM.
    h = jnp.dot(x_ref[...], wc_ref[...], preferred_element_type=jnp.float32)
    h = jnp.maximum(h + bc_ref[...], 0.0)

    # partial linear layer, accumulated over feature tiles:
    #   (TILE_N, TILE_F) @ (TILE_F, NOUT_PAD)
    acc_ref[...] += jnp.dot(h, wl_ref[...], preferred_element_type=jnp.float32)

    @pl.when(j == pl.num_programs(1) - 1)
    def _finalize():
        o_ref[...] = acc_ref[...].astype(o_ref.dtype)


# ------------------------------ weight prep -------------------------------- #

def _round_up(x, m):
    return ((x + m - 1) // m) * m


def prepare_params(conv_w, conv_b, lin_w, lin_b, img_hw=(28, 28)):
    """One-time prep: lower Conv2d to a dense (784 -> 5408) matmul whose columns
    are already in PyTorch's channel-major Flatten order, and pad everything to
    lane-friendly shapes."""
    OC, _, K, _ = conv_w.shape
    H, W = img_hw
    OH, OW = H - K + 1, W - K + 1
    NPIX, F = H * W, OC * OH * OW
    n_out = lin_w.shape[0]

    # Wc_big[ih*W+iw, oc*OH*OW + oh*OW + ow] = conv_w[oc, 0, ih-oh, iw-ow]
    ih = jnp.arange(H)
    oh = jnp.arange(OH)
    iw = jnp.arange(W)
    ow = jnp.arange(OW)
    ki = ih[:, None] - oh[None, :]                     # (H, OH)
    kj = iw[:, None] - ow[None, :]                     # (W, OW)
    vi = (ki >= 0) & (ki < K)
    vj = (kj >= 0) & (kj < K)
    w2 = conv_w[:, 0]                                  # (OC, K, K)
    g = w2[:, jnp.clip(ki, 0, K - 1)][..., jnp.clip(kj, 0, K - 1)]  # (OC,H,OH,W,OW)
    g = jnp.where(vi[None, :, :, None, None] & vj[None, None, None, :, :], g, 0.0)
    wc_big = g.transpose(1, 3, 0, 2, 4).reshape(NPIX, F)           # (784, 5408)
    bc_big = jnp.repeat(conv_b, OH * OW)                           # (5408,)

    f_pad = _round_up(F, TILE_F)
    n_out_pad = _round_up(n_out, NOUT_PAD)
    wc_big = jnp.pad(wc_big, ((0, 0), (0, f_pad - F))).astype(jnp.float32)
    bc_big = jnp.pad(bc_big, (0, f_pad - F)).reshape(1, f_pad).astype(jnp.float32)
    wl_t = jnp.pad(lin_w.T, ((0, f_pad - F), (0, n_out_pad - n_out))).astype(jnp.float32)
    bl = jnp.pad(lin_b, (0, n_out_pad - n_out)).reshape(1, n_out_pad).astype(jnp.float32)
    return wc_big, bc_big, wl_t, bl


# -------------------------------- forward ---------------------------------- #

@functools.partial(jax.jit, static_argnames=("n_out",))
def neural_network_forward(x, prepared, n_out):
    """Forward pass equivalent to the PyTorch module. x: (N, 1, 28, 28) f32."""
    wc_big, bc_big, wl_t, bl = prepared
    N = x.shape[0]
    npix = wc_big.shape[0]
    f_pad = wc_big.shape[1]
    n_out_pad = wl_t.shape[1]

    # Adaptive batch tile: sublane multiple, capped so VMEM stays small but big
    # enough that weight streaming is amortized over many rows for large N.
    tile_n = min(MAX_TILE_N, _round_up(max(N, 1), 8))

    x_flat = x.reshape(N, npix).astype(jnp.float32)
    n_pad = _round_up(max(N, 1), tile_n)
    x_flat = jnp.pad(x_flat, ((0, n_pad - N), (0, 0)))

    grid = (n_pad // tile_n, f_pad // TILE_F)
    out = pl.pallas_call(
        fused_forward_kernel,
        out_shape=jax.ShapeDtypeStruct((n_pad, n_out_pad), jnp.float32),
        grid_spec=pltpu.PrefetchScalarGridSpec(
            num_scalar_prefetch=0,
            grid=grid,
            in_specs=[
                pl.BlockSpec((tile_n, npix), lambda i, j: (i, 0)),      # x
                pl.BlockSpec((npix, TILE_F), lambda i, j: (0, j)),      # conv W
                pl.BlockSpec((1, TILE_F), lambda i, j: (0, j)),         # conv b
                pl.BlockSpec((TILE_F, n_out_pad), lambda i, j: (j, 0)), # linear W^T
                pl.BlockSpec((1, n_out_pad), lambda i, j: (0, 0)),      # linear b
            ],
            out_specs=pl.BlockSpec((tile_n, n_out_pad), lambda i, j: (i, 0)),
            scratch_shapes=[pltpu.VMEM((tile_n, n_out_pad), jnp.float32)],
        ),
        compiler_params=pltpu.CompilerParams(
            dimension_semantics=("parallel", "arbitrary"),
            vmem_limit_bytes=32 * 1024 * 1024,
        ),
    )(x_flat, wc_big, bc_big, wl_t, bl)
    return out[:N, :n_out]


# ------------------------------ reference ---------------------------------- #

def reference_forward(x, params):
    conv_w, conv_b, lin_w, lin_b = params
    y = jax.lax.conv_general_dilated(
        x, conv_w, window_strides=(1, 1), padding="VALID",
        dimension_numbers=("NCHW", "OIHW", "NCHW"),
        precision=jax.lax.Precision.HIGHEST)
    y = jnp.maximum(y + conv_b[None, :, None, None], 0.0)
    y = y.reshape(x.shape[0], -1)                     # channel-major flatten
    return jnp.dot(y, lin_w.T, precision=jax.lax.Precision.HIGHEST) + lin_b[None, :]


# --------------------------------- main ------------------------------------ #

if __name__ == "__main__":
    # Module config implied by the forward pass: Conv2d(1, 32, k=16) on 28x28
    # input gives 32*13*13 = 5408 features feeding Linear(5408, nOutput).
    N, H, W, K, OC = 2, 28, 28, 16, 32
    n_output = 10

    key = jax.random.PRNGKey(0)
    kx, kcw, kcb, klw, klb = jax.random.split(key, 5)

    x = jax.random.normal(kx, (N, 1, H, W), dtype=jnp.float32)

    # Deterministic synthetic parameters (same shapes as the nn.Module).
    conv_w = 0.05 * jax.random.normal(kcw, (OC, 1, K, K), dtype=jnp.float32)
    conv_b = 0.05 * jax.random.normal(kcb, (OC,), dtype=jnp.float32)
    lin_w = 0.02 * jax.random.normal(klw, (n_output, OC * 13 * 13), dtype=jnp.float32)
    lin_b = 0.02 * jax.random.normal(klb, (n_output,), dtype=jnp.float32)
    params = (conv_w, conv_b, lin_w, lin_b)

    prepared = prepare_params(conv_w, conv_b, lin_w, lin_b, img_hw=(H, W))

    logits = jax.block_until_ready(
        neural_network_forward(x, prepared, n_out=n_output))
    ref = jax.block_until_ready(reference_forward(x, params))

    assert logits.shape == (N, n_output), logits.shape
    np.testing.assert_allclose(np.asarray(logits), np.asarray(ref),
                               rtol=1e-2, atol=1e-2)
    print("KERNEL_OK")
</pallas_src>

<mosaic_0001>
module attributes {stable_mosaic.version = 11 : i64} {
  func.func @fused_forward_kernel(%arg0: i32, %arg1: i32, %arg2: memref<8x784xf32, #tpu.memory_space<vmem>>, %arg3: memref<784x1408xf32, #tpu.memory_space<vmem>>, %arg4: memref<1x1408xf32, #tpu.memory_space<vmem>>, %arg5: memref<1408x128xf32, #tpu.memory_space<vmem>>, %arg6: memref<1x128xf32, #tpu.memory_space<vmem>>, %arg7: memref<8x128xf32, #tpu.memory_space<vmem>>, %arg8: memref<8x128xf32, #tpu.memory_space<vmem>>) attributes {dimension_semantics = [#tpu.dimension_semantics<parallel>, #tpu.dimension_semantics<arbitrary>], iteration_bounds = array<i64: 1, 4>, scalar_prefetch = 0 : i64, scratch_operands = 1 : i64, tpu.core_type = #tpu.core_type<tc>, window_params = [{transform_indices = @transform_0, window_bounds = array<i64: 8, 784>}, {transform_indices = @transform_1, window_bounds = array<i64: 784, 1408>}, {transform_indices = @transform_2, window_bounds = array<i64: 1, 1408>}, {transform_indices = @transform_3, window_bounds = array<i64: 1408, 128>}, {pipeline_mode = #tpu.pipeline_mode<synchronous>, transform_indices = @transform_4, window_bounds = array<i64: 1, 128>}, {transform_indices = @transform_5, window_bounds = array<i64: 8, 128>}]} {
    %c0_i32 = arith.constant 0 : i32
    %0 = arith.cmpi eq, %arg1, %c0_i32 : i32
    %1 = arith.extui %0 : i1 to i32
    %c0_i32_0 = arith.constant 0 : i32
    %2 = arith.cmpi ne, %1, %c0_i32_0 : i32
    scf.if %2 {
      %c0_15 = arith.constant 0 : index
      %c0_16 = arith.constant 0 : index
      %19 = vector.load %arg6[%c0_15, %c0_16] : memref<1x128xf32, #tpu.memory_space<vmem>>, vector<1x128xf32>
      %20 = vector.shape_cast %19 : vector<1x128xf32> to vector<1x128xf32>
      %21 = vector.broadcast %20 : vector<1x128xf32> to vector<8x128xf32>
      %c0_17 = arith.constant 0 : index
      %c0_18 = arith.constant 0 : index
      %22 = vector.load %arg8[%c0_17, %c0_18] : memref<8x128xf32, #tpu.memory_space<vmem>>, vector<8x128xf32>
      tpu.vector_store %arg8[%c0_17, %c0_18], %21 {strides = array<i32>} : memref<8x128xf32, #tpu.memory_space<vmem>>, vector<8x128xf32>,
    } else {
    }
    %c0 = arith.constant 0 : index
    %c0_1 = arith.constant 0 : index
    %3 = vector.load %arg2[%c0, %c0_1] : memref<8x784xf32, #tpu.memory_space<vmem>>, vector<8x784xf32>
    %c0_2 = arith.constant 0 : index
    %c0_3 = arith.constant 0 : index
    %4 = vector.load %arg3[%c0_2, %c0_3] : memref<784x1408xf32, #tpu.memory_space<vmem>>, vector<784x1408xf32>
    %cst = arith.constant dense<0.000000e+00> : vector<8x1408xf32>
    %5 = tpu.matmul %3, %4, %cst {dimension_numbers = #tpu.dot_dimension_numbers<[1], [0], [0], [1], [0, 0, 1, 1], [], []>} : vector<8x784xf32>, vector<784x1408xf32>, vector<8x1408xf32> -> vector<8x1408xf32>
    %c0_4 = arith.constant 0 : index
    %c0_5 = arith.constant 0 : index
    %6 = vector.load %arg4[%c0_4, %c0_5] : memref<1x1408xf32, #tpu.memory_space<vmem>>, vector<1x1408xf32>
    %7 = vector.broadcast %6 : vector<1x1408xf32> to vector<8x1408xf32>
    %8 = arith.addf %5, %7 : vector<8x1408xf32>
    %cst_6 = arith.constant 0.000000e+00 : f32
    %9 = vector.broadcast %cst_6 : f32 to vector<8x1408xf32>
    %10 = arith.maximumf %8, %9 : vector<8x1408xf32>
    %c0_7 = arith.constant 0 : index
    %c0_8 = arith.constant 0 : index
    %11 = vector.load %arg8[%c0_7, %c0_8] : memref<8x128xf32, #tpu.memory_space<vmem>>, vector<8x128xf32>
    %c0_9 = arith.constant 0 : index
    %c0_10 = arith.constant 0 : index
    %12 = vector.load %arg5[%c0_9, %c0_10] : memref<1408x128xf32, #tpu.memory_space<vmem>>, vector<1408x128xf32>
    %cst_11 = arith.constant dense<0.000000e+00> : vector<8x128xf32>
    %13 = tpu.matmul %10, %12, %cst_11 {dimension_numbers = #tpu.dot_dimension_numbers<[1], [0], [0], [1], [0, 0, 1, 1], [], []>} : vector<8x1408xf32>, vector<1408x128xf32>, vector<8x128xf32> -> vector<8x128xf32>
    %14 = arith.addf %11, %13 : vector<8x128xf32>
    %c0_12 = arith.constant 0 : index
    %c0_13 = arith.constant 0 : index
    %15 = vector.load %arg8[%c0_12, %c0_13] : memref<8x128xf32, #tpu.memory_space<vmem>>, vector<8x128xf32>
    tpu.vector_store %arg8[%c0_12, %c0_13], %14 {strides = array<i32>} : memref<8x128xf32, #tpu.memory_space<vmem>>, vector<8x128xf32>,
    %c3_i32 = arith.constant 3 : i32
    %16 = arith.cmpi eq, %arg1, %c3_i32 : i32
    %17 = arith.extui %16 : i1 to i32
    %c0_i32_14 = arith.constant 0 : i32
    %18 = arith.cmpi ne, %17, %c0_i32_14 : i32
    scf.if %18 {
      %c0_15 = arith.constant 0 : index
      %c0_16 = arith.constant 0 : index
      %19 = vector.load %arg8[%c0_15, %c0_16] : memref<8x128xf32, #tpu.memory_space<vmem>>, vector<8x128xf32>
      %c0_17 = arith.constant 0 : index
      %c0_18 = arith.constant 0 : index
      %20 = vector.load %arg7[%c0_17, %c0_18] : memref<8x128xf32, #tpu.memory_space<vmem>>, vector<8x128xf32>
      tpu.vector_store %arg7[%c0_17, %c0_18], %19 {strides = array<i32>} : memref<8x128xf32, #tpu.memory_space<vmem>>, vector<8x128xf32>,
    } else {
    }
    return
  }
  func.func @transform_0(%arg0: i32, %arg1: i32) -> (i32, i32) {
    %c0_i32 = arith.constant 0 : i32
    %c0_i32_0 = arith.constant 0 : i32
    return %arg0, %c0_i32 : i32, i32
  }
  func.func @transform_1(%arg0: i32, %arg1: i32) -> (i32, i32) {
    %c0_i32 = arith.constant 0 : i32
    %c0_i32_0 = arith.constant 0 : i32
    return %c0_i32, %arg1 : i32, i32
  }
  func.func @transform_2(%arg0: i32, %arg1: i32) -> (i32, i32) {
    %c0_i32 = arith.constant 0 : i32
    %c0_i32_0 = arith.constant 0 : i32
    return %c0_i32, %arg1 : i32, i32
  }
  func.func @transform_3(%arg0: i32, %arg1: i32) -> (i32, i32) {
    %c0_i32 = arith.constant 0 : i32
    %c0_i32_0 = arith.constant 0 : i32
    return %arg1, %c0_i32 : i32, i32
  }
  func.func @transform_4(%arg0: i32, %arg1: i32) -> (i32, i32) {
    %c0_i32 = arith.constant 0 : i32
    %c0_i32_0 = arith.constant 0 : i32
    %c0_i32_1 = arith.constant 0 : i32
    return %c0_i32, %c0_i32_0 : i32, i32
  }
  func.func @transform_5(%arg0: i32, %arg1: i32) -> (i32, i32) {
    %c0_i32 = arith.constant 0 : i32
    %c0_i32_0 = arith.constant 0 : i32
    return %arg0, %c0_i32 : i32, i32
  }
}

</mosaic_0001>

<llo_original>
// kernel: neural_network_forward.1
$region0: #{neural_network_forward.1}
  #allocation0 [shape = 'u32[]', space=smem, size = 0x4, offset = 0x4, fixed_abs, tag = 'smem constant byte address 0x4 - core index']
  #allocation1 [shape = 'u32[144,128]{1,0:T(1,128)}', space=vmem, size = 0x12000, scoped, tag = 'internal scratch']
  #allocation2 [shape = 'f32[8,128]{1,0:T(8,128)}', space=vmem, size = 0x1000, scoped, tag = 'scratch operand']
  %s0 = inlined_call_operand.vmem [shape: f32[8,784], index: 0, kind: input, shape index: {}]
  %s1 = inlined_call_operand.hbm [shape: f32[784,5632], index: 1, kind: input, shape index: {}]
  %s2 = inlined_call_operand.hbm [shape: f32[1,5632], index: 2, kind: input, shape index: {}]
  %s3 = inlined_call_operand.hbm [shape: f32[5632,128], index: 3, kind: input, shape index: {}]
  %s4 = inlined_call_operand.hbm [shape: f32[1,128], index: 4, kind: input, shape index: {}]
  %s5 = inlined_call_operand.vmem [shape: f32[8,128], index: 5, kind: output, shape index: {}]
  %s6 = sld [smem:[#allocation0]]
  $region77: #{neural_network_forward.1} parent=0
    _
  %s8 = ssub.s32 1, %s6
  %s9 = scalar_select 0, %s8, %s6
  $region1: #{neural_network_forward.1} parent=0
    #allocation3 [shape = 'u8[8830976]{0}', space=vmem, size = 0x86c000, scoped, tag = 'input window, operand 1']
    #allocation4 [shape = 's32[2]{0}', space=sflag, size = 0x8, scoped, tag = 'scoped memory for neural_network_forward.1']
    #allocation5 [shape = 'u8[11264]{0}', space=vmem, size = 0x2c00, scoped, tag = 'input window, operand 2']
    #allocation6 [shape = 's32[2]{0}', space=sflag, size = 0x8, scoped, tag = 'scoped memory for neural_network_forward.1']
    #allocation7 [shape = 'u8[1441792]{0}', space=vmem, size = 0x160000, scoped, tag = 'input window, operand 3']
    #allocation8 [shape = 'u8[512]{0}', space=vmem, size = 0x400, scoped, tag = 'input window, operand 4, single buffered']
    #allocation9 [shape = 's32[1]{0}', space=sflag, size = 0x4, scoped, tag = 'scoped memory for neural_network_forward.1']
    %10 = vsyncpa [#allocation4], 0
    %s11 = scalar_lea.sflag [#allocation4], 1
    %12 = vsyncpa %s11, 0
    %13 = vsyncpa [#allocation6], 0
    %s14 = scalar_lea.sflag [#allocation6], 1
    %15 = vsyncpa %s14, 0
    %16 = vsyncpa [#allocation9], 0
    loop: start=0, step=1, limit=6
    $region2: #{neural_network_forward.1} parent=1 // loop_pre_header
      _
    $region3: #{neural_network_forward.1} parent=1 // loop_header
      %s18 = sphi 0, %s22
      %p19 = scmp.ge.s32.totalorder %s18, 6
      %s25 = sphi 0, %s37
      %s26 = sphi 0, %s33
      %s27 = sphi 0, %s25
      %s28 = sphi 0, %s26
      %s29 = sphi 0, %s27
      %s30 = sphi 0, %s28
      %s40 = sphi 0, %s42
      %s43 = sphi 0, %s40
      %s44 = sphi 0, %s43
      %s60 = sphi 0, %s44
      %s66 = sphi 0, %s68
      %s69 = sphi 0, %s66
      %s70 = sphi 0, %s69
      %s86 = sphi 0, %s70
      %s92 = sphi 0, %s94
      %s95 = sphi 0, %s92
      %s96 = sphi 0, %s95
      %s112 = sphi 0, %s96
      %s118 = sphi 0, %s120
      %s121 = sphi 0, %s118
      %s122 = sphi 0, %s121
      %s138 = sphi 0, %s122
      %s142 = sphi 0, %s142
      %s144 = sphi 0, %s142
      %s145 = sphi 0, %s144
      %s159 = sphi 0, %s145
      %s165 = sphi 0, %s167
      %s168 = sphi 0, %s165
      %s169 = sphi 0, %s168
      %s185 = sphi 0, %s169
    $region4: #{neural_network_forward.1} parent=1 // loop_header_branch
      %21 = sbr.rel (%p19) target = $region8
    $region5: #{neural_network_forward.1} parent=1 // loop_body
      %s23 = ssub.s32 %s18, 1
      %s24 = ssub.s32 %s18, 2
      %s31 = sadd.s32 1, %s26
      %p32 = scmp.ge.s32.totalorder %s31, 4
      %s33 = scalar_select %p32, 0, %s31
      %s34 = sadd.s32 1, %s25
      %s35 = scalar_select %p32, %s34, %s25
      %p36 = scmp.ge.s32.totalorder %s35, 1
      %s37 = scalar_select %p36, 0, %s35
      %s38 = ssub.s32 %s25, %s37
      %p39 = scmp.eq.s32.totalorder %s38, 0
      %s41 = sadd.s32 %s40, 1
      %s42 = scalar_select %p39, %s40, %s41
      %p45 = pneg %p39
      %p46 = scmp.eq.s32.totalorder %s18, 3
      %p47 = por %p45, %p46
      %p48 = scmp.ne.s32.totalorder %s40, %s43
      %p49 = scmp.eq.s32.totalorder %s18, 0
      %p50 = por %p48, %p49
      %p51 = scmp.ne.s32.totalorder %s40, %s43
      %p52 = scmp.eq.s32.totalorder %s23, 3
      %p53 = por %p51, %p52
      %p54 = scmp.ne.s32.totalorder %s43, %s44
      %p55 = scmp.eq.s32.totalorder %s23, 0
      %p56 = por %p54, %p55
      %p57 = scmp.ne.s32.totalorder %s43, %s44
      %p58 = scmp.eq.s32.totalorder %s24, 3
      %p59 = por %p57, %p58
      %p61 = scmp.ne.s32.totalorder %s44, %s60
      %p62 = scmp.eq.s32.totalorder %s24, 0
      %p63 = por %p61, %p62
      %s64 = ssub.s32 %s26, %s33
      %p65 = scmp.eq.s32.totalorder %s64, 0
      %s67 = sadd.s32 %s66, 1
      %s68 = scalar_select %p65, %s66, %s67
      %p71 = pneg %p65
      %p72 = scmp.eq.s32.totalorder %s18, 3
      %p73 = por %p71, %p72
      %p74 = scmp.ne.s32.totalorder %s66, %s69
      %p75 = scmp.eq.s32.totalorder %s18, 0
      %p76 = por %p74, %p75
      %p77 = scmp.ne.s32.totalorder %s66, %s69
      %p78 = scmp.eq.s32.totalorder %s23, 3
      %p79 = por %p77, %p78
      %p80 = scmp.ne.s32.totalorder %s69, %s70
      %p81 = scmp.eq.s32.totalorder %s23, 0
      %p82 = por %p80, %p81
      %p83 = scmp.ne.s32.totalorder %s69, %s70
      %p84 = scmp.eq.s32.totalorder %s24, 3
      %p85 = por %p83, %p84
      %p87 = scmp.ne.s32.totalorder %s70, %s86
      %p88 = scmp.eq.s32.totalorder %s24, 0
      %p89 = por %p87, %p88
      %s90 = ssub.s32 %s26, %s33
      %p91 = scmp.eq.s32.totalorder %s90, 0
      %s93 = sadd.s32 %s92, 1
      %s94 = scalar_select %p91, %s92, %s93
      %p97 = pneg %p91
      %p98 = scmp.eq.s32.totalorder %s18, 3
      %p99 = por %p97, %p98
      %p100 = scmp.ne.s32.totalorder %s92, %s95
      %p101 = scmp.eq.s32.totalorder %s18, 0
      %p102 = por %p100, %p101
      %p103 = scmp.ne.s32.totalorder %s92, %s95
      %p104 = scmp.eq.s32.totalorder %s23, 3
      %p105 = por %p103, %p104
      %p106 = scmp.ne.s32.totalorder %s95, %s96
      %p107 = scmp.eq.s32.totalorder %s23, 0
      %p108 = por %p106, %p107
      %p109 = scmp.ne.s32.totalorder %s95, %s96
      %p110 = scmp.eq.s32.totalorder %s24, 3
      %p111 = por %p109, %p110
      %p113 = scmp.ne.s32.totalorder %s96, %s112
      %p114 = scmp.eq.s32.totalorder %s24, 0
      %p115 = por %p113, %p114
      %s116 = ssub.s32 %s26, %s33
      %p117 = scmp.eq.s32.totalorder %s116, 0
      %s119 = sadd.s32 %s118, 1
      %s120 = scalar_select %p117, %s118, %s119
      %p123 = pneg %p117
      %p124 = scmp.eq.s32.totalorder %s18, 3
      %p125 = por %p123, %p124
      %p126 = scmp.ne.s32.totalorder %s118, %s121
      %p127 = scmp.eq.s32.totalorder %s18, 0
      %p128 = por %p126, %p127
      %p129 = scmp.ne.s32.totalorder %s118, %s121
      %p130 = scmp.eq.s32.totalorder %s23, 3
      %p131 = por %p129, %p130
      %p132 = scmp.ne.s32.totalorder %s121, %s122
      %p133 = scmp.eq.s32.totalorder %s23, 0
      %p134 = por %p132, %p133
      %p135 = scmp.ne.s32.totalorder %s121, %s122
      %p136 = scmp.eq.s32.totalorder %s24, 3
      %p137 = por %p135, %p136
      %p139 = scmp.ne.s32.totalorder %s122, %s138
      %p140 = scmp.eq.s32.totalorder %s24, 0
      %p141 = por %p139, %p140
      %s143 = sadd.s32 %s142, 1
      %p146 = scmp.eq.s32.totalorder %s18, 3
      %p147 = scmp.ne.s32.totalorder %s142, %s144
      %p148 = scmp.eq.s32.totalorder %s18, 0
      %p149 = por %p147, %p148
      %p150 = scmp.ne.s32.totalorder %s142, %s144
      %p151 = scmp.eq.s32.totalorder %s23, 3
      %p152 = por %p150, %p151
      %p153 = scmp.ne.s32.totalorder %s144, %s145
      %p154 = scmp.eq.s32.totalorder %s23, 0
      %p155 = por %p153, %p154
      %p156 = scmp.ne.s32.totalorder %s144, %s145
      %p157 = scmp.eq.s32.totalorder %s24, 3
      %p158 = por %p156, %p157
      %p160 = scmp.ne.s32.totalorder %s145, %s159
      %p161 = scmp.eq.s32.totalorder %s24, 0
      %p162 = por %p160, %p161
      %s163 = ssub.s32 %s25, %s37
      %p164 = scmp.eq.s32.totalorder %s163, 0
      %s166 = sadd.s32 %s165, 1
      %s167 = scalar_select %p164, %s165, %s166
      %p170 = pneg %p164
      %p171 = scmp.eq.s32.totalorder %s18, 3
      %p172 = por %p170, %p171
      %p173 = scmp.ne.s32.totalorder %s165, %s168
      %p174 = scmp.eq.s32.totalorder %s18, 0
      %p175 = por %p173, %p174
      %p176 = scmp.ne.s32.totalorder %s165, %s168
      %p177 = scmp.eq.s32.totalorder %s23, 3
      %p178 = por %p176, %p177
      %p179 = scmp.ne.s32.totalorder %s168, %s169
      %p180 = scmp.eq.s32.totalorder %s23, 0
      %p181 = por %p179, %p180
      %p182 = scmp.ne.s32.totalorder %s168, %s169
      %p183 = scmp.eq.s32.totalorder %s24, 3
      %p184 = por %p182, %p183
      %p186 = scmp.ne.s32.totalorder %s169, %s185
      %p187 = scmp.eq.s32.totalorder %s24, 0
      %p188 = por %p186, %p187
      %p189 = scmp.le.s32.totalorder 1, %s18
      %p190 = scmp.lt.s32.totalorder %s18, 5
      %p191 = pnand %p189, %p190
      %p192 = pneg %p191
      // Predicated region
      $region9: #{neural_network_forward.1} parent=5 // pred_check
        _
      $region10: #{neural_network_forward.1} parent=5 // pred_check_branch
        %194 = sbr.rel (%p191) target = $region12
      $region11: #{neural_network_forward.1} parent=5 // pred_region
        %s195 = ssub.s32 %s18, 1
        // Predicated region
        $region13: #{neural_network_forward.1} parent=11 // pred_check
          %p196 = pneg %p56
        $region14: #{neural_network_forward.1} parent=11 // pred_check_branch
          %198 = sbr.rel (%p196) target = $region16
        $region15: #{neural_network_forward.1} parent=11 // pred_region
          %p199 = scmp.lt.s32.totalorder %s27, 0
          %s200 = scalar_select %p199, %s27, 0
          %s201 = smul.addr %s200, 7
          %s202 = smul.addr %s201, 8
          %s203 = scalar_lea.vmem %s0, %s202
        $region16: #{neural_network_forward.1} parent=11 // pred_fallthru
          _
        // Predicated region
        $region17: #{neural_network_forward.1} parent=11 // pred_check
          %p204 = pneg %p155
        $region18: #{neural_network_forward.1} parent=11 // pred_check_branch
          %206 = sbr.rel (%p204) target = $region20
        $region19: #{neural_network_forward.1} parent=11 // pred_region
          %s208 = ssub.s32 16, 16
          %209 = vsyncadd [#allocation9], %s208
          %s211 = sshll.u32 [#allocation8], 4
          %s212 = int_to_ptr.vmem [resolvable:$true] %s211
          %214 = dma.hbm_to_vmem [thread:$0]  %s4, 16, %s212, [#allocation9]
        $region20: #{neural_network_forward.1} parent=11 // pred_fallthru
          _
      $region12: #{neural_network_forward.1} parent=5 // pred_fallthru
        _
      %p215 = scmp.lt.s32.totalorder %s18, 4
      // Predicated region
      $region21: #{neural_network_forward.1} parent=5 // pred_check
        %p216 = pneg %p215
      $region22: #{neural_network_forward.1} parent=5 // pred_check_branch
        %218 = sbr.rel (%p216) target = $region24
      $region23: #{neural_network_forward.1} parent=5 // pred_region
        // Predicated region
        $region25: #{neural_network_forward.1} parent=23 // pred_check
          %p219 = pneg %p76
        $region26: #{neural_network_forward.1} parent=23 // pred_check_branch
          %221 = sbr.rel (%p219) target = $region28
        $region27: #{neural_network_forward.1} parent=23 // pred_region
          %s222 = sand.u32 %s66, 1
          %s223 = scalar_lea.sflag [#allocation4], %s222
          %s224 = sand.u32 %s66, 1
          %s225 = smul.addr %s224, 8624
          %s226 = scalar_lea.vmem [#allocation3], %s225
          %s227 = smul.u32 11, %s26
          %s229 = ssub.s32 137984, 137984
          %230 = vsyncadd %s223, %s229
          %s231 = smul.addr %s227, 128
          %s232 = scalar_lea.hbm %s1, %s231
          %s233 = sshll.u32 %s226, 4
          %s234 = int_to_ptr.vmem [resolvable:$true] %s233
          %239 = dma.hbm_to_vmem [thread:$0]  %s232, 137984, %s234, %s223, 5632, 1408, 88
        $region28: #{neural_network_forward.1} parent=23 // pred_fallthru
          _
        // Predicated region
        $region29: #{neural_network_forward.1} parent=23 // pred_check
          %p240 = pneg %p102
        $region30: #{neural_network_forward.1} parent=23 // pred_check_branch
          %242 = sbr.rel (%p240) target = $region32
        $region31: #{neural_network_forward.1} parent=23 // pred_region
          %s243 = sand.u32 %s18, 1
          %s244 = scalar_lea.sflag [#allocation6], %s243
          %s245 = sand.u32 %s92, 1
          %s246 = smul.addr %s245, 11
          %s247 = scalar_lea.vmem [#allocation5], %s246
          %s248 = smul.u32 11, %s26
          %s250 = ssub.s32 176, 176
          %251 = vsyncadd %s244, %s250
          %s252 = smul.addr %s248, 16
          %s253 = scalar_lea.hbm %s2, %s252
          %s255 = sshll.u32 %s247, 4
          %s256 = int_to_ptr.vmem [resolvable:$true] %s255
          %258 = dma.hbm_to_vmem [thread:$0]  %s253, 176, %s256, %s244
        $region32: #{neural_network_forward.1} parent=23 // pred_fallthru
          _
        // Predicated region
        $region33: #{neural_network_forward.1} parent=23 // pred_check
          %p259 = pneg %p128
        $region34: #{neural_network_forward.1} parent=23 // pred_check_branch
          %261 = sbr.rel (%p259) target = $region36
        $region35: #{neural_network_forward.1} parent=23 // pred_region
          %s262 = sand.u32 %s18, 1
          %s263 = scalar_lea.sflag [#allocation6], %s262
          %s264 = sand.u32 %s118, 1
          %s265 = smul.addr %s264, 1408
          %s266 = scalar_lea.vmem [#allocation7], %s265
          %s267 = smul.u32 176, %s26
          %s269 = ssub.s32 22528, 22528
          %270 = vsyncadd %s263, %s269
          %s271 = smul.addr %s267, 128
          %s272 = scalar_lea.hbm %s3, %s271
          %s273 = sshll.u32 %s266, 4
          %s274 = int_to_ptr.vmem [resolvable:$true] %s273
          %279 = dma.hbm_to_vmem [thread:$0]  %s272, 22528, %s274, %s263, 128, 128, 8
        $region36: #{neural_network_forward.1} parent=23 // pred_fallthru
          _
      $region24: #{neural_network_forward.1} parent=5 // pred_fallthru
        _
      %p280 = scmp.le.s32.totalorder 1, %s18
      %p281 = scmp.lt.s32.totalorder %s18, 5
      %p282 = pnand %p280, %p281
      %p283 = pneg %p282
      // Predicated region
      $region37: #{neural_network_forward.1} parent=5 // pred_check
        _
      $region38: #{neural_network_forward.1} parent=5 // pred_check_branch
        %285 = sbr.rel (%p282) target = $region40
      $region39: #{neural_network_forward.1} parent=5 // pred_region
        %s286 = ssub.s32 %s18, 1
        %s287 = sand.u32 %s69, 1
        %s288 = scalar_lea.sflag [#allocation4], %s287
        %s289 = sand.u32 %s69, 1
        %s290 = smul.addr %s289, 8624
        %s291 = scalar_lea.vmem [#allocation3], %s290
        // Predicated region
        $region41: #{neural_network_forward.1} parent=39 // pred_check
          %p292 = pneg %p82
        $region42: #{neural_network_forward.1} parent=39 // pred_check_branch
          %294 = sbr.rel (%p292) target = $region44
        $region43: #{neural_network_forward.1} parent=39 // pred_region
          %295 = dma.done %s288, 137984
        $region44: #{neural_network_forward.1} parent=39 // pred_fallthru
          _
        %s296 = sand.u32 %s23, 1
        %s297 = scalar_lea.sflag [#allocation6], %s296
        %s298 = sand.u32 %s95, 1
        %s299 = smul.addr %s298, 11
        %s300 = scalar_lea.vmem [#allocation5], %s299
        // Predicated region
        $region45: #{neural_network_forward.1} parent=39 // pred_check
          %p301 = pneg %p108
        $region46: #{neural_network_forward.1} parent=39 // pred_check_branch
          %303 = sbr.rel (%p301) target = $region48
        $region47: #{neural_network_forward.1} parent=39 // pred_region
          %304 = dma.done %s297, 176
        $region48: #{neural_network_forward.1} parent=39 // pred_fallthru
          _
        %s305 = sand.u32 %s23, 1
        %s306 = scalar_lea.sflag [#allocation6], %s305
        %s307 = sand.u32 %s121, 1
        %s308 = smul.addr %s307, 1408
        %s309 = scalar_lea.vmem [#allocation7], %s308
        // Predicated region
        $region49: #{neural_network_forward.1} parent=39 // pred_check
          %p310 = pneg %p134
        $region50: #{neural_network_forward.1} parent=39 // pred_check_branch
          %312 = sbr.rel (%p310) target = $region52
        $region51: #{neural_network_forward.1} parent=39 // pred_region
          %313 = dma.done %s306, 22528
        $region52: #{neural_network_forward.1} parent=39 // pred_fallthru
          _
        // Predicated region
        $region53: #{neural_network_forward.1} parent=39 // pred_check
          %p314 = pneg %p155
        $region54: #{neural_network_forward.1} parent=39 // pred_check_branch
          %316 = sbr.rel (%p314) target = $region56
        $region55: #{neural_network_forward.1} parent=39 // pred_region
          %317 = dma.done [#allocation9], 16
        $region56: #{neural_network_forward.1} parent=39 // pred_fallthru
          _
        %p318 = scmp.lt.s32.totalorder %s27, 0
        %s319 = scalar_select %p318, %s27, 0
        %s320 = smul.addr %s319, 7
        %s321 = smul.addr %s320, 8
        %s322 = scalar_lea.vmem %s0, %s321
        %p323 = pneg %p56
        %p324 = pneg %p53
        %s325 = sand.u32 %s69, 1
        %s326 = scalar_lea.sflag [#allocation4], %s325
        %s327 = sand.u32 %s69, 1
        %s328 = smul.addr %s327, 8624
        %s329 = scalar_lea.vmem [#allocation3], %s328
        %p330 = pneg %p82
        %p331 = pneg %p79
        %s332 = sand.u32 %s23, 1
        %s333 = scalar_lea.sflag [#allocation6], %s332
        %s334 = sand.u32 %s95, 1
        %s335 = smul.addr %s334, 11
        %s336 = scalar_lea.vmem [#allocation5], %s335
        %p337 = pneg %p108
        %p338 = pneg %p105
        %s339 = sand.u32 %s23, 1
        %s340 = scalar_lea.sflag [#allocation6], %s339
        %s341 = sand.u32 %s121, 1
        %s342 = smul.addr %s341, 1408
        %s343 = scalar_lea.vmem [#allocation7], %s342
        %p344 = pneg %p134
        %p345 = pneg %p131
        %p346 = pneg %p155
        %p347 = pneg %p152
        %p348 = pneg %p181
        %p349 = pneg %p178
        %p350 = scmp.lt.s32.totalorder %s27, 0
        %s351 = scalar_select %p350, %s27, 0
        %s352 = smul.addr %s351, 8
        %s353 = scalar_lea.vmem %s5, %s352
        %p354 = scmp.lt.s32.totalorder %s27, 0
        %s355 = scalar_select %p354, %s27, 0
        %s356 = smul.addr %s355, 7
        %s357 = smul.addr %s356, 8
        %s358 = scalar_lea.vmem %s0, %s357
        %s359 = smul.u32 11, %s28
        %s360 = smul.u32 11, %s28
        %s361 = smul.u32 176, %s28
        %p362 = scmp.lt.s32.totalorder %s27, 0
        %s363 = scalar_select %p362, %s27, 0
        %s364 = smul.addr %s363, 8
        %s365 = scalar_lea.vmem %s5, %s364
        %p366 = scmp.eq.s32.totalorder %s28, 0
        // Predicated region
        $region57: #{neural_network_forward.1} parent=39 // pred_check
          %p367 = pneg %p366
        $region58: #{neural_network_forward.1} parent=39 // pred_check_branch
          %369 = sbr.rel (%p367) target = $region60
        $region59: #{neural_network_forward.1} parent=39 // pred_region
          %v370 = vld [vmem:[#allocation8] sm:$0x1]
          %v372 = vlaneseq
          %v373 = vshrl.u32 %v372, 7
          %v374 = vsub.s32 0, %v373
          %v375 = vrot.slane %v370, %v374
          %377 = vst [vmem:[#allocation2] sm:$0xff] %v375
        $region60: #{neural_network_forward.1} parent=39 // pred_fallthru
          _
        %v378 = vld [vmem:[%s358] sm:$0xff]
        %v379 = vld [vmem:[%s358 + $0x8] sm:$0xff]
        %v380 = vld [vmem:[%s358 + $0x10] sm:$0xff]
        %v381 = vld [vmem:[%s358 + $0x18] sm:$0xff]
        %v382 = vld [vmem:[%s358 + $0x20] sm:$0xff]
        %v383 = vld [vmem:[%s358 + $0x28] sm:$0xff]
        %v384 = vld [vmem:[%s358 + $0x30] sm:$0xff]
        %v385 = vld [vmem:[%s291] sm:$0xff]
        %v386 = vld [vmem:[%s291 + $0x8] sm:$0xff]
        %v387 = vld [vmem:[%s291 + $0x10] sm:$0xff]
        %v388 = vld [vmem:[%s291 + $0x18] sm:$0xff]
        %v389 = vld [vmem:[%s291 + $0x20] sm:$0xff]
        %v390 = vld [vmem:[%s291 + $0x28] sm:$0xff]
        %v391 = vld [vmem:[%s291 + $0x30] sm:$0xff]
        %v392 = vld [vmem:[%s291 + $0x38] sm:$0xff]
        %v393 = vld [vmem:[%s291 + $0x40] sm:$0xff]
        %v394 = vld [vmem:[%s291 + $0x48] sm:$0xff]
        %v395 = vld [vmem:[%s291 + $0x50] sm:$0xff]
        %v396 = vld [vmem:[%s291 + $0x58] sm:$0xff]
        %v397 = vld [vmem:[%s291 + $0x60] sm:$0xff]
        %v398 = vld [vmem:[%s291 + $0x68] sm:$0xff]
        %v399 = vld [vmem:[%s291 + $0x70] sm:$0xff]
        %v400 = vld [vmem:[%s291 + $0x78] sm:$0xff]
        %v401 = vld [vmem:[%s291 + $0x80] sm:$0xff]
        %v402 = vld [vmem:[%s291 + $0x88] sm:$0xff]
        %v403 = vld [vmem:[%s291 + $0x90] sm:$0xff]
        %v404 = vld [vmem:[%s291 + $0x98] sm:$0xff]
        %v405 = vld [vmem:[%s291 + $0xa0] sm:$0xff]
        %v406 = vld [vmem:[%s291 + $0xa8] sm:$0xff]
        %v407 = vld [vmem:[%s291 + $0xb0] sm:$0xff]
        %v408 = vld [vmem:[%s291 + $0xb8] sm:$0xff]
        %v409 = vld [vmem:[%s291 + $0xc0] sm:$0xff]
        %v410 = vld [vmem:[%s291 + $0xc8] sm:$0xff]
        %v411 = vld [vmem:[%s291 + $0xd0] sm:$0xff]
        %v412 = vld [vmem:[%s291 + $0xd8] sm:$0xff]
        %v413 = vld [vmem:[%s291 + $0xe0] sm:$0xff]
        %v414 = vld [vmem:[%s291 + $0xe8] sm:$0xff]
        %v415 = vld [vmem:[%s291 + $0xf0] sm:$0xff]
        %v416 = vld [vmem:[%s291 + $0xf8] sm:$0xff]
        %v417 = vld [vmem:[%s291 + $0x100] sm:$0xff]
        %v418 = vld [vmem:[%s291 + $0x108] sm:$0xff]
        %v419 = vld [vmem:[%s291 + $0x110] sm:$0xff]
        %v420 = vld [vmem:[%s291 + $0x118] sm:$0xff]
        %v421 = vld [vmem:[%s291 + $0x120] sm:$0xff]
        %v422 = vld [vmem:[%s291 + $0x128] sm:$0xff]
        %v423 = vld [vmem:[%s291 + $0x130] sm:$0xff]
        %v424 = vld [vmem:[%s291 + $0x138] sm:$0xff]
        %v425 = vld [vmem:[%s291 + $0x140] sm:$0xff]
        %v426 = vld [vmem:[%s291 + $0x148] sm:$0xff]
        %v427 = vld [vmem:[%s291 + $0x150] sm:$0xff]
        %v428 = vld [vmem:[%s291 + $0x158] sm:$0xff]
        %v429 = vld [vmem:[%s291 + $0x160] sm:$0xff]
        %v430 = vld [vmem:[%s291 + $0x168] sm:$0xff]
        %v431 = vld [vmem:[%s291 + $0x170] sm:$0xff]
        %v432 = vld [vmem:[%s291 + $0x178] sm:$0xff]
        %v433 = vld [vmem:[%s291 + $0x180] sm:$0xff]
        %v434 = vld [vmem:[%s291 + $0x188] sm:$0xff]
        %v435 = vld [vmem:[%s291 + $0x190] sm:$0xff]
        %v436 = vld [vmem:[%s291 + $0x198] sm:$0xff]
        %v437 = vld [vmem:[%s291 + $0x1a0] sm:$0xff]
        %v438 = vld [vmem:[%s291 + $0x1a8] sm:$0xff]
        %v439 = vld [vmem:[%s291 + $0x1b0] sm:$0xff]
        %v440 = vld [vmem:[%s291 + $0x1b8] sm:$0xff]
        %v441 = vld [vmem:[%s291 + $0x1c0] sm:$0xff]
        %v442 = vld [vmem:[%s291 + $0x1c8] sm:$0xff]
        %v443 = vld [vmem:[%s291 + $0x1d0] sm:$0xff]
        %v444 = vld [vmem:[%s291 + $0x1d8] sm:$0xff]
        %v445 = vld [vmem:[%s291 + $0x1e0] sm:$0xff]
        %v446 = vld [vmem:[%s291 + $0x1e8] sm:$0xff]
        %v447 = vld [vmem:[%s291 + $0x1f0] sm:$0xff]
        %v448 = vld [vmem:[%s291 + $0x1f8] sm:$0xff]
        %v449 = vld [vmem:[%s291 + $0x200] sm:$0xff]
        %v450 = vld [vmem:[%s291 + $0x208] sm:$0xff]
        %v451 = vld [vmem:[%s291 + $0x210] sm:$0xff]
        %v452 = vld [vmem:[%s291 + $0x218] sm:$0xff]
        %v453 = vld [vmem:[%s291 + $0x220] sm:$0xff]
        %v454 = vld [vmem:[%s291 + $0x228] sm:$0xff]
        %v455 = vld [vmem:[%s291 + $0x230] sm:$0xff]
        %v456 = vld [vmem:[%s291 + $0x238] sm:$0xff]
        %v457 = vld [vmem:[%s291 + $0x240] sm:$0xff]
        %v458 = vld [vmem:[%s291 + $0x248] sm:$0xff]
        %v459 = vld [vmem:[%s291 + $0x250] sm:$0xff]
        %v460 = vld [vmem:[%s291 + $0x258] sm:$0xff]
        %v461 = vld [vmem:[%s291 + $0x260] sm:$0xff]
        %v462 = vld [vmem:[%s291 + $0x268] sm:$0xff]
        %v463 = vld [vmem:[%s291 + $0x270] sm:$0xff]
        %v464 = vld [vmem:[%s291 + $0x278] sm:$0xff]
        %v465 = vld [vmem:[%s291 + $0x280] sm:$0xff]
        %v466 = vld [vmem:[%s291 + $0x288] sm:$0xff]
        %v467 = vld [vmem:[%s291 + $0x290] sm:$0xff]
        %v468 = vld [vmem:[%s291 + $0x298] sm:$0xff]
        %v469 = vld [vmem:[%s291 + $0x2a0] sm:$0xff]
        %v470 = vld [vmem:[%s291 + $0x2a8] sm:$0xff]
        %v471 = vld [vmem:[%s291 + $0x2b0] sm:$0xff]
        %v472 = vld [vmem:[%s291 + $0x2b8] sm:$0xff]
        %v473 = vld [vmem:[%s291 + $0x2c0] sm:$0xff]
        %v474 = vld [vmem:[%s291 + $0x2c8] sm:$0xff]
        %v475 = vld [vmem:[%s291 + $0x2d0] sm:$0xff]
        %v476 = vld [vmem:[%s291 + $0x2d8] sm:$0xff]
        %v477 = vld [vmem:[%s291 + $0x2e0] sm:$0xff]
        %v478 = vld [vmem:[%s291 + $0x2e8] sm:$0xff]
        %v479 = vld [vmem:[%s291 + $0x2f0] sm:$0xff]
        %v480 = vld [vmem:[%s291 + $0x2f8] sm:$0xff]
        %v481 = vld [vmem:[%s291 + $0x300] sm:$0xff]
        %v482 = vld [vmem:[%s291 + $0x308] sm:$0xff]
        %v483 = vld [vmem:[%s291 + $0x310] sm:$0xff]
        %v484 = vld [vmem:[%s291 + $0x318] sm:$0xff]
        %v485 = vld [vmem:[%s291 + $0x320] sm:$0xff]
        %v486 = vld [vmem:[%s291 + $0x328] sm:$0xff]
        %v487 = vld [vmem:[%s291 + $0x330] sm:$0xff]
        %v488 = vld [vmem:[%s291 + $0x338] sm:$0xff]
        %v489 = vld [vmem:[%s291 + $0x340] sm:$0xff]
        %v490 = vld [vmem:[%s291 + $0x348] sm:$0xff]
        %v491 = vld [vmem:[%s291 + $0x350] sm:$0xff]
        %v492 = vld [vmem:[%s291 + $0x358] sm:$0xff]
        %v493 = vld [vmem:[%s291 + $0x360] sm:$0xff]
        %v494 = vld [vmem:[%s291 + $0x368] sm:$0xff]
        %v495 = vld [vmem:[%s291 + $0x370] sm:$0xff]
        %v496 = vld [vmem:[%s291 + $0x378] sm:$0xff]
        %v497 = vld [vmem:[%s291 + $0x380] sm:$0xff]
        %v498 = vld [vmem:[%s291 + $0x388] sm:$0xff]
        %v499 = vld [vmem:[%s291 + $0x390] sm:$0xff]
        %v500 = vld [vmem:[%s291 + $0x398] sm:$0xff]
        %v501 = vld [vmem:[%s291 + $0x3a0] sm:$0xff]
        %v502 = vld [vmem:[%s291 + $0x3a8] sm:$0xff]
        %v503 = vld [vmem:[%s291 + $0x3b0] sm:$0xff]
        %v504 = vld [vmem:[%s291 + $0x3b8] sm:$0xff]
        %v505 = vld [vmem:[%s291 + $0x3c0] sm:$0xff]
        %v506 = vld [vmem:[%s291 + $0x3c8] sm:$0xff]
        %v507 = vld [vmem:[%s291 + $0x3d0] sm:$0xff]
        %v508 = vld [vmem:[%s291 + $0x3d8] sm:$0xff]
        %v509 = vld [vmem:[%s291 + $0x3e0] sm:$0xff]
        %v510 = vld [vmem:[%s291 + $0x3e8] sm:$0xff]
        %v511 = vld [vmem:[%s291 + $0x3f0] sm:$0xff]
        %v512 = vld [vmem:[%s291 + $0x3f8] sm:$0xff]
        %v513 = vld [vmem:[%s291 + $0x400] sm:$0xff]
        %v514 = vld [vmem:[%s291 + $0x408] sm:$0xff]
        %v515 = vld [vmem:[%s291 + $0x410] sm:$0xff]
        %v516 = vld [vmem:[%s291 + $0x418] sm:$0xff]
        %v517 = vld [vmem:[%s291 + $0x420] sm:$0xff]
        %v518 = vld [vmem:[%s291 + $0x428] sm:$0xff]
        %v519 = vld [vmem:[%s291 + $0x430] sm:$0xff]
        %v520 = vld [vmem:[%s291 + $0x438] sm:$0xff]
        %v521 = vld [vmem:[%s291 + $0x440] sm:$0xff]
        %v522 = vld [vmem:[%s291 + $0x448] sm:$0xff]
        %v523 = vld [vmem:[%s291 + $0x450] sm:$0xff]
        %v524 = vld [vmem:[%s291 + $0x458] sm:$0xff]
        %v525 = vld [vmem:[%s291 + $0x460] sm:$0xff]
        %v526 = vld [vmem:[%s291 + $0x468] sm:$0xff]
        %v527 = vld [vmem:[%s291 + $0x470] sm:$0xff]
        %v528 = vld [vmem:[%s291 + $0x478] sm:$0xff]
        %v529 = vld [vmem:[%s291 + $0x480] sm:$0xff]
        %v530 = vld [vmem:[%s291 + $0x488] sm:$0xff]
        %v531 = vld [vmem:[%s291 + $0x490] sm:$0xff]
        %v532 = vld [vmem:[%s291 + $0x498] sm:$0xff]
        %v533 = vld [vmem:[%s291 + $0x4a0] sm:$0xff]
        %v534 = vld [vmem:[%s291 + $0x4a8] sm:$0xff]
        %v535 = vld [vmem:[%s291 + $0x4b0] sm:$0xff]
        %v536 = vld [vmem:[%s291 + $0x4b8] sm:$0xff]
        %v537 = vld [vmem:[%s291 + $0x4c0] sm:$0xff]
        %v538 = vld [vmem:[%s291 + $0x4c8] sm:$0xff]
        %v539 = vld [vmem:[%s291 + $0x4d0] sm:$0xff]
        %v540 = vld [vmem:[%s291 + $0x4d8] sm:$0xff]
        %v541 = vld [vmem:[%s291 + $0x4e0] sm:$0xff]
        %v542 = vld [vmem:[%s291 + $0x4e8] sm:$0xff]
        %v543 = vld [vmem:[%s291 + $0x4f0] sm:$0xff]
        %v544 = vld [vmem:[%s291 + $0x4f8] sm:$0xff]
        %v545 = vld [vmem:[%s291 + $0x500] sm:$0xff]
        %v546 = vld [vmem:[%s291 + $0x508] sm:$0xff]
        %v547 = vld [vmem:[%s291 + $0x510] sm:$0xff]
        %v548 = vld [vmem:[%s291 + $0x518] sm:$0xff]
        %v549 = vld [vmem:[%s291 + $0x520] sm:$0xff]
        %v550 = vld [vmem:[%s291 + $0x528] sm:$0xff]
        %v551 = vld [vmem:[%s291 + $0x530] sm:$0xff]
        %v552 = vld [vmem:[%s291 + $0x538] sm:$0xff]
        %v553 = vld [vmem:[%s291 + $0x540] sm:$0xff]
        %v554 = vld [vmem:[%s291 + $0x548] sm:$0xff]
        %v555 = vld [vmem:[%s291 + $0x550] sm:$0xff]
        %v556 = vld [vmem:[%s291 + $0x558] sm:$0xff]
        %v557 = vld [vmem:[%s291 + $0x560] sm:$0xff]
        %v558 = vld [vmem:[%s291 + $0x568] sm:$0xff]
        %v559 = vld [vmem:[%s291 + $0x570] sm:$0xff]
        %v560 = vld [vmem:[%s291 + $0x578] sm:$0xff]
        %v561 = vld [vmem:[%s291 + $0x580] sm:$0xff]
        %v562 = vld [vmem:[%s291 + $0x588] sm:$0xff]
        %v563 = vld [vmem:[%s291 + $0x590] sm:$0xff]
        %v564 = vld [vmem:[%s291 + $0x598] sm:$0xff]
        %v565 = vld [vmem:[%s291 + $0x5a0] sm:$0xff]
        %v566 = vld [vmem:[%s291 + $0x5a8] sm:$0xff]
        %v567 = vld [vmem:[%s291 + $0x5b0] sm:$0xff]
        %v568 = vld [vmem:[%s291 + $0x5b8] sm:$0xff]
        %v569 = vld [vmem:[%s291 + $0x5c0] sm:$0xff]
        %v570 = vld [vmem:[%s291 + $0x5c8] sm:$0xff]
        %v571 = vld [vmem:[%s291 + $0x5d0] sm:$0xff]
        %v572 = vld [vmem:[%s291 + $0x5d8] sm:$0xff]
        %v573 = vld [vmem:[%s291 + $0x5e0] sm:$0xff]
        %v574 = vld [vmem:[%s291 + $0x5e8] sm:$0xff]
        %v575 = vld [vmem:[%s291 + $0x5f0] sm:$0xff]
        %v576 = vld [vmem:[%s291 + $0x5f8] sm:$0xff]
        %v577 = vld [vmem:[%s291 + $0x600] sm:$0xff]
        %v578 = vld [vmem:[%s291 + $0x608] sm:$0xff]
        %v579 = vld [vmem:[%s291 + $0x610] sm:$0xff]
        %v580 = vld [vmem:[%s291 + $0x618] sm:$0xff]
        %v581 = vld [vmem:[%s291 + $0x620] sm:$0xff]
        %v582 = vld [vmem:[%s291 + $0x628] sm:$0xff]
        %v583 = vld [vmem:[%s291 + $0x630] sm:$0xff]
        %v584 = vld [vmem:[%s291 + $0x638] sm:$0xff]
        %v585 = vld [vmem:[%s291 + $0x640] sm:$0xff]
        %v586 = vld [vmem:[%s291 + $0x648] sm:$0xff]
        %v587 = vld [vmem:[%s291 + $0x650] sm:$0xff]
        %v588 = vld [vmem:[%s291 + $0x658] sm:$0xff]
        %v589 = vld [vmem:[%s291 + $0x660] sm:$0xff]
        %v590 = vld [vmem:[%s291 + $0x668] sm:$0xff]
        %v591 = vld [vmem:[%s291 + $0x670] sm:$0xff]
        %v592 = vld [vmem:[%s291 + $0x678] sm:$0xff]
        %v593 = vld [vmem:[%s291 + $0x680] sm:$0xff]
        %v594 = vld [vmem:[%s291 + $0x688] sm:$0xff]
        %v595 = vld [vmem:[%s291 + $0x690] sm:$0xff]
        %v596 = vld [vmem:[%s291 + $0x698] sm:$0xff]
        %v597 = vld [vmem:[%s291 + $0x6a0] sm:$0xff]
        %v598 = vld [vmem:[%s291 + $0x6a8] sm:$0xff]
        %v599 = vld [vmem:[%s291 + $0x6b0] sm:$0xff]
        %v600 = vld [vmem:[%s291 + $0x6b8] sm:$0xff]
        %v601 = vld [vmem:[%s291 + $0x6c0] sm:$0xff]
        %v602 = vld [vmem:[%s291 + $0x6c8] sm:$0xff]
        %v603 = vld [vmem:[%s291 + $0x6d0] sm:$0xff]
        %v604 = vld [vmem:[%s291 + $0x6d8] sm:$0xff]
        %v605 = vld [vmem:[%s291 + $0x6e0] sm:$0xff]
        %v606 = vld [vmem:[%s291 + $0x6e8] sm:$0xff]
        %v607 = vld [vmem:[%s291 + $0x6f0] sm:$0xff]
        %v608 = vld [vmem:[%s291 + $0x6f8] sm:$0xff]
        %v609 = vld [vmem:[%s291 + $0x700] sm:$0xff]
        %v610 = vld [vmem:[%s291 + $0x708] sm:$0xff]
        %v611 = vld [vmem:[%s291 + $0x710] sm:$0xff]
        %v612 = vld [vmem:[%s291 + $0x718] sm:$0xff]
        %v613 = vld [vmem:[%s291 + $0x720] sm:$0xff]
        %v614 = vld [vmem:[%s291 + $0x728] sm:$0xff]
        %v615 = vld [vmem:[%s291 + $0x730] sm:$0xff]
        %v616 = vld [vmem:[%s291 + $0x738] sm:$0xff]
        %v617 = vld [vmem:[%s291 + $0x740] sm:$0xff]
        %v618 = vld [vmem:[%s291 + $0x748] sm:$0xff]
        %v619 = vld [vmem:[%s291 + $0x750] sm:$0xff]
        %v620 = vld [vmem:[%s291 + $0x758] sm:$0xff]
        %v621 = vld [vmem:[%s291 + $0x760] sm:$0xff]
        %v622 = vld [vmem:[%s291 + $0x768] sm:$0xff]
        %v623 = vld [vmem:[%s291 + $0x770] sm:$0xff]
        %v624 = vld [vmem:[%s291 + $0x778] sm:$0xff]
        %v625 = vld [vmem:[%s291 + $0x780] sm:$0xff]
        %v626 = vld [vmem:[%s291 + $0x788] sm:$0xff]
        %v627 = vld [vmem:[%s291 + $0x790] sm:$0xff]
        %v628 = vld [vmem:[%s291 + $0x798] sm:$0xff]
        %v629 = vld [vmem:[%s291 + $0x7a0] sm:$0xff]
        %v630 = vld [vmem:[%s291 + $0x7a8] sm:$0xff]
        %v631 = vld [vmem:[%s291 + $0x7b0] sm:$0xff]
        %v632 = vld [vmem:[%s291 + $0x7b8] sm:$0xff]
        %v633 = vld [vmem:[%s291 + $0x7c0] sm:$0xff]
        %v634 = vld [vmem:[%s291 + $0x7c8] sm:$0xff]
        %v635 = vld [vmem:[%s291 + $0x7d0] sm:$0xff]
        %v636 = vld [vmem:[%s291 + $0x7d8] sm:$0xff]
        %v637 = vld [vmem:[%s291 + $0x7e0] sm:$0xff]
        %v638 = vld [vmem:[%s291 + $0x7e8] sm:$0xff]
        %v639 = vld [vmem:[%s291 + $0x7f0] sm:$0xff]
        %v640 = vld [vmem:[%s291 + $0x7f8] sm:$0xff]
        %v641 = vld [vmem:[%s291 + $0x800] sm:$0xff]
        %v642 = vld [vmem:[%s291 + $0x808] sm:$0xff]
        %v643 = vld [vmem:[%s291 + $0x810] sm:$0xff]
        %v644 = vld [vmem:[%s291 + $0x818] sm:$0xff]
        %v645 = vld [vmem:[%s291 + $0x820] sm:$0xff]
        %v646 = vld [vmem:[%s291 + $0x828] sm:$0xff]
        %v647 = vld [vmem:[%s291 + $0x830] sm:$0xff]
        %v648 = vld [vmem:[%s291 + $0x838] sm:$0xff]
        %v649 = vld [vmem:[%s291 + $0x840] sm:$0xff]
        %v650 = vld [vmem:[%s291 + $0x848] sm:$0xff]
        %v651 = vld [vmem:[%s291 + $0x850] sm:$0xff]
        %v652 = vld [vmem:[%s291 + $0x858] sm:$0xff]
        %v653 = vld [vmem:[%s291 + $0x860] sm:$0xff]
        %v654 = vld [vmem:[%s291 + $0x868] sm:$0xff]
        %v655 = vld [vmem:[%s291 + $0x870] sm:$0xff]
        %v656 = vld [vmem:[%s291 + $0x878] sm:$0xff]
        %v657 = vld [vmem:[%s291 + $0x880] sm:$0xff]
        %v658 = vld [vmem:[%s291 + $0x888] sm:$0xff]
        %v659 = vld [vmem:[%s291 + $0x890] sm:$0xff]
        %v660 = vld [vmem:[%s291 + $0x898] sm:$0xff]
        %v661 = vld [vmem:[%s291 + $0x8a0] sm:$0xff]
        %v662 = vld [vmem:[%s291 + $0x8a8] sm:$0xff]
        %v663 = vld [vmem:[%s291 + $0x8b0] sm:$0xff]
        %v664 = vld [vmem:[%s291 + $0x8b8] sm:$0xff]
        %v665 = vld [vmem:[%s291 + $0x8c0] sm:$0xff]
        %v666 = vld [vmem:[%s291 + $0x8c8] sm:$0xff]
        %v667 = vld [vmem:[%s291 + $0x8d0] sm:$0xff]
        %v668 = vld [vmem:[%s291 + $0x8d8] sm:$0xff]
        %v669 = vld [vmem:[%s291 + $0x8e0] sm:$0xff]
        %v670 = vld [vmem:[%s291 + $0x8e8] sm:$0xff]
        %v671 = vld [vmem:[%s291 + $0x8f0] sm:$0xff]
        %v672 = vld [vmem:[%s291 + $0x8f8] sm:$0xff]
        %v673 = vld [vmem:[%s291 + $0x900] sm:$0xff]
        %v674 = vld [vmem:[%s291 + $0x908] sm:$0xff]
        %v675 = vld [vmem:[%s291 + $0x910] sm:$0xff]
        %v676 = vld [vmem:[%s291 + $0x918] sm:$0xff]
        %v677 = vld [vmem:[%s291 + $0x920] sm:$0xff]
        %v678 = vld [vmem:[%s291 + $0x928] sm:$0xff]
        %v679 = vld [vmem:[%s291 + $0x930] sm:$0xff]
        %v680 = vld [vmem:[%s291 + $0x938] sm:$0xff]
        %v681 = vld [vmem:[%s291 + $0x940] sm:$0xff]
        %v682 = vld [vmem:[%s291 + $0x948] sm:$0xff]
        %v683 = vld [vmem:[%s291 + $0x950] sm:$0xff]
        %v684 = vld [vmem:[%s291 + $0x958] sm:$0xff]
        %v685 = vld [vmem:[%s291 + $0x960] sm:$0xff]
        %v686 = vld [vmem:[%s291 + $0x968] sm:$0xff]
        %v687 = vld [vmem:[%s291 + $0x970] sm:$0xff]
        %v688 = vld [vmem:[%s291 + $0x978] sm:$0xff]
        %v689 = vld [vmem:[%s291 + $0x980] sm:$0xff]
        %v690 = vld [vmem:[%s291 + $0x988] sm:$0xff]
        %v691 = vld [vmem:[%s291 + $0x990] sm:$0xff]
        %v692 = vld [vmem:[%s291 + $0x998] sm:$0xff]
        %v693 = vld [vmem:[%s291 + $0x9a0] sm:$0xff]
        %v694 = vld [vmem:[%s291 + $0x9a8] sm:$0xff]
        %v695 = vld [vmem:[%s291 + $0x9b0] sm:$0xff]
        %v696 = vld [vmem:[%s291 + $0x9b8] sm:$0xff]
        %v697 = vld [vmem:[%s291 + $0x9c0] sm:$0xff]
        %v698 = vld [vmem:[%s291 + $0x9c8] sm:$0xff]
        %v699 = vld [vmem:[%s291 + $0x9d0] sm:$0xff]
        %v700 = vld [vmem:[%s291 + $0x9d8] sm:$0xff]
        %v701 = vld [vmem:[%s291 + $0x9e0] sm:$0xff]
        %v702 = vld [vmem:[%s291 + $0x9e8] sm:$0xff]
        %v703 = vld [vmem:[%s291 + $0x9f0] sm:$0xff]
        %v704 = vld [vmem:[%s291 + $0x9f8] sm:$0xff]
        %v705 = vld [vmem:[%s291 + $0xa00] sm:$0xff]
        %v706 = vld [vmem:[%s291 + $0xa08] sm:$0xff]
        %v707 = vld [vmem:[%s291 + $0xa10] sm:$0xff]
        %v708 = vld [vmem:[%s291 + $0xa18] sm:$0xff]
        %v709 = vld [vmem:[%s291 + $0xa20] sm:$0xff]
        %v710 = vld [vmem:[%s291 + $0xa28] sm:$0xff]
        %v711 = vld [vmem:[%s291 + $0xa30] sm:$0xff]
        %v712 = vld [vmem:[%s291 + $0xa38] sm:$0xff]
        %v713 = vld [vmem:[%s291 + $0xa40] sm:$0xff]
        %v714 = vld [vmem:[%s291 + $0xa48] sm:$0xff]
        %v715 = vld [vmem:[%s291 + $0xa50] sm:$0xff]
        %v716 = vld [vmem:[%s291 + $0xa58] sm:$0xff]
        %v717 = vld [vmem:[%s291 + $0xa60] sm:$0xff]
        %v718 = vld [vmem:[%s291 + $0xa68] sm:$0xff]
        %v719 = vld [vmem:[%s291 + $0xa70] sm:$0xff]
        %v720 = vld [vmem:[%s291 + $0xa78] sm:$0xff]
        %v721 = vld [vmem:[%s291 + $0xa80] sm:$0xff]
        %v722 = vld [vmem:[%s291 + $0xa88] sm:$0xff]
        %v723 = vld [vmem:[%s291 + $0xa90] sm:$0xff]
        %v724 = vld [vmem:[%s291 + $0xa98] sm:$0xff]
        %v725 = vld [vmem:[%s291 + $0xaa0] sm:$0xff]
        %v726 = vld [vmem:[%s291 + $0xaa8] sm:$0xff]
        %v727 = vld [vmem:[%s291 + $0xab0] sm:$0xff]
        %v728 = vld [vmem:[%s291 + $0xab8] sm:$0xff]
        %v729 = vld [vmem:[%s291 + $0xac0] sm:$0xff]
        %v730 = vld [vmem:[%s291 + $0xac8] sm:$0xff]
        %v731 = vld [vmem:[%s291 + $0xad0] sm:$0xff]
        %v732 = vld [vmem:[%s291 + $0xad8] sm:$0xff]
        %v733 = vld [vmem:[%s291 + $0xae0] sm:$0xff]
        %v734 = vld [vmem:[%s291 + $0xae8] sm:$0xff]
        %v735 = vld [vmem:[%s291 + $0xaf0] sm:$0xff]
        %v736 = vld [vmem:[%s291 + $0xaf8] sm:$0xff]
        %v737 = vld [vmem:[%s291 + $0xb00] sm:$0xff]
        %v738 = vld [vmem:[%s291 + $0xb08] sm:$0xff]
        %v739 = vld [vmem:[%s291 + $0xb10] sm:$0xff]
        %v740 = vld [vmem:[%s291 + $0xb18] sm:$0xff]
        %v741 = vld [vmem:[%s291 + $0xb20] sm:$0xff]
        %v742 = vld [vmem:[%s291 + $0xb28] sm:$0xff]
        %v743 = vld [vmem:[%s291 + $0xb30] sm:$0xff]
        %v744 = vld [vmem:[%s291 + $0xb38] sm:$0xff]
        %v745 = vld [vmem:[%s291 + $0xb40] sm:$0xff]
        %v746 = vld [vmem:[%s291 + $0xb48] sm:$0xff]
        %v747 = vld [vmem:[%s291 + $0xb50] sm:$0xff]
        %v748 = vld [vmem:[%s291 + $0xb58] sm:$0xff]
        %v749 = vld [vmem:[%s291 + $0xb60] sm:$0xff]
        %v750 = vld [vmem:[%s291 + $0xb68] sm:$0xff]
        %v751 = vld [vmem:[%s291 + $0xb70] sm:$0xff]
        %v752 = vld [vmem:[%s291 + $0xb78] sm:$0xff]
        %v753 = vld [vmem:[%s291 + $0xb80] sm:$0xff]
        %v754 = vld [vmem:[%s291 + $0xb88] sm:$0xff]
        %v755 = vld [vmem:[%s291 + $0xb90] sm:$0xff]
        %v756 = vld [vmem:[%s291 + $0xb98] sm:$0xff]
        %v757 = vld [vmem:[%s291 + $0xba0] sm:$0xff]
        %v758 = vld [vmem:[%s291 + $0xba8] sm:$0xff]
        %v759 = vld [vmem:[%s291 + $0xbb0] sm:$0xff]
        %v760 = vld [vmem:[%s291 + $0xbb8] sm:$0xff]
        %v761 = vld [vmem:[%s291 + $0xbc0] sm:$0xff]
        %v762 = vld [vmem:[%s291 + $0xbc8] sm:$0xff]
        %v763 = vld [vmem:[%s291 + $0xbd0] sm:$0xff]
        %v764 = vld [vmem:[%s291 + $0xbd8] sm:$0xff]
        %v765 = vld [vmem:[%s291 + $0xbe0] sm:$0xff]
        %v766 = vld [vmem:[%s291 + $0xbe8] sm:$0xff]
        %v767 = vld [vmem:[%s291 + $0xbf0] sm:$0xff]
        %v768 = vld [vmem:[%s291 + $0xbf8] sm:$0xff]
        %v769 = vld [vmem:[%s291 + $0xc00] sm:$0xff]
        %v770 = vld [vmem:[%s291 + $0xc08] sm:$0xff]
        %v771 = vld [vmem:[%s291 + $0xc10] sm:$0xff]
        %v772 = vld [vmem:[%s291 + $0xc18] sm:$0xff]
        %v773 = vld [vmem:[%s291 + $0xc20] sm:$0xff]
        %v774 = vld [vmem:[%s291 + $0xc28] sm:$0xff]
        %v775 = vld [vmem:[%s291 + $0xc30] sm:$0xff]
        %v776 = vld [vmem:[%s291 + $0xc38] sm:$0xff]
        %v777 = vld [vmem:[%s291 + $0xc40] sm:$0xff]
        %v778 = vld [vmem:[%s291 + $0xc48] sm:$0xff]
        %v779 = vld [vmem:[%s291 + $0xc50] sm:$0xff]
        %v780 = vld [vmem:[%s291 + $0xc58] sm:$0xff]
        %v781 = vld [vmem:[%s291 + $0xc60] sm:$0xff]
        %v782 = vld [vmem:[%s291 + $0xc68] sm:$0xff]
        %v783 = vld [vmem:[%s291 + $0xc70] sm:$0xff]
        %v784 = vld [vmem:[%s291 + $0xc78] sm:$0xff]
        %v785 = vld [vmem:[%s291 + $0xc80] sm:$0xff]
        %v786 = vld [vmem:[%s291 + $0xc88] sm:$0xff]
        %v787 = vld [vmem:[%s291 + $0xc90] sm:$0xff]
        %v788 = vld [vmem:[%s291 + $0xc98] sm:$0xff]
        %v789 = vld [vmem:[%s291 + $0xca0] sm:$0xff]
        %v790 = vld [vmem:[%s291 + $0xca8] sm:$0xff]
        %v791 = vld [vmem:[%s291 + $0xcb0] sm:$0xff]
        %v792 = vld [vmem:[%s291 + $0xcb8] sm:$0xff]
        %v793 = vld [vmem:[%s291 + $0xcc0] sm:$0xff]
        %v794 = vld [vmem:[%s291 + $0xcc8] sm:$0xff]
        %v795 = vld [vmem:[%s291 + $0xcd0] sm:$0xff]
        %v796 = vld [vmem:[%s291 + $0xcd8] sm:$0xff]
        %v797 = vld [vmem:[%s291 + $0xce0] sm:$0xff]
        %v798 = vld [vmem:[%s291 + $0xce8] sm:$0xff]
        %v799 = vld [vmem:[%s291 + $0xcf0] sm:$0xff]
        %v800 = vld [vmem:[%s291 + $0xcf8] sm:$0xff]
        %v801 = vld [vmem:[%s291 + $0xd00] sm:$0xff]
        %v802 = vld [vmem:[%s291 + $0xd08] sm:$0xff]
        %v803 = vld [vmem:[%s291 + $0xd10] sm:$0xff]
        %v804 = vld [vmem:[%s291 + $0xd18] sm:$0xff]
        %v805 = vld [vmem:[%s291 + $0xd20] sm:$0xff]
        %v806 = vld [vmem:[%s291 + $0xd28] sm:$0xff]
        %v807 = vld [vmem:[%s291 + $0xd30] sm:$0xff]
        %v808 = vld [vmem:[%s291 + $0xd38] sm:$0xff]
        %v809 = vld [vmem:[%s291 + $0xd40] sm:$0xff]
        %v810 = vld [vmem:[%s291 + $0xd48] sm:$0xff]
        %v811 = vld [vmem:[%s291 + $0xd50] sm:$0xff]
        %v812 = vld [vmem:[%s291 + $0xd58] sm:$0xff]
        %v813 = vld [vmem:[%s291 + $0xd60] sm:$0xff]
        %v814 = vld [vmem:[%s291 + $0xd68] sm:$0xff]
        %v815 = vld [vmem:[%s291 + $0xd70] sm:$0xff]
        %v816 = vld [vmem:[%s291 + $0xd78] sm:$0xff]
        %v817 = vld [vmem:[%s291 + $0xd80] sm:$0xff]
        %v818 = vld [vmem:[%s291 + $0xd88] sm:$0xff]
        %v819 = vld [vmem:[%s291 + $0xd90] sm:$0xff]
        %v820 = vld [vmem:[%s291 + $0xd98] sm:$0xff]
        %v821 = vld [vmem:[%s291 + $0xda0] sm:$0xff]
        %v822 = vld [vmem:[%s291 + $0xda8] sm:$0xff]
        %v823 = vld [vmem:[%s291 + $0xdb0] sm:$0xff]
        %v824 = vld [vmem:[%s291 + $0xdb8] sm:$0xff]
        %v825 = vld [vmem:[%s291 + $0xdc0] sm:$0xff]
        %v826 = vld [vmem:[%s291 + $0xdc8] sm:$0xff]
        %v827 = vld [vmem:[%s291 + $0xdd0] sm:$0xff]
        %v828 = vld [vmem:[%s291 + $0xdd8] sm:$0xff]
        %v829 = vld [vmem:[%s291 + $0xde0] sm:$0xff]
        %v830 = vld [vmem:[%s291 + $0xde8] sm:$0xff]
        %v831 = vld [vmem:[%s291 + $0xdf0] sm:$0xff]
        %v832 = vld [vmem:[%s291 + $0xdf8] sm:$0xff]
        %v833 = vld [vmem:[%s291 + $0xe00] sm:$0xff]
        %v834 = vld [vmem:[%s291 + $0xe08] sm:$0xff]
        %v835 = vld [vmem:[%s291 + $0xe10] sm:$0xff]
        %v836 = vld [vmem:[%s291 + $0xe18] sm:$0xff]
        %v837 = vld [vmem:[%s291 + $0xe20] sm:$0xff]
        %v838 = vld [vmem:[%s291 + $0xe28] sm:$0xff]
        %v839 = vld [vmem:[%s291 + $0xe30] sm:$0xff]
        %v840 = vld [vmem:[%s291 + $0xe38] sm:$0xff]
        %v841 = vld [vmem:[%s291 + $0xe40] sm:$0xff]
        %v842 = vld [vmem:[%s291 + $0xe48] sm:$0xff]
        %v843 = vld [vmem:[%s291 + $0xe50] sm:$0xff]
        %v844 = vld [vmem:[%s291 + $0xe58] sm:$0xff]
        %v845 = vld [vmem:[%s291 + $0xe60] sm:$0xff]
        %v846 = vld [vmem:[%s291 + $0xe68] sm:$0xff]
        %v847 = vld [vmem:[%s291 + $0xe70] sm:$0xff]
        %v848 = vld [vmem:[%s291 + $0xe78] sm:$0xff]
        %v849 = vld [vmem:[%s291 + $0xe80] sm:$0xff]
        %v850 = vld [vmem:[%s291 + $0xe88] sm:$0xff]
        %v851 = vld [vmem:[%s291 + $0xe90] sm:$0xff]
        %v852 = vld [vmem:[%s291 + $0xe98] sm:$0xff]
        %v853 = vld [vmem:[%s291 + $0xea0] sm:$0xff]
        %v854 = vld [vmem:[%s291 + $0xea8] sm:$0xff]
        %v855 = vld [vmem:[%s291 + $0xeb0] sm:$0xff]
        %v856 = vld [vmem:[%s291 + $0xeb8] sm:$0xff]
        %v857 = vld [vmem:[%s291 + $0xec0] sm:$0xff]
        %v858 = vld [vmem:[%s291 + $0xec8] sm:$0xff]
        %v859 = vld [vmem:[%s291 + $0xed0] sm:$0xff]
        %v860 = vld [vmem:[%s291 + $0xed8] sm:$0xff]
        %v861 = vld [vmem:[%s291 + $0xee0] sm:$0xff]
        %v862 = vld [vmem:[%s291 + $0xee8] sm:$0xff]
        %v863 = vld [vmem:[%s291 + $0xef0] sm:$0xff]
        %v864 = vld [vmem:[%s291 + $0xef8] sm:$0xff]
        %v865 = vld [vmem:[%s291 + $0xf00] sm:$0xff]
        %v866 = vld [vmem:[%s291 + $0xf08] sm:$0xff]
        %v867 = vld [vmem:[%s291 + $0xf10] sm:$0xff]
        %v868 = vld [vmem:[%s291 + $0xf18] sm:$0xff]
        %v869 = vld [vmem:[%s291 + $0xf20] sm:$0xff]
        %v870 = vld [vmem:[%s291 + $0xf28] sm:$0xff]
        %v871 = vld [vmem:[%s291 + $0xf30] sm:$0xff]
        %v872 = vld [vmem:[%s291 + $0xf38] sm:$0xff]
        %v873 = vld [vmem:[%s291 + $0xf40] sm:$0xff]
        %v874 = vld [vmem:[%s291 + $0xf48] sm:$0xff]
        %v875 = vld [vmem:[%s291 + $0xf50] sm:$0xff]
        %v876 = vld [vmem:[%s291 + $0xf58] sm:$0xff]
        %v877 = vld [vmem:[%s291 + $0xf60] sm:$0xff]
        %v878 = vld [vmem:[%s291 + $0xf68] sm:$0xff]
        %v879 = vld [vmem:[%s291 + $0xf70] sm:$0xff]
        %v880 = vld [vmem:[%s291 + $0xf78] sm:$0xff]
        %v881 = vld [vmem:[%s291 + $0xf80] sm:$0xff]
        %v882 = vld [vmem:[%s291 + $0xf88] sm:$0xff]
        %v883 = vld [vmem:[%s291 + $0xf90] sm:$0xff]
        %v884 = vld [vmem:[%s291 + $0xf98] sm:$0xff]
        %v885 = vld [vmem:[%s291 + $0xfa0] sm:$0xff]
        %v886 = vld [vmem:[%s291 + $0xfa8] sm:$0xff]
        %v887 = vld [vmem:[%s291 + $0xfb0] sm:$0xff]
        %v888 = vld [vmem:[%s291 + $0xfb8] sm:$0xff]
        %v889 = vld [vmem:[%s291 + $0xfc0] sm:$0xff]
        %v890 = vld [vmem:[%s291 + $0xfc8] sm:$0xff]
        %v891 = vld [vmem:[%s291 + $0xfd0] sm:$0xff]
        %v892 = vld [vmem:[%s291 + $0xfd8] sm:$0xff]
        %v893 = vld [vmem:[%s291 + $0xfe0] sm:$0xff]
        %v894 = vld [vmem:[%s291 + $0xfe8] sm:$0xff]
        %v895 = vld [vmem:[%s291 + $0xff0] sm:$0xff]
        %v896 = vld [vmem:[%s291 + $0xff8] sm:$0xff]
        %v897 = vld [vmem:[%s291 + $0x1000] sm:$0xff]
        %v898 = vld [vmem:[%s291 + $0x1008] sm:$0xff]
        %v899 = vld [vmem:[%s291 + $0x1010] sm:$0xff]
        %v900 = vld [vmem:[%s291 + $0x1018] sm:$0xff]
        %v901 = vld [vmem:[%s291 + $0x1020] sm:$0xff]
        %v902 = vld [vmem:[%s291 + $0x1028] sm:$0xff]
        %v903 = vld [vmem:[%s291 + $0x1030] sm:$0xff]
        %v904 = vld [vmem:[%s291 + $0x1038] sm:$0xff]
        %v905 = vld [vmem:[%s291 + $0x1040] sm:$0xff]
        %v906 = vld [vmem:[%s291 + $0x1048] sm:$0xff]
        %v907 = vld [vmem:[%s291 + $0x1050] sm:$0xff]
        %v908 = vld [vmem:[%s291 + $0x1058] sm:$0xff]
        %v909 = vld [vmem:[%s291 + $0x1060] sm:$0xff]
        %v910 = vld [vmem:[%s291 + $0x1068] sm:$0xff]
        %v911 = vld [vmem:[%s291 + $0x1070] sm:$0xff]
        %v912 = vld [vmem:[%s291 + $0x1078] sm:$0xff]
        %v913 = vld [vmem:[%s291 + $0x1080] sm:$0xff]
        %v914 = vld [vmem:[%s291 + $0x1088] sm:$0xff]
        %v915 = vld [vmem:[%s291 + $0x1090] sm:$0xff]
        %v916 = vld [vmem:[%s291 + $0x1098] sm:$0xff]
        %v917 = vld [vmem:[%s291 + $0x10a0] sm:$0xff]
        %v918 = vld [vmem:[%s291 + $0x10a8] sm:$0xff]
        %v919 = vld [vmem:[%s291 + $0x10b0] sm:$0xff]
        %v920 = vld [vmem:[%s291 + $0x10b8] sm:$0xff]
        %v921 = vld [vmem:[%s291 + $0x10c0] sm:$0xff]
        %v922 = vld [vmem:[%s291 + $0x10c8] sm:$0xff]
        %v923 = vld [vmem:[%s291 + $0x10d0] sm:$0xff]
        %v924 = vld [vmem:[%s291 + $0x10d8] sm:$0xff]
        %v925 = vld [vmem:[%s291 + $0x10e0] sm:$0xff]
        %v926 = vld [vmem:[%s291 + $0x10e8] sm:$0xff]
        %v927 = vld [vmem:[%s291 + $0x10f0] sm:$0xff]
        %v928 = vld [vmem:[%s291 + $0x10f8] sm:$0xff]
        %v929 = vld [vmem:[%s291 + $0x1100] sm:$0xff]
        %v930 = vld [vmem:[%s291 + $0x1108] sm:$0xff]
        %v931 = vld [vmem:[%s291 + $0x1110] sm:$0xff]
        %v932 = vld [vmem:[%s291 + $0x1118] sm:$0xff]
        %v933 = vld [vmem:[%s291 + $0x1120] sm:$0xff]
        %v934 = vld [vmem:[%s291 + $0x1128] sm:$0xff]
        %v935 = vld [vmem:[%s291 + $0x1130] sm:$0xff]
        %v936 = vld [vmem:[%s291 + $0x1138] sm:$0xff]
        %v937 = vld [vmem:[%s291 + $0x1140] sm:$0xff]
        %v938 = vld [vmem:[%s291 + $0x1148] sm:$0xff]
        %v939 = vld [vmem:[%s291 + $0x1150] sm:$0xff]
        %v940 = vld [vmem:[%s291 + $0x1158] sm:$0xff]
        %v941 = vld [vmem:[%s291 + $0x1160] sm:$0xff]
        %v942 = vld [vmem:[%s291 + $0x1168] sm:$0xff]
        %v943 = vld [vmem:[%s291 + $0x1170] sm:$0xff]
        %v944 = vld [vmem:[%s291 + $0x1178] sm:$0xff]
        %v945 = vld [vmem:[%s291 + $0x1180] sm:$0xff]
        %v946 = vld [vmem:[%s291 + $0x1188] sm:$0xff]
        %v947 = vld [vmem:[%s291 + $0x1190] sm:$0xff]
        %v948 = vld [vmem:[%s291 + $0x1198] sm:$0xff]
        %v949 = vld [vmem:[%s291 + $0x11a0] sm:$0xff]
        %v950 = vld [vmem:[%s291 + $0x11a8] sm:$0xff]
        %v951 = vld [vmem:[%s291 + $0x11b0] sm:$0xff]
        %v952 = vld [vmem:[%s291 + $0x11b8] sm:$0xff]
        %v953 = vld [vmem:[%s291 + $0x11c0] sm:$0xff]
        %v954 = vld [vmem:[%s291 + $0x11c8] sm:$0xff]
        %v955 = vld [vmem:[%s291 + $0x11d0] sm:$0xff]
        %v956 = vld [vmem:[%s291 + $0x11d8] sm:$0xff]
        %v957 = vld [vmem:[%s291 + $0x11e0] sm:$0xff]
        %v958 = vld [vmem:[%s291 + $0x11e8] sm:$0xff]
        %v959 = vld [vmem:[%s291 + $0x11f0] sm:$0xff]
        %v960 = vld [vmem:[%s291 + $0x11f8] sm:$0xff]
        %v961 = vld [vmem:[%s291 + $0x1200] sm:$0xff]
        %v962 = vld [vmem:[%s291 + $0x1208] sm:$0xff]
        %v963 = vld [vmem:[%s291 + $0x1210] sm:$0xff]
        %v964 = vld [vmem:[%s291 + $0x1218] sm:$0xff]
        %v965 = vld [vmem:[%s291 + $0x1220] sm:$0xff]
        %v966 = vld [vmem:[%s291 + $0x1228] sm:$0xff]
        %v967 = vld [vmem:[%s291 + $0x1230] sm:$0xff]
        %v968 = vld [vmem:[%s291 + $0x1238] sm:$0xff]
        %v969 = vld [vmem:[%s291 + $0x1240] sm:$0xff]
        %v970 = vld [vmem:[%s291 + $0x1248] sm:$0xff]
        %v971 = vld [vmem:[%s291 + $0x1250] sm:$0xff]
        %v972 = vld [vmem:[%s291 + $0x1258] sm:$0xff]
        %v973 = vld [vmem:[%s291 + $0x1260] sm:$0xff]
        %v974 = vld [vmem:[%s291 + $0x1268] sm:$0xff]
        %v975 = vld [vmem:[%s291 + $0x1270] sm:$0xff]
        %v976 = vld [vmem:[%s291 + $0x1278] sm:$0xff]
        %v977 = vld [vmem:[%s291 + $0x1280] sm:$0xff]
        %v978 = vld [vmem:[%s291 + $0x1288] sm:$0xff]
        %v979 = vld [vmem:[%s291 + $0x1290] sm:$0xff]
        %v980 = vld [vmem:[%s291 + $0x1298] sm:$0xff]
        %v981 = vld [vmem:[%s291 + $0x12a0] sm:$0xff]
        %v982 = vld [vmem:[%s291 + $0x12a8] sm:$0xff]
        %v983 = vld [vmem:[%s291 + $0x12b0] sm:$0xff]
        %v984 = vld [vmem:[%s291 + $0x12b8] sm:$0xff]
        %v985 = vld [vmem:[%s291 + $0x12c0] sm:$0xff]
        %v986 = vld [vmem:[%s291 + $0x12c8] sm:$0xff]
        %v987 = vld [vmem:[%s291 + $0x12d0] sm:$0xff]
        %v988 = vld [vmem:[%s291 + $0x12d8] sm:$0xff]
        %v989 = vld [vmem:[%s291 + $0x12e0] sm:$0xff]
        %v990 = vld [vmem:[%s291 + $0x12e8] sm:$0xff]
        %v991 = vld [vmem:[%s291 + $0x12f0] sm:$0xff]
        %v992 = vld [vmem:[%s291 + $0x12f8] sm:$0xff]
        %v993 = vld [vmem:[%s291 + $0x1300] sm:$0xff]
        %v994 = vld [vmem:[%s291 + $0x1308] sm:$0xff]
        %v995 = vld [vmem:[%s291 + $0x1310] sm:$0xff]
        %v996 = vld [vmem:[%s291 + $0x1318] sm:$0xff]
        %v997 = vld [vmem:[%s291 + $0x1320] sm:$0xff]
        %v998 = vld [vmem:[%s291 + $0x1328] sm:$0xff]
        %v999 = vld [vmem:[%s291 + $0x1330] sm:$0xff]
        %v1000 = vld [vmem:[%s291 + $0x1338] sm:$0xff]
        %v1001 = vld [vmem:[%s291 + $0x1340] sm:$0xff]
        %v1002 = vld [vmem:[%s291 + $0x1348] sm:$0xff]
        %v1003 = vld [vmem:[%s291 + $0x1350] sm:$0xff]
        %v1004 = vld [vmem:[%s291 + $0x1358] sm:$0xff]
        %v1005 = vld [vmem:[%s291 + $0x1360] sm:$0xff]
        %v1006 = vld [vmem:[%s291 + $0x1368] sm:$0xff]
        %v1007 = vld [vmem:[%s291 + $0x1370] sm:$0xff]
        %v1008 = vld [vmem:[%s291 + $0x1378] sm:$0xff]
        %v1009 = vld [vmem:[%s291 + $0x1380] sm:$0xff]
        %v1010 = vld [vmem:[%s291 + $0x1388] sm:$0xff]
        %v1011 = vld [vmem:[%s291 + $0x1390] sm:$0xff]
        %v1012 = vld [vmem:[%s291 + $0x1398] sm:$0xff]
        %v1013 = vld [vmem:[%s291 + $0x13a0] sm:$0xff]
        %v1014 = vld [vmem:[%s291 + $0x13a8] sm:$0xff]
        %v1015 = vld [vmem:[%s291 + $0x13b0] sm:$0xff]
        %v1016 = vld [vmem:[%s291 + $0x13b8] sm:$0xff]
        %v1017 = vld [vmem:[%s291 + $0x13c0] sm:$0xff]
        %v1018 = vld [vmem:[%s291 + $0x13c8] sm:$0xff]
        %v1019 = vld [vmem:[%s291 + $0x13d0] sm:$0xff]
        %v1020 = vld [vmem:[%s291 + $0x13d8] sm:$0xff]
        %v1021 = vld [vmem:[%s291 + $0x13e0] sm:$0xff]
        %v1022 = vld [vmem:[%s291 + $0x13e8] sm:$0xff]
        %v1023 = vld [vmem:[%s291 + $0x13f0] sm:$0xff]
        %v1024 = vld [vmem:[%s291 + $0x13f8] sm:$0xff]
        %v1025 = vld [vmem:[%s291 + $0x1400] sm:$0xff]
        %v1026 = vld [vmem:[%s291 + $0x1408] sm:$0xff]
        %v1027 = vld [vmem:[%s291 + $0x1410] sm:$0xff]
        %v1028 = vld [vmem:[%s291 + $0x1418] sm:$0xff]
        %v1029 = vld [vmem:[%s291 + $0x1420] sm:$0xff]
        %v1030 = vld [vmem:[%s291 + $0x1428] sm:$0xff]
        %v1031 = vld [vmem:[%s291 + $0x1430] sm:$0xff]
        %v1032 = vld [vmem:[%s291 + $0x1438] sm:$0xff]
        %v1033 = vld [vmem:[%s291 + $0x1440] sm:$0xff]
        %v1034 = vld [vmem:[%s291 + $0x1448] sm:$0xff]
        %v1035 = vld [vmem:[%s291 + $0x1450] sm:$0xff]
        %v1036 = vld [vmem:[%s291 + $0x1458] sm:$0xff]
        %v1037 = vld [vmem:[%s291 + $0x1460] sm:$0xff]
        %v1038 = vld [vmem:[%s291 + $0x1468] sm:$0xff]
        %v1039 = vld [vmem:[%s291 + $0x1470] sm:$0xff]
        %v1040 = vld [vmem:[%s291 + $0x1478] sm:$0xff]
        %v1041 = vld [vmem:[%s291 + $0x1480] sm:$0xff]
        %v1042 = vld [vmem:[%s291 + $0x1488] sm:$0xff]
        %v1043 = vld [vmem:[%s291 + $0x1490] sm:$0xff]
        %v1044 = vld [vmem:[%s291 + $0x1498] sm:$0xff]
        %v1045 = vld [vmem:[%s291 + $0x14a0] sm:$0xff]
        %v1046 = vld [vmem:[%s291 + $0x14a8] sm:$0xff]
        %v1047 = vld [vmem:[%s291 + $0x14b0] sm:$0xff]
        %v1048 = vld [vmem:[%s291 + $0x14b8] sm:$0xff]
        %v1049 = vld [vmem:[%s291 + $0x14c0] sm:$0xff]
        %v1050 = vld [vmem:[%s291 + $0x14c8] sm:$0xff]
        %v1051 = vld [vmem:[%s291 + $0x14d0] sm:$0xff]
        %v1052 = vld [vmem:[%s291 + $0x14d8] sm:$0xff]
        %v1053 = vld [vmem:[%s291 + $0x14e0] sm:$0xff]
        %v1054 = vld [vmem:[%s291 + $0x14e8] sm:$0xff]
        %v1055 = vld [vmem:[%s291 + $0x14f0] sm:$0xff]
        %v1056 = vld [vmem:[%s291 + $0x14f8] sm:$0xff]
        %v1057 = vld [vmem:[%s291 + $0x1500] sm:$0xff]
        %v1058 = vld [vmem:[%s291 + $0x1508] sm:$0xff]
        %v1059 = vld [vmem:[%s291 + $0x1510] sm:$0xff]
        %v1060 = vld [vmem:[%s291 + $0x1518] sm:$0xff]
        %v1061 = vld [vmem:[%s291 + $0x1520] sm:$0xff]
        %v1062 = vld [vmem:[%s291 + $0x1528] sm:$0xff]
        %v1063 = vld [vmem:[%s291 + $0x1530] sm:$0xff]
        %v1064 = vld [vmem:[%s291 + $0x1538] sm:$0xff]
        %v1065 = vld [vmem:[%s291 + $0x1540] sm:$0xff]
        %v1066 = vld [vmem:[%s291 + $0x1548] sm:$0xff]
        %v1067 = vld [vmem:[%s291 + $0x1550] sm:$0xff]
        %v1068 = vld [vmem:[%s291 + $0x1558] sm:$0xff]
        %v1069 = vld [vmem:[%s291 + $0x1560] sm:$0xff]
        %v1070 = vld [vmem:[%s291 + $0x1568] sm:$0xff]
        %v1071 = vld [vmem:[%s291 + $0x1570] sm:$0xff]
        %v1072 = vld [vmem:[%s291 + $0x1578] sm:$0xff]
        %v1073 = vld [vmem:[%s291 + $0x1580] sm:$0xff]
        %v1074 = vld [vmem:[%s291 + $0x1588] sm:$0xff]
        %v1075 = vld [vmem:[%s291 + $0x1590] sm:$0xff]
        %v1076 = vld [vmem:[%s291 + $0x1598] sm:$0xff]
        %v1077 = vld [vmem:[%s291 + $0x15a0] sm:$0xff]
        %v1078 = vld [vmem:[%s291 + $0x15a8] sm:$0xff]
        %v1079 = vld [vmem:[%s291 + $0x15b0] sm:$0xff]
        %v1080 = vld [vmem:[%s291 + $0x15b8] sm:$0xff]
        %v1081 = vld [vmem:[%s291 + $0x15c0] sm:$0xff]
        %v1082 = vld [vmem:[%s291 + $0x15c8] sm:$0xff]
        %v1083 = vld [vmem:[%s291 + $0x15d0] sm:$0xff]
        %v1084 = vld [vmem:[%s291 + $0x15d8] sm:$0xff]
        %v1085 = vld [vmem:[%s291 + $0x15e0] sm:$0xff]
        %v1086 = vld [vmem:[%s291 + $0x15e8] sm:$0xff]
        %v1087 = vld [vmem:[%s291 + $0x15f0] sm:$0xff]
        %v1088 = vld [vmem:[%s291 + $0x15f8] sm:$0xff]
        %v1089 = vld [vmem:[%s291 + $0x1600] sm:$0xff]
        %v1090 = vld [vmem:[%s291 + $0x1608] sm:$0xff]
        %v1091 = vld [vmem:[%s291 + $0x1610] sm:$0xff]
        %v1092 = vld [vmem:[%s291 + $0x1618] sm:$0xff]
        %v1093 = vld [vmem:[%s291 + $0x1620] sm:$0xff]
        %v1094 = vld [vmem:[%s291 + $0x1628] sm:$0xff]
        %v1095 = vld [vmem:[%s291 + $0x1630] sm:$0xff]
        %v1096 = vld [vmem:[%s291 + $0x1638] sm:$0xff]
        %v1097 = vld [vmem:[%s291 + $0x1640] sm:$0xff]
        %v1098 = vld [vmem:[%s291 + $0x1648] sm:$0xff]
        %v1099 = vld [vmem:[%s291 + $0x1650] sm:$0xff]
        %v1100 = vld [vmem:[%s291 + $0x1658] sm:$0xff]
        %v1101 = vld [vmem:[%s291 + $0x1660] sm:$0xff]
        %v1102 = vld [vmem:[%s291 + $0x1668] sm:$0xff]
        %v1103 = vld [vmem:[%s291 + $0x1670] sm:$0xff]
        %v1104 = vld [vmem:[%s291 + $0x1678] sm:$0xff]
        %v1105 = vld [vmem:[%s291 + $0x1680] sm:$0xff]
        %v1106 = vld [vmem:[%s291 + $0x1688] sm:$0xff]
        %v1107 = vld [vmem:[%s291 + $0x1690] sm:$0xff]
        %v1108 = vld [vmem:[%s291 + $0x1698] sm:$0xff]
        %v1109 = vld [vmem:[%s291 + $0x16a0] sm:$0xff]
        %v1110 = vld [vmem:[%s291 + $0x16a8] sm:$0xff]
        %v1111 = vld [vmem:[%s291 + $0x16b0] sm:$0xff]
        %v1112 = vld [vmem:[%s291 + $0x16b8] sm:$0xff]
        %v1113 = vld [vmem:[%s291 + $0x16c0] sm:$0xff]
        %v1114 = vld [vmem:[%s291 + $0x16c8] sm:$0xff]
        %v1115 = vld [vmem:[%s291 + $0x16d0] sm:$0xff]
        %v1116 = vld [vmem:[%s291 + $0x16d8] sm:$0xff]
        %v1117 = vld [vmem:[%s291 + $0x16e0] sm:$0xff]
        %v1118 = vld [vmem:[%s291 + $0x16e8] sm:$0xff]
        %v1119 = vld [vmem:[%s291 + $0x16f0] sm:$0xff]
        %v1120 = vld [vmem:[%s291 + $0x16f8] sm:$0xff]
        %v1121 = vld [vmem:[%s291 + $0x1700] sm:$0xff]
        %v1122 = vld [vmem:[%s291 + $0x1708] sm:$0xff]
        %v1123 = vld [vmem:[%s291 + $0x1710] sm:$0xff]
        %v1124 = vld [vmem:[%s291 + $0x1718] sm:$0xff]
        %v1125 = vld [vmem:[%s291 + $0x1720] sm:$0xff]
        %v1126 = vld [vmem:[%s291 + $0x1728] sm:$0xff]
        %v1127 = vld [vmem:[%s291 + $0x1730] sm:$0xff]
        %v1128 = vld [vmem:[%s291 + $0x1738] sm:$0xff]
        %v1129 = vld [vmem:[%s291 + $0x1740] sm:$0xff]
        %v1130 = vld [vmem:[%s291 + $0x1748] sm:$0xff]
        %v1131 = vld [vmem:[%s291 + $0x1750] sm:$0xff]
        %v1132 = vld [vmem:[%s291 + $0x1758] sm:$0xff]
        %v1133 = vld [vmem:[%s291 + $0x1760] sm:$0xff]
        %v1134 = vld [vmem:[%s291 + $0x1768] sm:$0xff]
        %v1135 = vld [vmem:[%s291 + $0x1770] sm:$0xff]
        %v1136 = vld [vmem:[%s291 + $0x1778] sm:$0xff]
        %v1137 = vld [vmem:[%s291 + $0x1780] sm:$0xff]
        %v1138 = vld [vmem:[%s291 + $0x1788] sm:$0xff]
        %v1139 = vld [vmem:[%s291 + $0x1790] sm:$0xff]
        %v1140 = vld [vmem:[%s291 + $0x1798] sm:$0xff]
        %v1141 = vld [vmem:[%s291 + $0x17a0] sm:$0xff]
        %v1142 = vld [vmem:[%s291 + $0x17a8] sm:$0xff]
        %v1143 = vld [vmem:[%s291 + $0x17b0] sm:$0xff]
        %v1144 = vld [vmem:[%s291 + $0x17b8] sm:$0xff]
        %v1145 = vld [vmem:[%s291 + $0x17c0] sm:$0xff]
        %v1146 = vld [vmem:[%s291 + $0x17c8] sm:$0xff]
        %v1147 = vld [vmem:[%s291 + $0x17d0] sm:$0xff]
        %v1148 = vld [vmem:[%s291 + $0x17d8] sm:$0xff]
        %v1149 = vld [vmem:[%s291 + $0x17e0] sm:$0xff]
        %v1150 = vld [vmem:[%s291 + $0x17e8] sm:$0xff]
        %v1151 = vld [vmem:[%s291 + $0x17f0] sm:$0xff]
        %v1152 = vld [vmem:[%s291 + $0x17f8] sm:$0xff]
        %v1153 = vld [vmem:[%s291 + $0x1800] sm:$0xff]
        %v1154 = vld [vmem:[%s291 + $0x1808] sm:$0xff]
        %v1155 = vld [vmem:[%s291 + $0x1810] sm:$0xff]
        %v1156 = vld [vmem:[%s291 + $0x1818] sm:$0xff]
        %v1157 = vld [vmem:[%s291 + $0x1820] sm:$0xff]
        %v1158 = vld [vmem:[%s291 + $0x1828] sm:$0xff]
        %v1159 = vld [vmem:[%s291 + $0x1830] sm:$0xff]
        %v1160 = vld [vmem:[%s291 + $0x1838] sm:$0xff]
        %v1161 = vld [vmem:[%s291 + $0x1840] sm:$0xff]
        %v1162 = vld [vmem:[%s291 + $0x1848] sm:$0xff]
        %v1163 = vld [vmem:[%s291 + $0x1850] sm:$0xff]
        %v1164 = vld [vmem:[%s291 + $0x1858] sm:$0xff]
        %v1165 = vld [vmem:[%s291 + $0x1860] sm:$0xff]
        %v1166 = vld [vmem:[%s291 + $0x1868] sm:$0xff]
        %v1167 = vld [vmem:[%s291 + $0x1870] sm:$0xff]
        %v1168 = vld [vmem:[%s291 + $0x1878] sm:$0xff]
        %v1169 = vld [vmem:[%s291 + $0x1880] sm:$0xff]
        %v1170 = vld [vmem:[%s291 + $0x1888] sm:$0xff]
        %v1171 = vld [vmem:[%s291 + $0x1890] sm:$0xff]
        %v1172 = vld [vmem:[%s291 + $0x1898] sm:$0xff]
        %v1173 = vld [vmem:[%s291 + $0x18a0] sm:$0xff]
        %v1174 = vld [vmem:[%s291 + $0x18a8] sm:$0xff]
        %v1175 = vld [vmem:[%s291 + $0x18b0] sm:$0xff]
        %v1176 = vld [vmem:[%s291 + $0x18b8] sm:$0xff]
        %v1177 = vld [vmem:[%s291 + $0x18c0] sm:$0xff]
        %v1178 = vld [vmem:[%s291 + $0x18c8] sm:$0xff]
        %v1179 = vld [vmem:[%s291 + $0x18d0] sm:$0xff]
        %v1180 = vld [vmem:[%s291 + $0x18d8] sm:$0xff]
        %v1181 = vld [vmem:[%s291 + $0x18e0] sm:$0xff]
        %v1182 = vld [vmem:[%s291 + $0x18e8] sm:$0xff]
        %v1183 = vld [vmem:[%s291 + $0x18f0] sm:$0xff]
        %v1184 = vld [vmem:[%s291 + $0x18f8] sm:$0xff]
        %v1185 = vld [vmem:[%s291 + $0x1900] sm:$0xff]
        %v1186 = vld [vmem:[%s291 + $0x1908] sm:$0xff]
        %v1187 = vld [vmem:[%s291 + $0x1910] sm:$0xff]
        %v1188 = vld [vmem:[%s291 + $0x1918] sm:$0xff]
        %v1189 = vld [vmem:[%s291 + $0x1920] sm:$0xff]
        %v1190 = vld [vmem:[%s291 + $0x1928] sm:$0xff]
        %v1191 = vld [vmem:[%s291 + $0x1930] sm:$0xff]
        %v1192 = vld [vmem:[%s291 + $0x1938] sm:$0xff]
        %v1193 = vld [vmem:[%s291 + $0x1940] sm:$0xff]
        %v1194 = vld [vmem:[%s291 + $0x1948] sm:$0xff]
        %v1195 = vld [vmem:[%s291 + $0x1950] sm:$0xff]
        %v1196 = vld [vmem:[%s291 + $0x1958] sm:$0xff]
        %v1197 = vld [vmem:[%s291 + $0x1960] sm:$0xff]
        %v1198 = vld [vmem:[%s291 + $0x1968] sm:$0xff]
        %v1199 = vld [vmem:[%s291 + $0x1970] sm:$0xff]
        %v1200 = vld [vmem:[%s291 + $0x1978] sm:$0xff]
        %v1201 = vld [vmem:[%s291 + $0x1980] sm:$0xff]
        %v1202 = vld [vmem:[%s291 + $0x1988] sm:$0xff]
        %v1203 = vld [vmem:[%s291 + $0x1990] sm:$0xff]
        %v1204 = vld [vmem:[%s291 + $0x1998] sm:$0xff]
        %v1205 = vld [vmem:[%s291 + $0x19a0] sm:$0xff]
        %v1206 = vld [vmem:[%s291 + $0x19a8] sm:$0xff]
        %v1207 = vld [vmem:[%s291 + $0x19b0] sm:$0xff]
        %v1208 = vld [vmem:[%s291 + $0x19b8] sm:$0xff]
        %v1209 = vld [vmem:[%s291 + $0x19c0] sm:$0xff]
        %v1210 = vld [vmem:[%s291 + $0x19c8] sm:$0xff]
        %v1211 = vld [vmem:[%s291 + $0x19d0] sm:$0xff]
        %v1212 = vld [vmem:[%s291 + $0x19d8] sm:$0xff]
        %v1213 = vld [vmem:[%s291 + $0x19e0] sm:$0xff]
        %v1214 = vld [vmem:[%s291 + $0x19e8] sm:$0xff]
        %v1215 = vld [vmem:[%s291 + $0x19f0] sm:$0xff]
        %v1216 = vld [vmem:[%s291 + $0x19f8] sm:$0xff]
        %v1217 = vld [vmem:[%s291 + $0x1a00] sm:$0xff]
        %v1218 = vld [vmem:[%s291 + $0x1a08] sm:$0xff]
        %v1219 = vld [vmem:[%s291 + $0x1a10] sm:$0xff]
        %v1220 = vld [vmem:[%s291 + $0x1a18] sm:$0xff]
        %v1221 = vld [vmem:[%s291 + $0x1a20] sm:$0xff]
        %v1222 = vld [vmem:[%s291 + $0x1a28] sm:$0xff]
        %v1223 = vld [vmem:[%s291 + $0x1a30] sm:$0xff]
        %v1224 = vld [vmem:[%s291 + $0x1a38] sm:$0xff]
        %v1225 = vld [vmem:[%s291 + $0x1a40] sm:$0xff]
        %v1226 = vld [vmem:[%s291 + $0x1a48] sm:$0xff]
        %v1227 = vld [vmem:[%s291 + $0x1a50] sm:$0xff]
        %v1228 = vld [vmem:[%s291 + $0x1a58] sm:$0xff]
        %v1229 = vld [vmem:[%s291 + $0x1a60] sm:$0xff]
        %v1230 = vld [vmem:[%s291 + $0x1a68] sm:$0xff]
        %v1231 = vld [vmem:[%s291 + $0x1a70] sm:$0xff]
        %v1232 = vld [vmem:[%s291 + $0x1a78] sm:$0xff]
        %v1233 = vld [vmem:[%s291 + $0x1a80] sm:$0xff]
        %v1234 = vld [vmem:[%s291 + $0x1a88] sm:$0xff]
        %v1235 = vld [vmem:[%s291 + $0x1a90] sm:$0xff]
        %v1236 = vld [vmem:[%s291 + $0x1a98] sm:$0xff]
        %v1237 = vld [vmem:[%s291 + $0x1aa0] sm:$0xff]
        %v1238 = vld [vmem:[%s291 + $0x1aa8] sm:$0xff]
        %v1239 = vld [vmem:[%s291 + $0x1ab0] sm:$0xff]
        %v1240 = vld [vmem:[%s291 + $0x1ab8] sm:$0xff]
        %v1241 = vld [vmem:[%s291 + $0x1ac0] sm:$0xff]
        %v1242 = vld [vmem:[%s291 + $0x1ac8] sm:$0xff]
        %v1243 = vld [vmem:[%s291 + $0x1ad0] sm:$0xff]
        %v1244 = vld [vmem:[%s291 + $0x1ad8] sm:$0xff]
        %v1245 = vld [vmem:[%s291 + $0x1ae0] sm:$0xff]
        %v1246 = vld [vmem:[%s291 + $0x1ae8] sm:$0xff]
        %v1247 = vld [vmem:[%s291 + $0x1af0] sm:$0xff]
        %v1248 = vld [vmem:[%s291 + $0x1af8] sm:$0xff]
        %v1249 = vld [vmem:[%s291 + $0x1b00] sm:$0xff]
        %v1250 = vld [vmem:[%s291 + $0x1b08] sm:$0xff]
        %v1251 = vld [vmem:[%s291 + $0x1b10] sm:$0xff]
        %v1252 = vld [vmem:[%s291 + $0x1b18] sm:$0xff]
        %v1253 = vld [vmem:[%s291 + $0x1b20] sm:$0xff]
        %v1254 = vld [vmem:[%s291 + $0x1b28] sm:$0xff]
        %v1255 = vld [vmem:[%s291 + $0x1b30] sm:$0xff]
        %v1256 = vld [vmem:[%s291 + $0x1b38] sm:$0xff]
        %v1257 = vld [vmem:[%s291 + $0x1b40] sm:$0xff]
        %v1258 = vld [vmem:[%s291 + $0x1b48] sm:$0xff]
        %v1259 = vld [vmem:[%s291 + $0x1b50] sm:$0xff]
        %v1260 = vld [vmem:[%s291 + $0x1b58] sm:$0xff]
        %v1261 = vld [vmem:[%s291 + $0x1b60] sm:$0xff]
        %v1262 = vld [vmem:[%s291 + $0x1b68] sm:$0xff]
        %v1263 = vld [vmem:[%s291 + $0x1b70] sm:$0xff]
        %v1264 = vld [vmem:[%s291 + $0x1b78] sm:$0xff]
        %v1265 = vld [vmem:[%s291 + $0x1b80] sm:$0xff]
        %v1266 = vld [vmem:[%s291 + $0x1b88] sm:$0xff]
        %v1267 = vld [vmem:[%s291 + $0x1b90] sm:$0xff]
        %v1268 = vld [vmem:[%s291 + $0x1b98] sm:$0xff]
        %v1269 = vld [vmem:[%s291 + $0x1ba0] sm:$0xff]
        %v1270 = vld [vmem:[%s291 + $0x1ba8] sm:$0xff]
        %v1271 = vld [vmem:[%s291 + $0x1bb0] sm:$0xff]
        %v1272 = vld [vmem:[%s291 + $0x1bb8] sm:$0xff]
        %v1273 = vld [vmem:[%s291 + $0x1bc0] sm:$0xff]
        %v1274 = vld [vmem:[%s291 + $0x1bc8] sm:$0xff]
        %v1275 = vld [vmem:[%s291 + $0x1bd0] sm:$0xff]
        %v1276 = vld [vmem:[%s291 + $0x1bd8] sm:$0xff]
        %v1277 = vld [vmem:[%s291 + $0x1be0] sm:$0xff]
        %v1278 = vld [vmem:[%s291 + $0x1be8] sm:$0xff]
        %v1279 = vld [vmem:[%s291 + $0x1bf0] sm:$0xff]
        %v1280 = vld [vmem:[%s291 + $0x1bf8] sm:$0xff]
        %v1281 = vld [vmem:[%s291 + $0x1c00] sm:$0xff]
        %v1282 = vld [vmem:[%s291 + $0x1c08] sm:$0xff]
        %v1283 = vld [vmem:[%s291 + $0x1c10] sm:$0xff]
        %v1284 = vld [vmem:[%s291 + $0x1c18] sm:$0xff]
        %v1285 = vld [vmem:[%s291 + $0x1c20] sm:$0xff]
        %v1286 = vld [vmem:[%s291 + $0x1c28] sm:$0xff]
        %v1287 = vld [vmem:[%s291 + $0x1c30] sm:$0xff]
        %v1288 = vld [vmem:[%s291 + $0x1c38] sm:$0xff]
        %v1289 = vld [vmem:[%s291 + $0x1c40] sm:$0xff]
        %v1290 = vld [vmem:[%s291 + $0x1c48] sm:$0xff]
        %v1291 = vld [vmem:[%s291 + $0x1c50] sm:$0xff]
        %v1292 = vld [vmem:[%s291 + $0x1c58] sm:$0xff]
        %v1293 = vld [vmem:[%s291 + $0x1c60] sm:$0xff]
        %v1294 = vld [vmem:[%s291 + $0x1c68] sm:$0xff]
        %v1295 = vld [vmem:[%s291 + $0x1c70] sm:$0xff]
        %v1296 = vld [vmem:[%s291 + $0x1c78] sm:$0xff]
        %v1297 = vld [vmem:[%s291 + $0x1c80] sm:$0xff]
        %v1298 = vld [vmem:[%s291 + $0x1c88] sm:$0xff]
        %v1299 = vld [vmem:[%s291 + $0x1c90] sm:$0xff]
        %v1300 = vld [vmem:[%s291 + $0x1c98] sm:$0xff]
        %v1301 = vld [vmem:[%s291 + $0x1ca0] sm:$0xff]
        %v1302 = vld [vmem:[%s291 + $0x1ca8] sm:$0xff]
        %v1303 = vld [vmem:[%s291 + $0x1cb0] sm:$0xff]
        %v1304 = vld [vmem:[%s291 + $0x1cb8] sm:$0xff]
        %v1305 = vld [vmem:[%s291 + $0x1cc0] sm:$0xff]
        %v1306 = vld [vmem:[%s291 + $0x1cc8] sm:$0xff]
        %v1307 = vld [vmem:[%s291 + $0x1cd0] sm:$0xff]
        %v1308 = vld [vmem:[%s291 + $0x1cd8] sm:$0xff]
        %v1309 = vld [vmem:[%s291 + $0x1ce0] sm:$0xff]
        %v1310 = vld [vmem:[%s291 + $0x1ce8] sm:$0xff]
        %v1311 = vld [vmem:[%s291 + $0x1cf0] sm:$0xff]
        %v1312 = vld [vmem:[%s291 + $0x1cf8] sm:$0xff]
        %v1313 = vld [vmem:[%s291 + $0x1d00] sm:$0xff]
        %v1314 = vld [vmem:[%s291 + $0x1d08] sm:$0xff]
        %v1315 = vld [vmem:[%s291 + $0x1d10] sm:$0xff]
        %v1316 = vld [vmem:[%s291 + $0x1d18] sm:$0xff]
        %v1317 = vld [vmem:[%s291 + $0x1d20] sm:$0xff]
        %v1318 = vld [vmem:[%s291 + $0x1d28] sm:$0xff]
        %v1319 = vld [vmem:[%s291 + $0x1d30] sm:$0xff]
        %v1320 = vld [vmem:[%s291 + $0x1d38] sm:$0xff]
        %v1321 = vld [vmem:[%s291 + $0x1d40] sm:$0xff]
        %v1322 = vld [vmem:[%s291 + $0x1d48] sm:$0xff]
        %v1323 = vld [vmem:[%s291 + $0x1d50] sm:$0xff]
        %v1324 = vld [vmem:[%s291 + $0x1d58] sm:$0xff]
        %v1325 = vld [vmem:[%s291 + $0x1d60] sm:$0xff]
        %v1326 = vld [vmem:[%s291 + $0x1d68] sm:$0xff]
        %v1327 = vld [vmem:[%s291 + $0x1d70] sm:$0xff]
        %v1328 = vld [vmem:[%s291 + $0x1d78] sm:$0xff]
        %v1329 = vld [vmem:[%s291 + $0x1d80] sm:$0xff]
        %v1330 = vld [vmem:[%s291 + $0x1d88] sm:$0xff]
        %v1331 = vld [vmem:[%s291 + $0x1d90] sm:$0xff]
        %v1332 = vld [vmem:[%s291 + $0x1d98] sm:$0xff]
        %v1333 = vld [vmem:[%s291 + $0x1da0] sm:$0xff]
        %v1334 = vld [vmem:[%s291 + $0x1da8] sm:$0xff]
        %v1335 = vld [vmem:[%s291 + $0x1db0] sm:$0xff]
        %v1336 = vld [vmem:[%s291 + $0x1db8] sm:$0xff]
        %v1337 = vld [vmem:[%s291 + $0x1dc0] sm:$0xff]
        %v1338 = vld [vmem:[%s291 + $0x1dc8] sm:$0xff]
        %v1339 = vld [vmem:[%s291 + $0x1dd0] sm:$0xff]
        %v1340 = vld [vmem:[%s291 + $0x1dd8] sm:$0xff]
        %v1341 = vld [vmem:[%s291 + $0x1de0] sm:$0xff]
        %v1342 = vld [vmem:[%s291 + $0x1de8] sm:$0xff]
        %v1343 = vld [vmem:[%s291 + $0x1df0] sm:$0xff]
        %v1344 = vld [vmem:[%s291 + $0x1df8] sm:$0xff]
        %v1345 = vld [vmem:[%s291 + $0x1e00] sm:$0xff]
        %v1346 = vld [vmem:[%s291 + $0x1e08] sm:$0xff]
        %v1347 = vld [vmem:[%s291 + $0x1e10] sm:$0xff]
        %v1348 = vld [vmem:[%s291 + $0x1e18] sm:$0xff]
        %v1349 = vld [vmem:[%s291 + $0x1e20] sm:$0xff]
        %v1350 = vld [vmem:[%s291 + $0x1e28] sm:$0xff]
        %v1351 = vld [vmem:[%s291 + $0x1e30] sm:$0xff]
        %v1352 = vld [vmem:[%s291 + $0x1e38] sm:$0xff]
        %v1353 = vld [vmem:[%s291 + $0x1e40] sm:$0xff]
        %v1354 = vld [vmem:[%s291 + $0x1e48] sm:$0xff]
        %v1355 = vld [vmem:[%s291 + $0x1e50] sm:$0xff]
        %v1356 = vld [vmem:[%s291 + $0x1e58] sm:$0xff]
        %v1357 = vld [vmem:[%s291 + $0x1e60] sm:$0xff]
        %v1358 = vld [vmem:[%s291 + $0x1e68] sm:$0xff]
        %v1359 = vld [vmem:[%s291 + $0x1e70] sm:$0xff]
        %v1360 = vld [vmem:[%s291 + $0x1e78] sm:$0xff]
        %v1361 = vld [vmem:[%s291 + $0x1e80] sm:$0xff]
        %v1362 = vld [vmem:[%s291 + $0x1e88] sm:$0xff]
        %v1363 = vld [vmem:[%s291 + $0x1e90] sm:$0xff]
        %v1364 = vld [vmem:[%s291 + $0x1e98] sm:$0xff]
        %v1365 = vld [vmem:[%s291 + $0x1ea0] sm:$0xff]
        %v1366 = vld [vmem:[%s291 + $0x1ea8] sm:$0xff]
        %v1367 = vld [vmem:[%s291 + $0x1eb0] sm:$0xff]
        %v1368 = vld [vmem:[%s291 + $0x1eb8] sm:$0xff]
        %v1369 = vld [vmem:[%s291 + $0x1ec0] sm:$0xff]
        %v1370 = vld [vmem:[%s291 + $0x1ec8] sm:$0xff]
        %v1371 = vld [vmem:[%s291 + $0x1ed0] sm:$0xff]
        %v1372 = vld [vmem:[%s291 + $0x1ed8] sm:$0xff]
        %v1373 = vld [vmem:[%s291 + $0x1ee0] sm:$0xff]
        %v1374 = vld [vmem:[%s291 + $0x1ee8] sm:$0xff]
        %v1375 = vld [vmem:[%s291 + $0x1ef0] sm:$0xff]
        %v1376 = vld [vmem:[%s291 + $0x1ef8] sm:$0xff]
        %v1377 = vld [vmem:[%s291 + $0x1f00] sm:$0xff]
        %v1378 = vld [vmem:[%s291 + $0x1f08] sm:$0xff]
        %v1379 = vld [vmem:[%s291 + $0x1f10] sm:$0xff]
        %v1380 = vld [vmem:[%s291 + $0x1f18] sm:$0xff]
        %v1381 = vld [vmem:[%s291 + $0x1f20] sm:$0xff]
        %v1382 = vld [vmem:[%s291 + $0x1f28] sm:$0xff]
        %v1383 = vld [vmem:[%s291 + $0x1f30] sm:$0xff]
        %v1384 = vld [vmem:[%s291 + $0x1f38] sm:$0xff]
        %v1385 = vld [vmem:[%s291 + $0x1f40] sm:$0xff]
        %v1386 = vld [vmem:[%s291 + $0x1f48] sm:$0xff]
        %v1387 = vld [vmem:[%s291 + $0x1f50] sm:$0xff]
        %v1388 = vld [vmem:[%s291 + $0x1f58] sm:$0xff]
        %v1389 = vld [vmem:[%s291 + $0x1f60] sm:$0xff]
        %v1390 = vld [vmem:[%s291 + $0x1f68] sm:$0xff]
        %v1391 = vld [vmem:[%s291 + $0x1f70] sm:$0xff]
        %v1392 = vld [vmem:[%s291 + $0x1f78] sm:$0xff]
        %v1393 = vld [vmem:[%s291 + $0x1f80] sm:$0xff]
        %v1394 = vld [vmem:[%s291 + $0x1f88] sm:$0xff]
        %v1395 = vld [vmem:[%s291 + $0x1f90] sm:$0xff]
        %v1396 = vld [vmem:[%s291 + $0x1f98] sm:$0xff]
        %v1397 = vld [vmem:[%s291 + $0x1fa0] sm:$0xff]
        %v1398 = vld [vmem:[%s291 + $0x1fa8] sm:$0xff]
        %v1399 = vld [vmem:[%s291 + $0x1fb0] sm:$0xff]
        %v1400 = vld [vmem:[%s291 + $0x1fb8] sm:$0xff]
        %v1401 = vld [vmem:[%s291 + $0x1fc0] sm:$0xff]
        %v1402 = vld [vmem:[%s291 + $0x1fc8] sm:$0xff]
        %v1403 = vld [vmem:[%s291 + $0x1fd0] sm:$0xff]
        %v1404 = vld [vmem:[%s291 + $0x1fd8] sm:$0xff]
        %v1405 = vld [vmem:[%s291 + $0x1fe0] sm:$0xff]
        %v1406 = vld [vmem:[%s291 + $0x1fe8] sm:$0xff]
        %v1407 = vld [vmem:[%s291 + $0x1ff0] sm:$0xff]
        %v1408 = vld [vmem:[%s291 + $0x1ff8] sm:$0xff]
        %v1409 = vld [vmem:[%s291 + $0x2000] sm:$0xff]
        %v1410 = vld [vmem:[%s291 + $0x2008] sm:$0xff]
        %v1411 = vld [vmem:[%s291 + $0x2010] sm:$0xff]
        %v1412 = vld [vmem:[%s291 + $0x2018] sm:$0xff]
        %v1413 = vld [vmem:[%s291 + $0x2020] sm:$0xff]
        %v1414 = vld [vmem:[%s291 + $0x2028] sm:$0xff]
        %v1415 = vld [vmem:[%s291 + $0x2030] sm:$0xff]
        %v1416 = vld [vmem:[%s291 + $0x2038] sm:$0xff]
        %v1417 = vld [vmem:[%s291 + $0x2040] sm:$0xff]
        %v1418 = vld [vmem:[%s291 + $0x2048] sm:$0xff]
        %v1419 = vld [vmem:[%s291 + $0x2050] sm:$0xff]
        %v1420 = vld [vmem:[%s291 + $0x2058] sm:$0xff]
        %v1421 = vld [vmem:[%s291 + $0x2060] sm:$0xff]
        %v1422 = vld [vmem:[%s291 + $0x2068] sm:$0xff]
        %v1423 = vld [vmem:[%s291 + $0x2070] sm:$0xff]
        %v1424 = vld [vmem:[%s291 + $0x2078] sm:$0xff]
        %v1425 = vld [vmem:[%s291 + $0x2080] sm:$0xff]
        %v1426 = vld [vmem:[%s291 + $0x2088] sm:$0xff]
        %v1427 = vld [vmem:[%s291 + $0x2090] sm:$0xff]
        %v1428 = vld [vmem:[%s291 + $0x2098] sm:$0xff]
        %v1429 = vld [vmem:[%s291 + $0x20a0] sm:$0xff]
        %v1430 = vld [vmem:[%s291 + $0x20a8] sm:$0xff]
        %v1431 = vld [vmem:[%s291 + $0x20b0] sm:$0xff]
        %v1432 = vld [vmem:[%s291 + $0x20b8] sm:$0xff]
        %v1433 = vld [vmem:[%s291 + $0x20c0] sm:$0xff]
        %v1434 = vld [vmem:[%s291 + $0x20c8] sm:$0xff]
        %v1435 = vld [vmem:[%s291 + $0x20d0] sm:$0xff]
        %v1436 = vld [vmem:[%s291 + $0x20d8] sm:$0xff]
        %v1437 = vld [vmem:[%s291 + $0x20e0] sm:$0xff]
        %v1438 = vld [vmem:[%s291 + $0x20e8] sm:$0xff]
        %v1439 = vld [vmem:[%s291 + $0x20f0] sm:$0xff]
        %v1440 = vld [vmem:[%s291 + $0x20f8] sm:$0xff]
        %v1441 = vld [vmem:[%s291 + $0x2100] sm:$0xff]
        %v1442 = vld [vmem:[%s291 + $0x2108] sm:$0xff]
        %v1443 = vld [vmem:[%s291 + $0x2110] sm:$0xff]
        %v1444 = vld [vmem:[%s291 + $0x2118] sm:$0xff]
        %v1445 = vld [vmem:[%s291 + $0x2120] sm:$0xff]
        %v1446 = vld [vmem:[%s291 + $0x2128] sm:$0xff]
        %v1447 = vld [vmem:[%s291 + $0x2130] sm:$0xff]
        %v1448 = vld [vmem:[%s291 + $0x2138] sm:$0xff]
        %v1449 = vld [vmem:[%s291 + $0x2140] sm:$0xff]
        %v1450 = vld [vmem:[%s291 + $0x2148] sm:$0xff]
        %v1451 = vld [vmem:[%s291 + $0x2150] sm:$0xff]
        %v1452 = vld [vmem:[%s291 + $0x2158] sm:$0xff]
        %v1453 = vld [vmem:[%s291 + $0x2160] sm:$0xff]
        %v1454 = vld [vmem:[%s291 + $0x2168] sm:$0xff]
        %v1455 = vld [vmem:[%s291 + $0x2170] sm:$0xff]
        %v1456 = vld [vmem:[%s291 + $0x2178] sm:$0xff]
        %v1457 = vld [vmem:[%s291 + $0x2180] sm:$0xff]
        %v1458 = vld [vmem:[%s291 + $0x2188] sm:$0xff]
        %v1459 = vld [vmem:[%s291 + $0x2190] sm:$0xff]
        %v1460 = vld [vmem:[%s291 + $0x2198] sm:$0xff]
        %v1461 = vld [vmem:[%s291 + $0x21a0] sm:$0xff]
        %v1462 = vld [vmem:[%s291 + $0x21a8] sm:$0xff]
        %v1463 = vld [vmem:[%s300] sm:$0xff]
        %v1464 = vld [vmem:[%s300 + $0x8] sm:$0x7]
        %v1467 = vlaneseq
        %v1468 = vshrl.u32 %v1467, 7
        %v1469 = vsub.s32 0, %v1468
        %v1470 = vrot.slane %v1463, %v1469
        %v1471 = vlaneseq
        %v1472 = vshrl.u32 %v1471, 7
        %v1473 = vsub.s32 1, %v1472
        %v1474 = vrot.slane %v1463, %v1473
        %v1475 = vlaneseq
        %v1476 = vshrl.u32 %v1475, 7
        %v1477 = vsub.s32 2, %v1476
        %v1478 = vrot.slane %v1463, %v1477
        %v1479 = vlaneseq
        %v1480 = vshrl.u32 %v1479, 7
        %v1481 = vsub.s32 3, %v1480
        %v1482 = vrot.slane %v1463, %v1481
        %v1483 = vlaneseq
        %v1484 = vshrl.u32 %v1483, 7
        %v1485 = vsub.s32 4, %v1484
        %v1486 = vrot.slane %v1463, %v1485
        %v1487 = vlaneseq
        %v1488 = vshrl.u32 %v1487, 7
        %v1489 = vsub.s32 5, %v1488
        %v1490 = vrot.slane %v1463, %v1489
        %v1491 = vlaneseq
        %v1492 = vshrl.u32 %v1491, 7
        %v1493 = vsub.s32 6, %v1492
        %v1494 = vrot.slane %v1463, %v1493
        %v1495 = vlaneseq
        %v1496 = vshrl.u32 %v1495, 7
        %v1497 = vsub.s32 7, %v1496
        %v1498 = vrot.slane %v1463, %v1497
        %v1499 = vlaneseq
        %v1500 = vshrl.u32 %v1499, 7
        %v1501 = vsub.s32 0, %v1500
        %v1502 = vrot.slane %v1464, %v1501
        %v1503 = vlaneseq
        %v1504 = vshrl.u32 %v1503, 7
        %v1505 = vsub.s32 1, %v1504
        %v1506 = vrot.slane %v1464, %v1505
        %v1507 = vlaneseq
        %v1508 = vshrl.u32 %v1507, 7
        %v1509 = vsub.s32 2, %v1508
        %v1510 = vrot.slane %v1464, %v1509
        %vm1522 = vcmask 130048
        %v1524 = vsel %vm1522, %v384, 0
        %1526 = vmatprep.subr.mxu0 %v386
        %1527 = vmatpush1.msra.mxu0 %v385
        %1528 = vmatprep.subr.mxu0 %v397
        %1529 = vmatpush1.msra.mxu0 %v396
        %1530 = vmatprep.subr.mxu0 %v408
        %1531 = vmatpush1.msra.mxu0 %v407
        %1532 = vmatprep.subr.mxu0 %v419
        %1533 = vmatpush1.msra.mxu0 %v418
        %1534 = vmatprep.subr.mxu0 %v430
        %1535 = vmatpush1.msra.mxu0 %v429
        %1536 = vmatprep.subr.mxu0 %v441
        %1537 = vmatpush1.msra.mxu0 %v440
        %1538 = vmatprep.subr.mxu0 %v452
        %1539 = vmatpush1.msra.mxu0 %v451
        %1540 = vmatprep.subr.mxu0 %v463
        %1541 = vmatpush1.msra.mxu0 %v462
        %1542 = vmatprep.subr.mxu0 %v474
        %1543 = vmatpush1.msra.mxu0 %v473
        %1544 = vmatprep.subr.mxu0 %v485
        %1545 = vmatpush1.msra.mxu0 %v484
        %1546 = vmatprep.subr.mxu0 %v496
        %1547 = vmatpush1.msra.mxu0 %v495
        %1548 = vmatprep.subr.mxu0 %v507
        %1549 = vmatpush1.msra.mxu0 %v506
        %1550 = vmatprep.subr.mxu0 %v518
        %1551 = vmatpush1.msra.mxu0 %v517
        %1552 = vmatprep.subr.mxu0 %v529
        %1553 = vmatpush1.msra.mxu0 %v528
        %1554 = vmatprep.subr.mxu0 %v540
        %1555 = vmatpush1.msra.mxu0 %v539
        %1556 = vmatprep.subr.mxu0 %v551
        %1557 = vmatpush1.msra.mxu0 %v550
        %1558 = vmatprep.subr.mxu0 %v562
        %1559 = vmatpush1.msra.mxu0 %v561
        %1560 = vmatprep.subr.mxu0 %v573
        %1561 = vmatpush1.msra.mxu0 %v572
        %1562 = vmatprep.subr.mxu0 %v584
        %1563 = vmatpush1.msra.mxu0 %v583
        %1564 = vmatprep.subr.mxu0 %v595
        %1565 = vmatpush1.msra.mxu0 %v594
        %1566 = vmatprep.subr.mxu0 %v606
        %1567 = vmatpush1.msra.mxu0 %v605
        %1568 = vmatprep.subr.mxu0 %v617
        %1569 = vmatpush1.msra.mxu0 %v616
        %1570 = vmatprep.subr.mxu0 %v628
        %1571 = vmatpush1.msra.mxu0 %v627
        %1572 = vmatprep.subr.mxu0 %v639
        %1573 = vmatpush1.msra.mxu0 %v638
        %1574 = vmatprep.subr.mxu0 %v650
        %1575 = vmatpush1.msra.mxu0 %v649
        %1576 = vmatprep.subr.mxu0 %v661
        %1577 = vmatpush1.msra.mxu0 %v660
        %1578 = vmatprep.subr.mxu0 %v672
        %1579 = vmatpush1.msra.mxu0 %v671
        %1580 = vmatprep.subr.mxu0 %v683
        %1581 = vmatpush1.msra.mxu0 %v682
        %1582 = vmatprep.subr.mxu0 %v694
        %1583 = vmatpush1.msra.mxu0 %v693
        %1584 = vmatprep.subr.mxu0 %v705
        %1585 = vmatpush1.msra.mxu0 %v704
        %1586 = vmatprep.subr.mxu0 %v716
        %1587 = vmatpush1.msra.mxu0 %v715
        %1588 = vmatprep.subr.mxu0 %v727
        %1589 = vmatpush1.msra.mxu0 %v726
        %1590 = vmatprep.mubr.f32.mxu0 %v379
        %1591 = vmatmul.mubr.f32.gmra.mrb[0].mxu0 %v378
        %v1592 = vpop.f32.mrb[0].mxu0
        %v1593 = vadd.f32 %v1470, %v1592
        %v1594 = vpop.f32.mrb[0].mxu0
        %v1595 = vadd.f32 %v1474, %v1594
        %1596 = vdwg.mxu0
        %1597 = vmatprep.subr.mxu0 %v738
        %1598 = vmatpush1.msra.mxu0 %v737
        %1599 = vmatprep.subr.mxu0 %v749
        %1600 = vmatpush1.msra.mxu0 %v748
        %1601 = vmatprep.subr.mxu0 %v760
        %1602 = vmatpush1.msra.mxu0 %v759
        %1603 = vmatprep.subr.mxu0 %v771
        %1604 = vmatpush1.msra.mxu0 %v770
        %1605 = vmatprep.subr.mxu0 %v782
        %1606 = vmatpush1.msra.mxu0 %v781
        %1607 = vmatprep.subr.mxu0 %v793
        %1608 = vmatpush1.msra.mxu0 %v792
        %1609 = vmatprep.subr.mxu0 %v804
        %1610 = vmatpush1.msra.mxu0 %v803
        %1611 = vmatprep.subr.mxu0 %v815
        %1612 = vmatpush1.msra.mxu0 %v814
        %1613 = vmatprep.subr.mxu0 %v826
        %1614 = vmatpush1.msra.mxu0 %v825
        %1615 = vmatprep.subr.mxu0 %v837
        %1616 = vmatpush1.msra.mxu0 %v836
        %1617 = vmatprep.subr.mxu0 %v848
        %1618 = vmatpush1.msra.mxu0 %v847
        %1619 = vmatprep.subr.mxu0 %v859
        %1620 = vmatpush1.msra.mxu0 %v858
        %1621 = vmatprep.subr.mxu0 %v870
        %1622 = vmatpush1.msra.mxu0 %v869
        %1623 = vmatprep.subr.mxu0 %v881
        %1624 = vmatpush1.msra.mxu0 %v880
        %1625 = vmatprep.subr.mxu0 %v892
        %1626 = vmatpush1.msra.mxu0 %v891
        %1627 = vmatprep.subr.mxu0 %v903
        %1628 = vmatpush1.msra.mxu0 %v902
        %1629 = vmatprep.subr.mxu0 %v914
        %1630 = vmatpush1.msra.mxu0 %v913
        %1631 = vmatprep.subr.mxu0 %v925
        %1632 = vmatpush1.msra.mxu0 %v924
        %1633 = vmatprep.subr.mxu0 %v936
        %1634 = vmatpush1.msra.mxu0 %v935
        %1635 = vmatprep.subr.mxu0 %v947
        %1636 = vmatpush1.msra.mxu0 %v946
        %1637 = vmatprep.subr.mxu0 %v958
        %1638 = vmatpush1.msra.mxu0 %v957
        %1639 = vmatprep.subr.mxu0 %v969
        %1640 = vmatpush1.msra.mxu0 %v968
        %1641 = vmatprep.subr.mxu0 %v980
        %1642 = vmatpush1.msra.mxu0 %v979
        %1643 = vmatprep.subr.mxu0 %v991
        %1644 = vmatpush1.msra.mxu0 %v990
        %1645 = vmatprep.subr.mxu0 %v1002
        %1646 = vmatpush1.msra.mxu0 %v1001
        %1647 = vmatprep.subr.mxu0 %v1013
        %1648 = vmatpush1.msra.mxu0 %v1012
        %1649 = vmatprep.subr.mxu0 %v1024
        %1650 = vmatpush1.msra.mxu0 %v1023
        %1651 = vmatprep.subr.mxu0 %v1035
        %1652 = vmatpush1.msra.mxu0 %v1034
        %1653 = vmatprep.subr.mxu0 %v1046
        %1654 = vmatpush1.msra.mxu0 %v1045
        %1655 = vmatprep.subr.mxu0 %v1057
        %1656 = vmatpush1.msra.mxu0 %v1056
        %1657 = vmatprep.subr.mxu0 %v1068
        %1658 = vmatpush1.msra.mxu0 %v1067
        %1659 = vmatprep.subr.mxu0 %v1079
        %1660 = vmatpush1.msra.mxu0 %v1078
        %1661 = vmatprep.mubr.f32.mxu0 %v381
        %1662 = vmatmul.mubr.f32.gmra.mrb[0].mxu0 %v380
        %v1663 = vpop.f32.mrb[0].mxu0
        %v1664 = vadd.f32 %v1593, %v1663
        %v1665 = vpop.f32.mrb[0].mxu0
        %v1666 = vadd.f32 %v1595, %v1665
        %1667 = vdwg.mxu0
        %1668 = vmatprep.subr.mxu0 %v1090
        %1669 = vmatpush1.msra.mxu0 %v1089
        %1670 = vmatprep.subr.mxu0 %v1101
        %1671 = vmatpush1.msra.mxu0 %v1100
        %1672 = vmatprep.subr.mxu0 %v1112
        %1673 = vmatpush1.msra.mxu0 %v1111
        %1674 = vmatprep.subr.mxu0 %v1123
        %1675 = vmatpush1.msra.mxu0 %v1122
        %1676 = vmatprep.subr.mxu0 %v1134
        %1677 = vmatpush1.msra.mxu0 %v1133
        %1678 = vmatprep.subr.mxu0 %v1145
        %1679 = vmatpush1.msra.mxu0 %v1144
        %1680 = vmatprep.subr.mxu0 %v1156
        %1681 = vmatpush1.msra.mxu0 %v1155
        %1682 = vmatprep.subr.mxu0 %v1167
        %1683 = vmatpush1.msra.mxu0 %v1166
        %1684 = vmatprep.subr.mxu0 %v1178
        %1685 = vmatpush1.msra.mxu0 %v1177
        %1686 = vmatprep.subr.mxu0 %v1189
        %1687 = vmatpush1.msra.mxu0 %v1188
        %1688 = vmatprep.subr.mxu0 %v1200
        %1689 = vmatpush1.msra.mxu0 %v1199
        %1690 = vmatprep.subr.mxu0 %v1211
        %1691 = vmatpush1.msra.mxu0 %v1210
        %1692 = vmatprep.subr.mxu0 %v1222
        %1693 = vmatpush1.msra.mxu0 %v1221
        %1694 = vmatprep.subr.mxu0 %v1233
        %1695 = vmatpush1.msra.mxu0 %v1232
        %1696 = vmatprep.subr.mxu0 %v1244
        %1697 = vmatpush1.msra.mxu0 %v1243
        %1698 = vmatprep.subr.mxu0 %v1255
        %1699 = vmatpush1.msra.mxu0 %v1254
        %1700 = vmatprep.subr.mxu0 %v1266
        %1701 = vmatpush1.msra.mxu0 %v1265
        %1702 = vmatprep.subr.mxu0 %v1277
        %1703 = vmatpush1.msra.mxu0 %v1276
        %1704 = vmatprep.subr.mxu0 %v1288
        %1705 = vmatpush1.msra.mxu0 %v1287
        %1706 = vmatprep.subr.mxu0 %v1299
        %1707 = vmatpush1.msra.mxu0 %v1298
        %1708 = vmatprep.subr.mxu0 %v1310
        %1709 = vmatpush1.msra.mxu0 %v1309
        %1710 = vmatprep.subr.mxu0 %v1321
        %1711 = vmatpush1.msra.mxu0 %v1320
        %1712 = vmatprep.subr.mxu0 %v1332
        %1713 = vmatpush1.msra.mxu0 %v1331
        %1714 = vmatprep.subr.mxu0 %v1343
        %1715 = vmatpush1.msra.mxu0 %v1342
        %1716 = vmatprep.subr.mxu0 %v1354
        %1717 = vmatpush1.msra.mxu0 %v1353
        %1718 = vmatprep.subr.mxu0 %v1365
        %1719 = vmatpush1.msra.mxu0 %v1364
        %1720 = vmatprep.subr.mxu0 %v1376
        %1721 = vmatpush1.msra.mxu0 %v1375
        %1722 = vmatprep.subr.mxu0 %v1387
        %1723 = vmatpush1.msra.mxu0 %v1386
        %1724 = vmatprep.subr.mxu0 %v1398
        %1725 = vmatpush1.msra.mxu0 %v1397
        %1726 = vmatprep.subr.mxu0 %v1409
        %1727 = vmatpush1.msra.mxu0 %v1408
        %1728 = vmatprep.subr.mxu0 %v1420
        %1729 = vmatpush1.msra.mxu0 %v1419
        %1730 = vmatprep.subr.mxu0 %v1431
        %1731 = vmatpush1.msra.mxu0 %v1430
        %1732 = vmatprep.mubr.f32.mxu0 %v383
        %1733 = vmatmul.mubr.f32.gmra.mrb[0].mxu0 %v382
        %v1734 = vpop.f32.mrb[0].mxu0
        %v1735 = vadd.f32 %v1664, %v1734
        %v1736 = vpop.f32.mrb[0].mxu0
        %v1737 = vadd.f32 %v1666, %v1736
        %1738 = vdwg.mxu0
        %1739 = vmatprep.subr.mxu0 %v1442
        %1740 = vmatpush1.msra.mxu0 %v1441
        %1741 = vmatprep.subr.mxu0 %v1453
        %1742 = vmatpush1.msra.mxu0 %v1452
        %1743 = vmatprep.subr.mxu0 0.0
        %1744 = vmatpush1.msra.mxu0 0.0
        %1745 = vmatprep.subr.mxu0 0.0
        %1746 = vmatpush1.msra.mxu0 0.0
        %1747 = vmatprep.subr.mxu0 0.0
        %1748 = vmatpush1.msra.mxu0 0.0
        %1749 = vmatprep.subr.mxu0 0.0
        %1750 = vmatpush1.msra.mxu0 0.0
        %1751 = vmatprep.subr.mxu0 0.0
        %1752 = vmatpush1.msra.mxu0 0.0
        %1753 = vmatprep.subr.mxu0 0.0
        %1754 = vmatpush1.msra.mxu0 0.0
        %1755 = vmatprep.subr.mxu0 0.0
        %1756 = vmatpush1.msra.mxu0 0.0
        %1757 = vmatprep.subr.mxu0 0.0
        %1758 = vmatpush1.msra.mxu0 0.0
        %1759 = vmatprep.subr.mxu0 0.0
        %1760 = vmatpush1.msra.mxu0 0.0
        %1761 = vmatprep.subr.mxu0 0.0
        %1762 = vmatpush1.msra.mxu0 0.0
        %1763 = vmatprep.subr.mxu0 0.0
        %1764 = vmatpush1.msra.mxu0 0.0
        %1765 = vmatprep.subr.mxu0 0.0
        %1766 = vmatpush1.msra.mxu0 0.0
        %1767 = vmatprep.subr.mxu0 0.0
        %1768 = vmatpush1.msra.mxu0 0.0
        %1769 = vmatprep.subr.mxu0 0.0
        %1770 = vmatpush1.msra.mxu0 0.0
        %1771 = vmatprep.subr.mxu0 0.0
        %1772 = vmatpush1.msra.mxu0 0.0
        %1773 = vmatprep.subr.mxu0 0.0
        %1774 = vmatpush1.msra.mxu0 0.0
        %1775 = vmatprep.subr.mxu0 0.0
        %1776 = vmatpush1.msra.mxu0 0.0
        %1777 = vmatprep.subr.mxu0 0.0
        %1778 = vmatpush1.msra.mxu0 0.0
        %1779 = vmatprep.subr.mxu0 0.0
        %1780 = vmatpush1.msra.mxu0 0.0
        %1781 = vmatprep.subr.mxu0 0.0
        %1782 = vmatpush1.msra.mxu0 0.0
        %1783 = vmatprep.subr.mxu0 0.0
        %1784 = vmatpush1.msra.mxu0 0.0
        %1785 = vmatprep.subr.mxu0 0.0
        %1786 = vmatpush1.msra.mxu0 0.0
        %1787 = vmatprep.subr.mxu0 0.0
        %1788 = vmatpush1.msra.mxu0 0.0
        %1789 = vmatprep.subr.mxu0 0.0
        %1790 = vmatpush1.msra.mxu0 0.0
        %1791 = vmatprep.subr.mxu0 0.0
        %1792 = vmatpush1.msra.mxu0 0.0
        %1793 = vmatprep.subr.mxu0 0.0
        %1794 = vmatpush1.msra.mxu0 0.0
        %1795 = vmatprep.subr.mxu0 0.0
        %1796 = vmatpush1.msra.mxu0 0.0
        %1797 = vmatprep.subr.mxu0 0.0
        %1798 = vmatpush1.msra.mxu0 0.0
        %1799 = vmatprep.subr.mxu0 0.0
        %1800 = vmatpush1.msra.mxu0 0.0
        %1801 = vmatprep.subr.mxu0 0.0
        %1802 = vmatpush1.msra.mxu0 0.0
        %1803 = vmatprep.mubr.f32.mxu0 0.0
        %1804 = vmatmul.mubr.f32.gmra.mrb[0].mxu0 %v1524
        %v1805 = vpop.f32.mrb[0].mxu0
        %v1806 = vadd.f32 %v1735, %v1805
        %v1807 = vpop.f32.mrb[0].mxu0
        %v1808 = vadd.f32 %v1737, %v1807
        %1809 = vdwg.mxu0
        %1810 = vmatprep.subr.mxu0 %v388
        %1811 = vmatpush1.msra.mxu0 %v387
        %1812 = vmatprep.subr.mxu0 %v399
        %1813 = vmatpush1.msra.mxu0 %v398
        %1814 = vmatprep.subr.mxu0 %v410
        %1815 = vmatpush1.msra.mxu0 %v409
        %1816 = vmatprep.subr.mxu0 %v421
        %1817 = vmatpush1.msra.mxu0 %v420
        %1818 = vmatprep.subr.mxu0 %v432
        %1819 = vmatpush1.msra.mxu0 %v431
        %1820 = vmatprep.subr.mxu0 %v443
        %1821 = vmatpush1.msra.mxu0 %v442
        %1822 = vmatprep.subr.mxu0 %v454
        %1823 = vmatpush1.msra.mxu0 %v453
        %1824 = vmatprep.subr.mxu0 %v465
        %1825 = vmatpush1.msra.mxu0 %v464
        %1826 = vmatprep.subr.mxu0 %v476
        %1827 = vmatpush1.msra.mxu0 %v475
        %1828 = vmatprep.subr.mxu0 %v487
        %1829 = vmatpush1.msra.mxu0 %v486
        %1830 = vmatprep.subr.mxu0 %v498
        %1831 = vmatpush1.msra.mxu0 %v497
        %1832 = vmatprep.subr.mxu0 %v509
        %1833 = vmatpush1.msra.mxu0 %v508
        %1834 = vmatprep.subr.mxu0 %v520
        %1835 = vmatpush1.msra.mxu0 %v519
        %1836 = vmatprep.subr.mxu0 %v531
        %1837 = vmatpush1.msra.mxu0 %v530
        %1838 = vmatprep.subr.mxu0 %v542
        %1839 = vmatpush1.msra.mxu0 %v541
        %1840 = vmatprep.subr.mxu0 %v553
        %1841 = vmatpush1.msra.mxu0 %v552
        %1842 = vmatprep.subr.mxu0 %v564
        %1843 = vmatpush1.msra.mxu0 %v563
        %1844 = vmatprep.subr.mxu0 %v575
        %1845 = vmatpush1.msra.mxu0 %v574
        %1846 = vmatprep.subr.mxu0 %v586
        %1847 = vmatpush1.msra.mxu0 %v585
        %1848 = vmatprep.subr.mxu0 %v597
        %1849 = vmatpush1.msra.mxu0 %v596
        %1850 = vmatprep.subr.mxu0 %v608
        %1851 = vmatpush1.msra.mxu0 %v607
        %1852 = vmatprep.subr.mxu0 %v619
        %1853 = vmatpush1.msra.mxu0 %v618
        %1854 = vmatprep.subr.mxu0 %v630
        %1855 = vmatpush1.msra.mxu0 %v629
        %1856 = vmatprep.subr.mxu0 %v641
        %1857 = vmatpush1.msra.mxu0 %v640
        %1858 = vmatprep.subr.mxu0 %v652
        %1859 = vmatpush1.msra.mxu0 %v651
        %1860 = vmatprep.subr.mxu0 %v663
        %1861 = vmatpush1.msra.mxu0 %v662
        %1862 = vmatprep.subr.mxu0 %v674
        %1863 = vmatpush1.msra.mxu0 %v673
        %1864 = vmatprep.subr.mxu0 %v685
        %1865 = vmatpush1.msra.mxu0 %v684
        %1866 = vmatprep.subr.mxu0 %v696
        %1867 = vmatpush1.msra.mxu0 %v695
        %1868 = vmatprep.subr.mxu0 %v707
        %1869 = vmatpush1.msra.mxu0 %v706
        %1870 = vmatprep.subr.mxu0 %v718
        %1871 = vmatpush1.msra.mxu0 %v717
        %1872 = vmatprep.subr.mxu0 %v729
        %1873 = vmatpush1.msra.mxu0 %v728
        %1874 = vmatprep.mubr.f32.mxu0 %v379
        %1875 = vmatmul.mubr.f32.gmra.mrb[0].mxu0 %v378
        %v1876 = vpop.f32.mrb[0].mxu0
        %v1877 = vadd.f32 %v1478, %v1876
        %v1878 = vpop.f32.mrb[0].mxu0
        %v1879 = vadd.f32 %v1482, %v1878
        %1880 = vdwg.mxu0
        %1881 = vmatprep.subr.mxu0 %v740
        %1882 = vmatpush1.msra.mxu0 %v739
        %1883 = vmatprep.subr.mxu0 %v751
        %1884 = vmatpush1.msra.mxu0 %v750
        %1885 = vmatprep.subr.mxu0 %v762
        %1886 = vmatpush1.msra.mxu0 %v761
        %1887 = vmatprep.subr.mxu0 %v773
        %1888 = vmatpush1.msra.mxu0 %v772
        %1889 = vmatprep.subr.mxu0 %v784
        %1890 = vmatpush1.msra.mxu0 %v783
        %1891 = vmatprep.subr.mxu0 %v795
        %1892 = vmatpush1.msra.mxu0 %v794
        %1893 = vmatprep.subr.mxu0 %v806
        %1894 = vmatpush1.msra.mxu0 %v805
        %1895 = vmatprep.subr.mxu0 %v817
        %1896 = vmatpush1.msra.mxu0 %v816
        %1897 = vmatprep.subr.mxu0 %v828
        %1898 = vmatpush1.msra.mxu0 %v827
        %1899 = vmatprep.subr.mxu0 %v839
        %1900 = vmatpush1.msra.mxu0 %v838
        %1901 = vmatprep.subr.mxu0 %v850
        %1902 = vmatpush1.msra.mxu0 %v849
        %1903 = vmatprep.subr.mxu0 %v861
        %1904 = vmatpush1.msra.mxu0 %v860
        %1905 = vmatprep.subr.mxu0 %v872
        %1906 = vmatpush1.msra.mxu0 %v871
        %1907 = vmatprep.subr.mxu0 %v883
        %1908 = vmatpush1.msra.mxu0 %v882
        %1909 = vmatprep.subr.mxu0 %v894
        %1910 = vmatpush1.msra.mxu0 %v893
        %1911 = vmatprep.subr.mxu0 %v905
        %1912 = vmatpush1.msra.mxu0 %v904
        %1913 = vmatprep.subr.mxu0 %v916
        %1914 = vmatpush1.msra.mxu0 %v915
        %1915 = vmatprep.subr.mxu0 %v927
        %1916 = vmatpush1.msra.mxu0 %v926
        %1917 = vmatprep.subr.mxu0 %v938
        %1918 = vmatpush1.msra.mxu0 %v937
        %1919 = vmatprep.subr.mxu0 %v949
        %1920 = vmatpush1.msra.mxu0 %v948
        %1921 = vmatprep.subr.mxu0 %v960
        %1922 = vmatpush1.msra.mxu0 %v959
        %1923 = vmatprep.subr.mxu0 %v971
        %1924 = vmatpush1.msra.mxu0 %v970
        %1925 = vmatprep.subr.mxu0 %v982
        %1926 = vmatpush1.msra.mxu0 %v981
        %1927 = vmatprep.subr.mxu0 %v993
        %1928 = vmatpush1.msra.mxu0 %v992
        %1929 = vmatprep.subr.mxu0 %v1004
        %1930 = vmatpush1.msra.mxu0 %v1003
        %1931 = vmatprep.subr.mxu0 %v1015
        %1932 = vmatpush1.msra.mxu0 %v1014
        %1933 = vmatprep.subr.mxu0 %v1026
        %1934 = vmatpush1.msra.mxu0 %v1025
        %1935 = vmatprep.subr.mxu0 %v1037
        %1936 = vmatpush1.msra.mxu0 %v1036
        %1937 = vmatprep.subr.mxu0 %v1048
        %1938 = vmatpush1.msra.mxu0 %v1047
        %1939 = vmatprep.subr.mxu0 %v1059
        %1940 = vmatpush1.msra.mxu0 %v1058
        %1941 = vmatprep.subr.mxu0 %v1070
        %1942 = vmatpush1.msra.mxu0 %v1069
        %1943 = vmatprep.subr.mxu0 %v1081
        %1944 = vmatpush1.msra.mxu0 %v1080
        %1945 = vmatprep.mubr.f32.mxu0 %v381
        %1946 = vmatmul.mubr.f32.gmra.mrb[0].mxu0 %v380
        %v1947 = vpop.f32.mrb[0].mxu0
        %v1948 = vadd.f32 %v1877, %v1947
        %v1949 = vpop.f32.mrb[0].mxu0
        %v1950 = vadd.f32 %v1879, %v1949
        %1951 = vdwg.mxu0
        %1952 = vmatprep.subr.mxu0 %v1092
        %1953 = vmatpush1.msra.mxu0 %v1091
        %1954 = vmatprep.subr.mxu0 %v1103
        %1955 = vmatpush1.msra.mxu0 %v1102
        %1956 = vmatprep.subr.mxu0 %v1114
        %1957 = vmatpush1.msra.mxu0 %v1113
        %1958 = vmatprep.subr.mxu0 %v1125
        %1959 = vmatpush1.msra.mxu0 %v1124
        %1960 = vmatprep.subr.mxu0 %v1136
        %1961 = vmatpush1.msra.mxu0 %v1135
        %1962 = vmatprep.subr.mxu0 %v1147
        %1963 = vmatpush1.msra.mxu0 %v1146
        %1964 = vmatprep.subr.mxu0 %v1158
        %1965 = vmatpush1.msra.mxu0 %v1157
        %1966 = vmatprep.subr.mxu0 %v1169
        %1967 = vmatpush1.msra.mxu0 %v1168
        %1968 = vmatprep.subr.mxu0 %v1180
        %1969 = vmatpush1.msra.mxu0 %v1179
        %1970 = vmatprep.subr.mxu0 %v1191
        %1971 = vmatpush1.msra.mxu0 %v1190
        %1972 = vmatprep.subr.mxu0 %v1202
        %1973 = vmatpush1.msra.mxu0 %v1201
        %1974 = vmatprep.subr.mxu0 %v1213
        %1975 = vmatpush1.msra.mxu0 %v1212
        %1976 = vmatprep.subr.mxu0 %v1224
        %1977 = vmatpush1.msra.mxu0 %v1223
        %1978 = vmatprep.subr.mxu0 %v1235
        %1979 = vmatpush1.msra.mxu0 %v1234
        %1980 = vmatprep.subr.mxu0 %v1246
        %1981 = vmatpush1.msra.mxu0 %v1245
        %1982 = vmatprep.subr.mxu0 %v1257
        %1983 = vmatpush1.msra.mxu0 %v1256
        %1984 = vmatprep.subr.mxu0 %v1268
        %1985 = vmatpush1.msra.mxu0 %v1267
        %1986 = vmatprep.subr.mxu0 %v1279
        %1987 = vmatpush1.msra.mxu0 %v1278
        %1988 = vmatprep.subr.mxu0 %v1290
        %1989 = vmatpush1.msra.mxu0 %v1289
        %1990 = vmatprep.subr.mxu0 %v1301
        %1991 = vmatpush1.msra.mxu0 %v1300
        %1992 = vmatprep.subr.mxu0 %v1312
        %1993 = vmatpush1.msra.mxu0 %v1311
        %1994 = vmatprep.subr.mxu0 %v1323
        %1995 = vmatpush1.msra.mxu0 %v1322
        %1996 = vmatprep.subr.mxu0 %v1334
        %1997 = vmatpush1.msra.mxu0 %v1333
        %1998 = vmatprep.subr.mxu0 %v1345
        %1999 = vmatpush1.msra.mxu0 %v1344
        %2000 = vmatprep.subr.mxu0 %v1356
        %2001 = vmatpush1.msra.mxu0 %v1355
        %2002 = vmatprep.subr.mxu0 %v1367
        %2003 = vmatpush1.msra.mxu0 %v1366
        %2004 = vmatprep.subr.mxu0 %v1378
        %2005 = vmatpush1.msra.mxu0 %v1377
        %2006 = vmatprep.subr.mxu0 %v1389
        %2007 = vmatpush1.msra.mxu0 %v1388
        %2008 = vmatprep.subr.mxu0 %v1400
        %2009 = vmatpush1.msra.mxu0 %v1399
        %2010 = vmatprep.subr.mxu0 %v1411
        %2011 = vmatpush1.msra.mxu0 %v1410
        %2012 = vmatprep.subr.mxu0 %v1422
        %2013 = vmatpush1.msra.mxu0 %v1421
        %2014 = vmatprep.subr.mxu0 %v1433
        %2015 = vmatpush1.msra.mxu0 %v1432
        %2016 = vmatprep.mubr.f32.mxu0 %v383
        %2017 = vmatmul.mubr.f32.gmra.mrb[0].mxu0 %v382
        %v2018 = vpop.f32.mrb[0].mxu0
        %v2019 = vadd.f32 %v1948, %v2018
        %v2020 = vpop.f32.mrb[0].mxu0
        %v2021 = vadd.f32 %v1950, %v2020
        %2022 = vdwg.mxu0
        %2023 = vmatprep.subr.mxu0 %v1444
        %2024 = vmatpush1.msra.mxu0 %v1443
        %2025 = vmatprep.subr.mxu0 %v1455
        %2026 = vmatpush1.msra.mxu0 %v1454
        %2027 = vmatprep.subr.mxu0 0.0
        %2028 = vmatpush1.msra.mxu0 0.0
        %2029 = vmatprep.subr.mxu0 0.0
        %2030 = vmatpush1.msra.mxu0 0.0
        %2031 = vmatprep.subr.mxu0 0.0
        %2032 = vmatpush1.msra.mxu0 0.0
        %2033 = vmatprep.subr.mxu0 0.0
        %2034 = vmatpush1.msra.mxu0 0.0
        %2035 = vmatprep.subr.mxu0 0.0
        %2036 = vmatpush1.msra.mxu0 0.0
        %2037 = vmatprep.subr.mxu0 0.0
        %2038 = vmatpush1.msra.mxu0 0.0
        %2039 = vmatprep.subr.mxu0 0.0
        %2040 = vmatpush1.msra.mxu0 0.0
        %2041 = vmatprep.subr.mxu0 0.0
        %2042 = vmatpush1.msra.mxu0 0.0
        %2043 = vmatprep.subr.mxu0 0.0
        %2044 = vmatpush1.msra.mxu0 0.0
        %2045 = vmatprep.subr.mxu0 0.0
        %2046 = vmatpush1.msra.mxu0 0.0
        %2047 = vmatprep.subr.mxu0 0.0
        %2048 = vmatpush1.msra.mxu0 0.0
        %2049 = vmatprep.subr.mxu0 0.0
        %2050 = vmatpush1.msra.mxu0 0.0
        %2051 = vmatprep.subr.mxu0 0.0
        %2052 = vmatpush1.msra.mxu0 0.0
        %2053 = vmatprep.subr.mxu0 0.0
        %2054 = vmatpush1.msra.mxu0 0.0
        %2055 = vmatprep.subr.mxu0 0.0
        %2056 = vmatpush1.msra.mxu0 0.0
        %2057 = vmatprep.subr.mxu0 0.0
        %2058 = vmatpush1.msra.mxu0 0.0
        %2059 = vmatprep.subr.mxu0 0.0
        %2060 = vmatpush1.msra.mxu0 0.0
        %2061 = vmatprep.subr.mxu0 0.0
        %2062 = vmatpush1.msra.mxu0 0.0
        %2063 = vmatprep.subr.mxu0 0.0
        %2064 = vmatpush1.msra.mxu0 0.0
        %2065 = vmatprep.subr.mxu0 0.0
        %2066 = vmatpush1.msra.mxu0 0.0
        %2067 = vmatprep.subr.mxu0 0.0
        %2068 = vmatpush1.msra.mxu0 0.0
        %2069 = vmatprep.subr.mxu0 0.0
        %2070 = vmatpush1.msra.mxu0 0.0
        %2071 = vmatprep.subr.mxu0 0.0
        %2072 = vmatpush1.msra.mxu0 0.0
        %2073 = vmatprep.subr.mxu0 0.0
        %2074 = vmatpush1.msra.mxu0 0.0
        %2075 = vmatprep.subr.mxu0 0.0
        %2076 = vmatpush1.msra.mxu0 0.0
        %2077 = vmatprep.subr.mxu0 0.0
        %2078 = vmatpush1.msra.mxu0 0.0
        %2079 = vmatprep.subr.mxu0 0.0
        %2080 = vmatpush1.msra.mxu0 0.0
        %2081 = vmatprep.subr.mxu0 0.0
        %2082 = vmatpush1.msra.mxu0 0.0
        %2083 = vmatprep.subr.mxu0 0.0
        %2084 = vmatpush1.msra.mxu0 0.0
        %2085 = vmatprep.subr.mxu0 0.0
        %2086 = vmatpush1.msra.mxu0 0.0
        %2087 = vmatprep.mubr.f32.mxu0 0.0
        %2088 = vmatmul.mubr.f32.gmra.mrb[0].mxu0 %v1524
        %v2089 = vpop.f32.mrb[0].mxu0
        %v2090 = vadd.f32 %v2019, %v2089
        %v2091 = vpop.f32.mrb[0].mxu0
        %v2092 = vadd.f32 %v2021, %v2091
        %2093 = vdwg.mxu0
        %2094 = vmatprep.subr.mxu0 %v390
        %2095 = vmatpush1.msra.mxu0 %v389
        %2096 = vmatprep.subr.mxu0 %v401
        %2097 = vmatpush1.msra.mxu0 %v400
        %2098 = vmatprep.subr.mxu0 %v412
        %2099 = vmatpush1.msra.mxu0 %v411
        %2100 = vmatprep.subr.mxu0 %v423
        %2101 = vmatpush1.msra.mxu0 %v422
        %2102 = vmatprep.subr.mxu0 %v434
        %2103 = vmatpush1.msra.mxu0 %v433
        %2104 = vmatprep.subr.mxu0 %v445
        %2105 = vmatpush1.msra.mxu0 %v444
        %2106 = vmatprep.subr.mxu0 %v456
        %2107 = vmatpush1.msra.mxu0 %v455
        %2108 = vmatprep.subr.mxu0 %v467
        %2109 = vmatpush1.msra.mxu0 %v466
        %2110 = vmatprep.subr.mxu0 %v478
        %2111 = vmatpush1.msra.mxu0 %v477
        %2112 = vmatprep.subr.mxu0 %v489
        %2113 = vmatpush1.msra.mxu0 %v488
        %2114 = vmatprep.subr.mxu0 %v500
        %2115 = vmatpush1.msra.mxu0 %v499
        %2116 = vmatprep.subr.mxu0 %v511
        %2117 = vmatpush1.msra.mxu0 %v510
        %2118 = vmatprep.subr.mxu0 %v522
        %2119 = vmatpush1.msra.mxu0 %v521
        %2120 = vmatprep.subr.mxu0 %v533
        %2121 = vmatpush1.msra.mxu0 %v532
        %2122 = vmatprep.subr.mxu0 %v544
        %2123 = vmatpush1.msra.mxu0 %v543
        %2124 = vmatprep.subr.mxu0 %v555
        %2125 = vmatpush1.msra.mxu0 %v554
        %2126 = vmatprep.subr.mxu0 %v566
        %2127 = vmatpush1.msra.mxu0 %v565
        %2128 = vmatprep.subr.mxu0 %v577
        %2129 = vmatpush1.msra.mxu0 %v576
        %2130 = vmatprep.subr.mxu0 %v588
        %2131 = vmatpush1.msra.mxu0 %v587
        %2132 = vmatprep.subr.mxu0 %v599
        %2133 = vmatpush1.msra.mxu0 %v598
        %2134 = vmatprep.subr.mxu0 %v610
        %2135 = vmatpush1.msra.mxu0 %v609
        %2136 = vmatprep.subr.mxu0 %v621
        %2137 = vmatpush1.msra.mxu0 %v620
        %2138 = vmatprep.subr.mxu0 %v632
        %2139 = vmatpush1.msra.mxu0 %v631
        %2140 = vmatprep.subr.mxu0 %v643
        %2141 = vmatpush1.msra.mxu0 %v642
        %2142 = vmatprep.subr.mxu0 %v654
        %2143 = vmatpush1.msra.mxu0 %v653
        %2144 = vmatprep.subr.mxu0 %v665
        %2145 = vmatpush1.msra.mxu0 %v664
        %2146 = vmatprep.subr.mxu0 %v676
        %2147 = vmatpush1.msra.mxu0 %v675
        %2148 = vmatprep.subr.mxu0 %v687
        %2149 = vmatpush1.msra.mxu0 %v686
        %2150 = vmatprep.subr.mxu0 %v698
        %2151 = vmatpush1.msra.mxu0 %v697
        %2152 = vmatprep.subr.mxu0 %v709
        %2153 = vmatpush1.msra.mxu0 %v708
        %2154 = vmatprep.subr.mxu0 %v720
        %2155 = vmatpush1.msra.mxu0 %v719
        %2156 = vmatprep.subr.mxu0 %v731
        %2157 = vmatpush1.msra.mxu0 %v730
        %2158 = vmatprep.mubr.f32.mxu0 %v379
        %2159 = vmatmul.mubr.f32.gmra.mrb[0].mxu0 %v378
        %v2160 = vpop.f32.mrb[0].mxu0
        %v2161 = vadd.f32 %v1486, %v2160
        %v2162 = vpop.f32.mrb[0].mxu0
        %v2163 = vadd.f32 %v1490, %v2162
        %2164 = vdwg.mxu0
        %2165 = vmatprep.subr.mxu0 %v742
        %2166 = vmatpush1.msra.mxu0 %v741
        %2167 = vmatprep.subr.mxu0 %v753
        %2168 = vmatpush1.msra.mxu0 %v752
        %2169 = vmatprep.subr.mxu0 %v764
        %2170 = vmatpush1.msra.mxu0 %v763
        %2171 = vmatprep.subr.mxu0 %v775
        %2172 = vmatpush1.msra.mxu0 %v774
        %2173 = vmatprep.subr.mxu0 %v786
        %2174 = vmatpush1.msra.mxu0 %v785
        %2175 = vmatprep.subr.mxu0 %v797
        %2176 = vmatpush1.msra.mxu0 %v796
        %2177 = vmatprep.subr.mxu0 %v808
        %2178 = vmatpush1.msra.mxu0 %v807
        %2179 = vmatprep.subr.mxu0 %v819
        %2180 = vmatpush1.msra.mxu0 %v818
        %2181 = vmatprep.subr.mxu0 %v830
        %2182 = vmatpush1.msra.mxu0 %v829
        %2183 = vmatprep.subr.mxu0 %v841
        %2184 = vmatpush1.msra.mxu0 %v840
        %2185 = vmatprep.subr.mxu0 %v852
        %2186 = vmatpush1.msra.mxu0 %v851
        %2187 = vmatprep.subr.mxu0 %v863
        %2188 = vmatpush1.msra.mxu0 %v862
        %2189 = vmatprep.subr.mxu0 %v874
        %2190 = vmatpush1.msra.mxu0 %v873
        %2191 = vmatprep.subr.mxu0 %v885
        %2192 = vmatpush1.msra.mxu0 %v884
        %2193 = vmatprep.subr.mxu0 %v896
        %2194 = vmatpush1.msra.mxu0 %v895
        %2195 = vmatprep.subr.mxu0 %v907
        %2196 = vmatpush1.msra.mxu0 %v906
        %2197 = vmatprep.subr.mxu0 %v918
        %2198 = vmatpush1.msra.mxu0 %v917
        %2199 = vmatprep.subr.mxu0 %v929
        %2200 = vmatpush1.msra.mxu0 %v928
        %2201 = vmatprep.subr.mxu0 %v940
        %2202 = vmatpush1.msra.mxu0 %v939
        %2203 = vmatprep.subr.mxu0 %v951
        %2204 = vmatpush1.msra.mxu0 %v950
        %2205 = vmatprep.subr.mxu0 %v962
        %2206 = vmatpush1.msra.mxu0 %v961
        %2207 = vmatprep.subr.mxu0 %v973
        %2208 = vmatpush1.msra.mxu0 %v972
        %2209 = vmatprep.subr.mxu0 %v984
        %2210 = vmatpush1.msra.mxu0 %v983
        %2211 = vmatprep.subr.mxu0 %v995
        %2212 = vmatpush1.msra.mxu0 %v994
        %2213 = vmatprep.subr.mxu0 %v1006
        %2214 = vmatpush1.msra.mxu0 %v1005
        %2215 = vmatprep.subr.mxu0 %v1017
        %2216 = vmatpush1.msra.mxu0 %v1016
        %2217 = vmatprep.subr.mxu0 %v1028
        %2218 = vmatpush1.msra.mxu0 %v1027
        %2219 = vmatprep.subr.mxu0 %v1039
        %2220 = vmatpush1.msra.mxu0 %v1038
        %2221 = vmatprep.subr.mxu0 %v1050
        %2222 = vmatpush1.msra.mxu0 %v1049
        %2223 = vmatprep.subr.mxu0 %v1061
        %2224 = vmatpush1.msra.mxu0 %v1060
        %2225 = vmatprep.subr.mxu0 %v1072
        %2226 = vmatpush1.msra.mxu0 %v1071
        %2227 = vmatprep.subr.mxu0 %v1083
        %2228 = vmatpush1.msra.mxu0 %v1082
        %2229 = vmatprep.mubr.f32.mxu0 %v381
        %2230 = vmatmul.mubr.f32.gmra.mrb[0].mxu0 %v380
        %v2231 = vpop.f32.mrb[0].mxu0
        %v2232 = vadd.f32 %v2161, %v2231
        %v2233 = vpop.f32.mrb[0].mxu0
        %v2234 = vadd.f32 %v2163, %v2233
        %2235 = vdwg.mxu0
        %2236 = vmatprep.subr.mxu0 %v1094
        %2237 = vmatpush1.msra.mxu0 %v1093
        %2238 = vmatprep.subr.mxu0 %v1105
        %2239 = vmatpush1.msra.mxu0 %v1104
        %2240 = vmatprep.subr.mxu0 %v1116
        %2241 = vmatpush1.msra.mxu0 %v1115
        %2242 = vmatprep.subr.mxu0 %v1127
        %2243 = vmatpush1.msra.mxu0 %v1126
        %2244 = vmatprep.subr.mxu0 %v1138
        %2245 = vmatpush1.msra.mxu0 %v1137
        %2246 = vmatprep.subr.mxu0 %v1149
        %2247 = vmatpush1.msra.mxu0 %v1148
        %2248 = vmatprep.subr.mxu0 %v1160
        %2249 = vmatpush1.msra.mxu0 %v1159
        %2250 = vmatprep.subr.mxu0 %v1171
        %2251 = vmatpush1.msra.mxu0 %v1170
        %2252 = vmatprep.subr.mxu0 %v1182
        %2253 = vmatpush1.msra.mxu0 %v1181
        %2254 = vmatprep.subr.mxu0 %v1193
        %2255 = vmatpush1.msra.mxu0 %v1192
        %2256 = vmatprep.subr.mxu0 %v1204
        %2257 = vmatpush1.msra.mxu0 %v1203
        %2258 = vmatprep.subr.mxu0 %v1215
        %2259 = vmatpush1.msra.mxu0 %v1214
        %2260 = vmatprep.subr.mxu0 %v1226
        %2261 = vmatpush1.msra.mxu0 %v1225
        %2262 = vmatprep.subr.mxu0 %v1237
        %2263 = vmatpush1.msra.mxu0 %v1236
        %2264 = vmatprep.subr.mxu0 %v1248
        %2265 = vmatpush1.msra.mxu0 %v1247
        %2266 = vmatprep.subr.mxu0 %v1259
        %2267 = vmatpush1.msra.mxu0 %v1258
        %2268 = vmatprep.subr.mxu0 %v1270
        %2269 = vmatpush1.msra.mxu0 %v1269
        %2270 = vmatprep.subr.mxu0 %v1281
        %2271 = vmatpush1.msra.mxu0 %v1280
        %2272 = vmatprep.subr.mxu0 %v1292
        %2273 = vmatpush1.msra.mxu0 %v1291
        %2274 = vmatprep.subr.mxu0 %v1303
        %2275 = vmatpush1.msra.mxu0 %v1302
        %2276 = vmatprep.subr.mxu0 %v1314
        %2277 = vmatpush1.msra.mxu0 %v1313
        %2278 = vmatprep.subr.mxu0 %v1325
        %2279 = vmatpush1.msra.mxu0 %v1324
        %2280 = vmatprep.subr.mxu0 %v1336
        %2281 = vmatpush1.msra.mxu0 %v1335
        %2282 = vmatprep.subr.mxu0 %v1347
        %2283 = vmatpush1.msra.mxu0 %v1346
        %2284 = vmatprep.subr.mxu0 %v1358
        %2285 = vmatpush1.msra.mxu0 %v1357
        %2286 = vmatprep.subr.mxu0 %v1369
        %2287 = vmatpush1.msra.mxu0 %v1368
        %2288 = vmatprep.subr.mxu0 %v1380
        %2289 = vmatpush1.msra.mxu0 %v1379
        %2290 = vmatprep.subr.mxu0 %v1391
        %2291 = vmatpush1.msra.mxu0 %v1390
        %2292 = vmatprep.subr.mxu0 %v1402
        %2293 = vmatpush1.msra.mxu0 %v1401
        %2294 = vmatprep.subr.mxu0 %v1413
        %2295 = vmatpush1.msra.mxu0 %v1412
        %2296 = vmatprep.subr.mxu0 %v1424
        %2297 = vmatpush1.msra.mxu0 %v1423
        %2298 = vmatprep.subr.mxu0 %v1435
        %2299 = vmatpush1.msra.mxu0 %v1434
        %2300 = vmatprep.mubr.f32.mxu0 %v383
        %2301 = vmatmul.mubr.f32.gmra.mrb[0].mxu0 %v382
        %v2302 = vpop.f32.mrb[0].mxu0
        %v2303 = vadd.f32 %v2232, %v2302
        %v2304 = vpop.f32.mrb[0].mxu0
        %v2305 = vadd.f32 %v2234, %v2304
        %2306 = vdwg.mxu0
        %2307 = vmatprep.subr.mxu0 %v1446
        %2308 = vmatpush1.msra.mxu0 %v1445
        %2309 = vmatprep.subr.mxu0 %v1457
        %2310 = vmatpush1.msra.mxu0 %v1456
        %2311 = vmatprep.subr.mxu0 0.0
        %2312 = vmatpush1.msra.mxu0 0.0
        %2313 = vmatprep.subr.mxu0 0.0
        %2314 = vmatpush1.msra.mxu0 0.0
        %2315 = vmatprep.subr.mxu0 0.0
        %2316 = vmatpush1.msra.mxu0 0.0
        %2317 = vmatprep.subr.mxu0 0.0
        %2318 = vmatpush1.msra.mxu0 0.0
        %2319 = vmatprep.subr.mxu0 0.0
        %2320 = vmatpush1.msra.mxu0 0.0
        %2321 = vmatprep.subr.mxu0 0.0
        %2322 = vmatpush1.msra.mxu0 0.0
        %2323 = vmatprep.subr.mxu0 0.0
        %2324 = vmatpush1.msra.mxu0 0.0
        %2325 = vmatprep.subr.mxu0 0.0
        %2326 = vmatpush1.msra.mxu0 0.0
        %2327 = vmatprep.subr.mxu0 0.0
        %2328 = vmatpush1.msra.mxu0 0.0
        %2329 = vmatprep.subr.mxu0 0.0
        %2330 = vmatpush1.msra.mxu0 0.0
        %2331 = vmatprep.subr.mxu0 0.0
        %2332 = vmatpush1.msra.mxu0 0.0
        %2333 = vmatprep.subr.mxu0 0.0
        %2334 = vmatpush1.msra.mxu0 0.0
        %2335 = vmatprep.subr.mxu0 0.0
        %2336 = vmatpush1.msra.mxu0 0.0
        %2337 = vmatprep.subr.mxu0 0.0
        %2338 = vmatpush1.msra.mxu0 0.0
        %2339 = vmatprep.subr.mxu0 0.0
        %2340 = vmatpush1.msra.mxu0 0.0
        %2341 = vmatprep.subr.mxu0 0.0
        %2342 = vmatpush1.msra.mxu0 0.0
        %2343 = vmatprep.subr.mxu0 0.0
        %2344 = vmatpush1.msra.mxu0 0.0
        %2345 = vmatprep.subr.mxu0 0.0
        %2346 = vmatpush1.msra.mxu0 0.0
        %2347 = vmatprep.subr.mxu0 0.0
        %2348 = vmatpush1.msra.mxu0 0.0
        %2349 = vmatprep.subr.mxu0 0.0
        %2350 = vmatpush1.msra.mxu0 0.0
        %2351 = vmatprep.subr.mxu0 0.0
        %2352 = vmatpush1.msra.mxu0 0.0
        %2353 = vmatprep.subr.mxu0 0.0
        %2354 = vmatpush1.msra.mxu0 0.0
        %2355 = vmatprep.subr.mxu0 0.0
        %2356 = vmatpush1.msra.mxu0 0.0
        %2357 = vmatprep.subr.mxu0 0.0
        %2358 = vmatpush1.msra.mxu0 0.0
        %2359 = vmatprep.subr.mxu0 0.0
        %2360 = vmatpush1.msra.mxu0 0.0
        %2361 = vmatprep.subr.mxu0 0.0
        %2362 = vmatpush1.msra.mxu0 0.0
        %2363 = vmatprep.subr.mxu0 0.0
        %2364 = vmatpush1.msra.mxu0 0.0
        %2365 = vmatprep.subr.mxu0 0.0
        %2366 = vmatpush1.msra.mxu0 0.0
        %2367 = vmatprep.subr.mxu0 0.0
        %2368 = vmatpush1.msra.mxu0 0.0
        %2369 = vmatprep.subr.mxu0 0.0
        %2370 = vmatpush1.msra.mxu0 0.0
        %2371 = vmatprep.mubr.f32.mxu0 0.0
        %2372 = vmatmul.mubr.f32.gmra.mrb[0].mxu0 %v1524
        %v2373 = vpop.f32.mrb[0].mxu0
        %v2374 = vadd.f32 %v2303, %v2373
        %v2375 = vpop.f32.mrb[0].mxu0
        %v2376 = vadd.f32 %v2305, %v2375
        %2377 = vdwg.mxu0
        %2378 = vmatprep.subr.mxu0 %v392
        %2379 = vmatpush1.msra.mxu0 %v391
        %2380 = vmatprep.subr.mxu0 %v403
        %2381 = vmatpush1.msra.mxu0 %v402
        %2382 = vmatprep.subr.mxu0 %v414
        %2383 = vmatpush1.msra.mxu0 %v413
        %2384 = vmatprep.subr.mxu0 %v425
        %2385 = vmatpush1.msra.mxu0 %v424
        %2386 = vmatprep.subr.mxu0 %v436
        %2387 = vmatpush1.msra.mxu0 %v435
        %2388 = vmatprep.subr.mxu0 %v447
        %2389 = vmatpush1.msra.mxu0 %v446
        %2390 = vmatprep.subr.mxu0 %v458
        %2391 = vmatpush1.msra.mxu0 %v457
        %2392 = vmatprep.subr.mxu0 %v469
        %2393 = vmatpush1.msra.mxu0 %v468
        %2394 = vmatprep.subr.mxu0 %v480
        %2395 = vmatpush1.msra.mxu0 %v479
        %2396 = vmatprep.subr.mxu0 %v491
        %2397 = vmatpush1.msra.mxu0 %v490
        %2398 = vmatprep.subr.mxu0 %v502
        %2399 = vmatpush1.msra.mxu0 %v501
        %2400 = vmatprep.subr.mxu0 %v513
        %2401 = vmatpush1.msra.mxu0 %v512
        %2402 = vmatprep.subr.mxu0 %v524
        %2403 = vmatpush1.msra.mxu0 %v523
        %2404 = vmatprep.subr.mxu0 %v535
        %2405 = vmatpush1.msra.mxu0 %v534
        %2406 = vmatprep.subr.mxu0 %v546
        %2407 = vmatpush1.msra.mxu0 %v545
        %2408 = vmatprep.subr.mxu0 %v557
        %2409 = vmatpush1.msra.mxu0 %v556
        %2410 = vmatprep.subr.mxu0 %v568
        %2411 = vmatpush1.msra.mxu0 %v567
        %2412 = vmatprep.subr.mxu0 %v579
        %2413 = vmatpush1.msra.mxu0 %v578
        %2414 = vmatprep.subr.mxu0 %v590
        %2415 = vmatpush1.msra.mxu0 %v589
        %2416 = vmatprep.subr.mxu0 %v601
        %2417 = vmatpush1.msra.mxu0 %v600
        %2418 = vmatprep.subr.mxu0 %v612
        %2419 = vmatpush1.msra.mxu0 %v611
        %2420 = vmatprep.subr.mxu0 %v623
        %2421 = vmatpush1.msra.mxu0 %v622
        %2422 = vmatprep.subr.mxu0 %v634
        %2423 = vmatpush1.msra.mxu0 %v633
        %2424 = vmatprep.subr.mxu0 %v645
        %2425 = vmatpush1.msra.mxu0 %v644
        %2426 = vmatprep.subr.mxu0 %v656
        %2427 = vmatpush1.msra.mxu0 %v655
        %2428 = vmatprep.subr.mxu0 %v667
        %2429 = vmatpush1.msra.mxu0 %v666
        %2430 = vmatprep.subr.mxu0 %v678
        %2431 = vmatpush1.msra.mxu0 %v677
        %2432 = vmatprep.subr.mxu0 %v689
        %2433 = vmatpush1.msra.mxu0 %v688
        %2434 = vmatprep.subr.mxu0 %v700
        %2435 = vmatpush1.msra.mxu0 %v699
        %2436 = vmatprep.subr.mxu0 %v711
        %2437 = vmatpush1.msra.mxu0 %v710
        %2438 = vmatprep.subr.mxu0 %v722
        %2439 = vmatpush1.msra.mxu0 %v721
        %2440 = vmatprep.subr.mxu0 %v733
        %2441 = vmatpush1.msra.mxu0 %v732
        %2442 = vmatprep.mubr.f32.mxu0 %v379
        %2443 = vmatmul.mubr.f32.gmra.mrb[0].mxu0 %v378
        %v2444 = vpop.f32.mrb[0].mxu0
        %v2445 = vadd.f32 %v1494, %v2444
        %v2446 = vpop.f32.mrb[0].mxu0
        %v2447 = vadd.f32 %v1498, %v2446
        %2448 = vdwg.mxu0
        %2449 = vmatprep.subr.mxu0 %v744
        %2450 = vmatpush1.msra.mxu0 %v743
        %2451 = vmatprep.subr.mxu0 %v755
        %2452 = vmatpush1.msra.mxu0 %v754
        %2453 = vmatprep.subr.mxu0 %v766
        %2454 = vmatpush1.msra.mxu0 %v765
        %2455 = vmatprep.subr.mxu0 %v777
        %2456 = vmatpush1.msra.mxu0 %v776
        %2457 = vmatprep.subr.mxu0 %v788
        %2458 = vmatpush1.msra.mxu0 %v787
        %2459 = vmatprep.subr.mxu0 %v799
        %2460 = vmatpush1.msra.mxu0 %v798
        %2461 = vmatprep.subr.mxu0 %v810
        %2462 = vmatpush1.msra.mxu0 %v809
        %2463 = vmatprep.subr.mxu0 %v821
        %2464 = vmatpush1.msra.mxu0 %v820
        %2465 = vmatprep.subr.mxu0 %v832
        %2466 = vmatpush1.msra.mxu0 %v831
        %2467 = vmatprep.subr.mxu0 %v843
        %2468 = vmatpush1.msra.mxu0 %v842
        %2469 = vmatprep.subr.mxu0 %v854
        %2470 = vmatpush1.msra.mxu0 %v853
        %2471 = vmatprep.subr.mxu0 %v865
        %2472 = vmatpush1.msra.mxu0 %v864
        %2473 = vmatprep.subr.mxu0 %v876
        %2474 = vmatpush1.msra.mxu0 %v875
        %2475 = vmatprep.subr.mxu0 %v887
        %2476 = vmatpush1.msra.mxu0 %v886
        %2477 = vmatprep.subr.mxu0 %v898
        %2478 = vmatpush1.msra.mxu0 %v897
        %2479 = vmatprep.subr.mxu0 %v909
        %2480 = vmatpush1.msra.mxu0 %v908
        %2481 = vmatprep.subr.mxu0 %v920
        %2482 = vmatpush1.msra.mxu0 %v919
        %2483 = vmatprep.subr.mxu0 %v931
        %2484 = vmatpush1.msra.mxu0 %v930
        %2485 = vmatprep.subr.mxu0 %v942
        %2486 = vmatpush1.msra.mxu0 %v941
        %2487 = vmatprep.subr.mxu0 %v953
        %2488 = vmatpush1.msra.mxu0 %v952
        %2489 = vmatprep.subr.mxu0 %v964
        %2490 = vmatpush1.msra.mxu0 %v963
        %2491 = vmatprep.subr.mxu0 %v975
        %2492 = vmatpush1.msra.mxu0 %v974
        %2493 = vmatprep.subr.mxu0 %v986
        %2494 = vmatpush1.msra.mxu0 %v985
        %2495 = vmatprep.subr.mxu0 %v997
        %2496 = vmatpush1.msra.mxu0 %v996
        %2497 = vmatprep.subr.mxu0 %v1008
        %2498 = vmatpush1.msra.mxu0 %v1007
        %2499 = vmatprep.subr.mxu0 %v1019
        %2500 = vmatpush1.msra.mxu0 %v1018
        %2501 = vmatprep.subr.mxu0 %v1030
        %2502 = vmatpush1.msra.mxu0 %v1029
        %2503 = vmatprep.subr.mxu0 %v1041
        %2504 = vmatpush1.msra.mxu0 %v1040
        %2505 = vmatprep.subr.mxu0 %v1052
        %2506 = vmatpush1.msra.mxu0 %v1051
        %2507 = vmatprep.subr.mxu0 %v1063
        %2508 = vmatpush1.msra.mxu0 %v1062
        %2509 = vmatprep.subr.mxu0 %v1074
        %2510 = vmatpush1.msra.mxu0 %v1073
        %2511 = vmatprep.subr.mxu0 %v1085
        %2512 = vmatpush1.msra.mxu0 %v1084
        %2513 = vmatprep.mubr.f32.mxu0 %v381
        %2514 = vmatmul.mubr.f32.gmra.mrb[0].mxu0 %v380
        %v2515 = vpop.f32.mrb[0].mxu0
        %v2516 = vadd.f32 %v2445, %v2515
        %v2517 = vpop.f32.mrb[0].mxu0
        %v2518 = vadd.f32 %v2447, %v2517
        %2519 = vdwg.mxu0
        %2520 = vmatprep.subr.mxu0 %v1096
        %2521 = vmatpush1.msra.mxu0 %v1095
        %2522 = vmatprep.subr.mxu0 %v1107
        %2523 = vmatpush1.msra.mxu0 %v1106
        %2524 = vmatprep.subr.mxu0 %v1118
        %2525 = vmatpush1.msra.mxu0 %v1117
        %2526 = vmatprep.subr.mxu0 %v1129
        %2527 = vmatpush1.msra.mxu0 %v1128
        %2528 = vmatprep.subr.mxu0 %v1140
        %2529 = vmatpush1.msra.mxu0 %v1139
        %2530 = vmatprep.subr.mxu0 %v1151
        %2531 = vmatpush1.msra.mxu0 %v1150
        %2532 = vmatprep.subr.mxu0 %v1162
        %2533 = vmatpush1.msra.mxu0 %v1161
        %2534 = vmatprep.subr.mxu0 %v1173
        %2535 = vmatpush1.msra.mxu0 %v1172
        %2536 = vmatprep.subr.mxu0 %v1184
        %2537 = vmatpush1.msra.mxu0 %v1183
        %2538 = vmatprep.subr.mxu0 %v1195
        %2539 = vmatpush1.msra.mxu0 %v1194
        %2540 = vmatprep.subr.mxu0 %v1206
        %2541 = vmatpush1.msra.mxu0 %v1205
        %2542 = vmatprep.subr.mxu0 %v1217
        %2543 = vmatpush1.msra.mxu0 %v1216
        %2544 = vmatprep.subr.mxu0 %v1228
        %2545 = vmatpush1.msra.mxu0 %v1227
        %2546 = vmatprep.subr.mxu0 %v1239
        %2547 = vmatpush1.msra.mxu0 %v1238
        %2548 = vmatprep.subr.mxu0 %v1250
        %2549 = vmatpush1.msra.mxu0 %v1249
        %2550 = vmatprep.subr.mxu0 %v1261
        %2551 = vmatpush1.msra.mxu0 %v1260
        %2552 = vmatprep.subr.mxu0 %v1272
        %2553 = vmatpush1.msra.mxu0 %v1271
        %2554 = vmatprep.subr.mxu0 %v1283
        %2555 = vmatpush1.msra.mxu0 %v1282
        %2556 = vmatprep.subr.mxu0 %v1294
        %2557 = vmatpush1.msra.mxu0 %v1293
        %2558 = vmatprep.subr.mxu0 %v1305
        %2559 = vmatpush1.msra.mxu0 %v1304
        %2560 = vmatprep.subr.mxu0 %v1316
        %2561 = vmatpush1.msra.mxu0 %v1315
        %2562 = vmatprep.subr.mxu0 %v1327
        %2563 = vmatpush1.msra.mxu0 %v1326
        %2564 = vmatprep.subr.mxu0 %v1338
        %2565 = vmatpush1.msra.mxu0 %v1337
        %2566 = vmatprep.subr.mxu0 %v1349
        %2567 = vmatpush1.msra.mxu0 %v1348
        %2568 = vmatprep.subr.mxu0 %v1360
        %2569 = vmatpush1.msra.mxu0 %v1359
        %2570 = vmatprep.subr.mxu0 %v1371
        %2571 = vmatpush1.msra.mxu0 %v1370
        %2572 = vmatprep.subr.mxu0 %v1382
        %2573 = vmatpush1.msra.mxu0 %v1381
        %2574 = vmatprep.subr.mxu0 %v1393
        %2575 = vmatpush1.msra.mxu0 %v1392
        %2576 = vmatprep.subr.mxu0 %v1404
        %2577 = vmatpush1.msra.mxu0 %v1403
        %2578 = vmatprep.subr.mxu0 %v1415
        %2579 = vmatpush1.msra.mxu0 %v1414
        %2580 = vmatprep.subr.mxu0 %v1426
        %2581 = vmatpush1.msra.mxu0 %v1425
        %2582 = vmatprep.subr.mxu0 %v1437
        %2583 = vmatpush1.msra.mxu0 %v1436
        %2584 = vmatprep.mubr.f32.mxu0 %v383
        %2585 = vmatmul.mubr.f32.gmra.mrb[0].mxu0 %v382
        %v2586 = vpop.f32.mrb[0].mxu0
        %v2587 = vadd.f32 %v2516, %v2586
        %v2588 = vpop.f32.mrb[0].mxu0
        %v2589 = vadd.f32 %v2518, %v2588
        %2590 = vdwg.mxu0
        %2591 = vmatprep.subr.mxu0 %v1448
        %2592 = vmatpush1.msra.mxu0 %v1447
        %2593 = vmatprep.subr.mxu0 %v1459
        %2594 = vmatpush1.msra.mxu0 %v1458
        %2595 = vmatprep.subr.mxu0 0.0
        %2596 = vmatpush1.msra.mxu0 0.0
        %2597 = vmatprep.subr.mxu0 0.0
        %2598 = vmatpush1.msra.mxu0 0.0
        %2599 = vmatprep.subr.mxu0 0.0
        %2600 = vmatpush1.msra.mxu0 0.0
        %2601 = vmatprep.subr.mxu0 0.0
        %2602 = vmatpush1.msra.mxu0 0.0
        %2603 = vmatprep.subr.mxu0 0.0
        %2604 = vmatpush1.msra.mxu0 0.0
        %2605 = vmatprep.subr.mxu0 0.0
        %2606 = vmatpush1.msra.mxu0 0.0
        %2607 = vmatprep.subr.mxu0 0.0
        %2608 = vmatpush1.msra.mxu0 0.0
        %2609 = vmatprep.subr.mxu0 0.0
        %2610 = vmatpush1.msra.mxu0 0.0
        %2611 = vmatprep.subr.mxu0 0.0
        %2612 = vmatpush1.msra.mxu0 0.0
        %2613 = vmatprep.subr.mxu0 0.0
        %2614 = vmatpush1.msra.mxu0 0.0
        %2615 = vmatprep.subr.mxu0 0.0
        %2616 = vmatpush1.msra.mxu0 0.0
        %2617 = vmatprep.subr.mxu0 0.0
        %2618 = vmatpush1.msra.mxu0 0.0
        %2619 = vmatprep.subr.mxu0 0.0
        %2620 = vmatpush1.msra.mxu0 0.0
        %2621 = vmatprep.subr.mxu0 0.0
        %2622 = vmatpush1.msra.mxu0 0.0
        %2623 = vmatprep.subr.mxu0 0.0
        %2624 = vmatpush1.msra.mxu0 0.0
        %2625 = vmatprep.subr.mxu0 0.0
        %2626 = vmatpush1.msra.mxu0 0.0
        %2627 = vmatprep.subr.mxu0 0.0
        %2628 = vmatpush1.msra.mxu0 0.0
        %2629 = vmatprep.subr.mxu0 0.0
        %2630 = vmatpush1.msra.mxu0 0.0
        %2631 = vmatprep.subr.mxu0 0.0
        %2632 = vmatpush1.msra.mxu0 0.0
        %2633 = vmatprep.subr.mxu0 0.0
        %2634 = vmatpush1.msra.mxu0 0.0
        %2635 = vmatprep.subr.mxu0 0.0
        %2636 = vmatpush1.msra.mxu0 0.0
        %2637 = vmatprep.subr.mxu0 0.0
        %2638 = vmatpush1.msra.mxu0 0.0
        %2639 = vmatprep.subr.mxu0 0.0
        %2640 = vmatpush1.msra.mxu0 0.0
        %2641 = vmatprep.subr.mxu0 0.0
        %2642 = vmatpush1.msra.mxu0 0.0
        %2643 = vmatprep.subr.mxu0 0.0
        %2644 = vmatpush1.msra.mxu0 0.0
        %2645 = vmatprep.subr.mxu0 0.0
        %2646 = vmatpush1.msra.mxu0 0.0
        %2647 = vmatprep.subr.mxu0 0.0
        %2648 = vmatpush1.msra.mxu0 0.0
        %2649 = vmatprep.subr.mxu0 0.0
        %2650 = vmatpush1.msra.mxu0 0.0
        %2651 = vmatprep.subr.mxu0 0.0
        %2652 = vmatpush1.msra.mxu0 0.0
        %2653 = vmatprep.subr.mxu0 0.0
        %2654 = vmatpush1.msra.mxu0 0.0
        %2655 = vmatprep.mubr.f32.mxu0 0.0
        %2656 = vmatmul.mubr.f32.gmra.mrb[0].mxu0 %v1524
        %v2657 = vpop.f32.mrb[0].mxu0
        %v2658 = vadd.f32 %v2587, %v2657
        %v2659 = vpop.f32.mrb[0].mxu0
        %v2660 = vadd.f32 %v2589, %v2659
        %2661 = vdwg.mxu0
        %2662 = vmatprep.subr.mxu0 %v394
        %2663 = vmatpush1.msra.mxu0 %v393
        %2664 = vmatprep.subr.mxu0 %v405
        %2665 = vmatpush1.msra.mxu0 %v404
        %2666 = vmatprep.subr.mxu0 %v416
        %2667 = vmatpush1.msra.mxu0 %v415
        %2668 = vmatprep.subr.mxu0 %v427
        %2669 = vmatpush1.msra.mxu0 %v426
        %2670 = vmatprep.subr.mxu0 %v438
        %2671 = vmatpush1.msra.mxu0 %v437
        %2672 = vmatprep.subr.mxu0 %v449
        %2673 = vmatpush1.msra.mxu0 %v448
        %2674 = vmatprep.subr.mxu0 %v460
        %2675 = vmatpush1.msra.mxu0 %v459
        %2676 = vmatprep.subr.mxu0 %v471
        %2677 = vmatpush1.msra.mxu0 %v470
        %2678 = vmatprep.subr.mxu0 %v482
        %2679 = vmatpush1.msra.mxu0 %v481
        %2680 = vmatprep.subr.mxu0 %v493
        %2681 = vmatpush1.msra.mxu0 %v492
        %2682 = vmatprep.subr.mxu0 %v504
        %2683 = vmatpush1.msra.mxu0 %v503
        %2684 = vmatprep.subr.mxu0 %v515
        %2685 = vmatpush1.msra.mxu0 %v514
        %2686 = vmatprep.subr.mxu0 %v526
        %2687 = vmatpush1.msra.mxu0 %v525
        %2688 = vmatprep.subr.mxu0 %v537
        %2689 = vmatpush1.msra.mxu0 %v536
        %2690 = vmatprep.subr.mxu0 %v548
        %2691 = vmatpush1.msra.mxu0 %v547
        %2692 = vmatprep.subr.mxu0 %v559
        %2693 = vmatpush1.msra.mxu0 %v558
        %2694 = vmatprep.subr.mxu0 %v570
        %2695 = vmatpush1.msra.mxu0 %v569
        %2696 = vmatprep.subr.mxu0 %v581
        %2697 = vmatpush1.msra.mxu0 %v580
        %2698 = vmatprep.subr.mxu0 %v592
        %2699 = vmatpush1.msra.mxu0 %v591
        %2700 = vmatprep.subr.mxu0 %v603
        %2701 = vmatpush1.msra.mxu0 %v602
        %2702 = vmatprep.subr.mxu0 %v614
        %2703 = vmatpush1.msra.mxu0 %v613
        %2704 = vmatprep.subr.mxu0 %v625
        %2705 = vmatpush1.msra.mxu0 %v624
        %2706 = vmatprep.subr.mxu0 %v636
        %2707 = vmatpush1.msra.mxu0 %v635
        %2708 = vmatprep.subr.mxu0 %v647
        %2709 = vmatpush1.msra.mxu0 %v646
        %2710 = vmatprep.subr.mxu0 %v658
        %2711 = vmatpush1.msra.mxu0 %v657
        %2712 = vmatprep.subr.mxu0 %v669
        %2713 = vmatpush1.msra.mxu0 %v668
        %2714 = vmatprep.subr.mxu0 %v680
        %2715 = vmatpush1.msra.mxu0 %v679
        %2716 = vmatprep.subr.mxu0 %v691
        %2717 = vmatpush1.msra.mxu0 %v690
        %2718 = vmatprep.subr.mxu0 %v702
        %2719 = vmatpush1.msra.mxu0 %v701
        %2720 = vmatprep.subr.mxu0 %v713
        %2721 = vmatpush1.msra.mxu0 %v712
        %2722 = vmatprep.subr.mxu0 %v724
        %2723 = vmatpush1.msra.mxu0 %v723
        %2724 = vmatprep.subr.mxu0 %v735
        %2725 = vmatpush1.msra.mxu0 %v734
        %2726 = vmatprep.mubr.f32.mxu0 %v379
        %2727 = vmatmul.mubr.f32.gmra.mrb[0].mxu0 %v378
        %v2728 = vpop.f32.mrb[0].mxu0
        %v2729 = vadd.f32 %v1502, %v2728
        %v2730 = vpop.f32.mrb[0].mxu0
        %v2731 = vadd.f32 %v1506, %v2730
        %2732 = vdwg.mxu0
        %2733 = vmatprep.subr.mxu0 %v746
        %2734 = vmatpush1.msra.mxu0 %v745
        %2735 = vmatprep.subr.mxu0 %v757
        %2736 = vmatpush1.msra.mxu0 %v756
        %2737 = vmatprep.subr.mxu0 %v768
        %2738 = vmatpush1.msra.mxu0 %v767
        %2739 = vmatprep.subr.mxu0 %v779
        %2740 = vmatpush1.msra.mxu0 %v778
        %2741 = vmatprep.subr.mxu0 %v790
        %2742 = vmatpush1.msra.mxu0 %v789
        %2743 = vmatprep.subr.mxu0 %v801
        %2744 = vmatpush1.msra.mxu0 %v800
        %2745 = vmatprep.subr.mxu0 %v812
        %2746 = vmatpush1.msra.mxu0 %v811
        %2747 = vmatprep.subr.mxu0 %v823
        %2748 = vmatpush1.msra.mxu0 %v822
        %2749 = vmatprep.subr.mxu0 %v834
        %2750 = vmatpush1.msra.mxu0 %v833
        %2751 = vmatprep.subr.mxu0 %v845
        %2752 = vmatpush1.msra.mxu0 %v844
        %2753 = vmatprep.subr.mxu0 %v856
        %2754 = vmatpush1.msra.mxu0 %v855
        %2755 = vmatprep.subr.mxu0 %v867
        %2756 = vmatpush1.msra.mxu0 %v866
        %2757 = vmatprep.subr.mxu0 %v878
        %2758 = vmatpush1.msra.mxu0 %v877
        %2759 = vmatprep.subr.mxu0 %v889
        %2760 = vmatpush1.msra.mxu0 %v888
        %2761 = vmatprep.subr.mxu0 %v900
        %2762 = vmatpush1.msra.mxu0 %v899
        %2763 = vmatprep.subr.mxu0 %v911
        %2764 = vmatpush1.msra.mxu0 %v910
        %2765 = vmatprep.subr.mxu0 %v922
        %2766 = vmatpush1.msra.mxu0 %v921
        %2767 = vmatprep.subr.mxu0 %v933
        %2768 = vmatpush1.msra.mxu0 %v932
        %2769 = vmatprep.subr.mxu0 %v944
        %2770 = vmatpush1.msra.mxu0 %v943
        %2771 = vmatprep.subr.mxu0 %v955
        %2772 = vmatpush1.msra.mxu0 %v954
        %2773 = vmatprep.subr.mxu0 %v966
        %2774 = vmatpush1.msra.mxu0 %v965
        %2775 = vmatprep.subr.mxu0 %v977
        %2776 = vmatpush1.msra.mxu0 %v976
        %2777 = vmatprep.subr.mxu0 %v988
        %2778 = vmatpush1.msra.mxu0 %v987
        %2779 = vmatprep.subr.mxu0 %v999
        %2780 = vmatpush1.msra.mxu0 %v998
        %2781 = vmatprep.subr.mxu0 %v1010
        %2782 = vmatpush1.msra.mxu0 %v1009
        %2783 = vmatprep.subr.mxu0 %v1021
        %2784 = vmatpush1.msra.mxu0 %v1020
        %2785 = vmatprep.subr.mxu0 %v1032
        %2786 = vmatpush1.msra.mxu0 %v1031
        %2787 = vmatprep.subr.mxu0 %v1043
        %2788 = vmatpush1.msra.mxu0 %v1042
        %2789 = vmatprep.subr.mxu0 %v1054
        %2790 = vmatpush1.msra.mxu0 %v1053
        %2791 = vmatprep.subr.mxu0 %v1065
        %2792 = vmatpush1.msra.mxu0 %v1064
        %2793 = vmatprep.subr.mxu0 %v1076
        %2794 = vmatpush1.msra.mxu0 %v1075
        %2795 = vmatprep.subr.mxu0 %v1087
        %2796 = vmatpush1.msra.mxu0 %v1086
        %2797 = vmatprep.mubr.f32.mxu0 %v381
        %2798 = vmatmul.mubr.f32.gmra.mrb[0].mxu0 %v380
        %v2799 = vpop.f32.mrb[0].mxu0
        %v2800 = vadd.f32 %v2729, %v2799
        %v2801 = vpop.f32.mrb[0].mxu0
        %v2802 = vadd.f32 %v2731, %v2801
        %2803 = vdwg.mxu0
        %2804 = vmatprep.subr.mxu0 %v1098
        %2805 = vmatpush1.msra.mxu0 %v1097
        %2806 = vmatprep.subr.mxu0 %v1109
        %2807 = vmatpush1.msra.mxu0 %v1108
        %2808 = vmatprep.subr.mxu0 %v1120
        %2809 = vmatpush1.msra.mxu0 %v1119
        %2810 = vmatprep.subr.mxu0 %v1131
        %2811 = vmatpush1.msra.mxu0 %v1130
        %2812 = vmatprep.subr.mxu0 %v1142
        %2813 = vmatpush1.msra.mxu0 %v1141
        %2814 = vmatprep.subr.mxu0 %v1153
        %2815 = vmatpush1.msra.mxu0 %v1152
        %2816 = vmatprep.subr.mxu0 %v1164
        %2817 = vmatpush1.msra.mxu0 %v1163
        %2818 = vmatprep.subr.mxu0 %v1175
        %2819 = vmatpush1.msra.mxu0 %v1174
        %2820 = vmatprep.subr.mxu0 %v1186
        %2821 = vmatpush1.msra.mxu0 %v1185
        %2822 = vmatprep.subr.mxu0 %v1197
        %2823 = vmatpush1.msra.mxu0 %v1196
        %2824 = vmatprep.subr.mxu0 %v1208
        %2825 = vmatpush1.msra.mxu0 %v1207
        %2826 = vmatprep.subr.mxu0 %v1219
        %2827 = vmatpush1.msra.mxu0 %v1218
        %2828 = vmatprep.subr.mxu0 %v1230
        %2829 = vmatpush1.msra.mxu0 %v1229
        %2830 = vmatprep.subr.mxu0 %v1241
        %2831 = vmatpush1.msra.mxu0 %v1240
        %2832 = vmatprep.subr.mxu0 %v1252
        %2833 = vmatpush1.msra.mxu0 %v1251
        %2834 = vmatprep.subr.mxu0 %v1263
        %2835 = vmatpush1.msra.mxu0 %v1262
        %2836 = vmatprep.subr.mxu0 %v1274
        %2837 = vmatpush1.msra.mxu0 %v1273
        %2838 = vmatprep.subr.mxu0 %v1285
        %2839 = vmatpush1.msra.mxu0 %v1284
        %2840 = vmatprep.subr.mxu0 %v1296
        %2841 = vmatpush1.msra.mxu0 %v1295
        %2842 = vmatprep.subr.mxu0 %v1307
        %2843 = vmatpush1.msra.mxu0 %v1306
        %2844 = vmatprep.subr.mxu0 %v1318
        %2845 = vmatpush1.msra.mxu0 %v1317
        %2846 = vmatprep.subr.mxu0 %v1329
        %2847 = vmatpush1.msra.mxu0 %v1328
        %2848 = vmatprep.subr.mxu0 %v1340
        %2849 = vmatpush1.msra.mxu0 %v1339
        %2850 = vmatprep.subr.mxu0 %v1351
        %2851 = vmatpush1.msra.mxu0 %v1350
        %2852 = vmatprep.subr.mxu0 %v1362
        %2853 = vmatpush1.msra.mxu0 %v1361
        %2854 = vmatprep.subr.mxu0 %v1373
        %2855 = vmatpush1.msra.mxu0 %v1372
        %2856 = vmatprep.subr.mxu0 %v1384
        %2857 = vmatpush1.msra.mxu0 %v1383
        %2858 = vmatprep.subr.mxu0 %v1395
        %2859 = vmatpush1.msra.mxu0 %v1394
        %2860 = vmatprep.subr.mxu0 %v1406
        %2861 = vmatpush1.msra.mxu0 %v1405
        %2862 = vmatprep.subr.mxu0 %v1417
        %2863 = vmatpush1.msra.mxu0 %v1416
        %2864 = vmatprep.subr.mxu0 %v1428
        %2865 = vmatpush1.msra.mxu0 %v1427
        %2866 = vmatprep.subr.mxu0 %v1439
        %2867 = vmatpush1.msra.mxu0 %v1438
        %2868 = vmatprep.mubr.f32.mxu0 %v383
        %2869 = vmatmul.mubr.f32.gmra.mrb[0].mxu0 %v382
        %v2870 = vpop.f32.mrb[0].mxu0
        %v2871 = vadd.f32 %v2800, %v2870
        %v2872 = vpop.f32.mrb[0].mxu0
        %v2873 = vadd.f32 %v2802, %v2872
        %2874 = vdwg.mxu0
        %2875 = vmatprep.subr.mxu0 %v1450
        %2876 = vmatpush1.msra.mxu0 %v1449
        %2877 = vmatprep.subr.mxu0 %v1461
        %2878 = vmatpush1.msra.mxu0 %v1460
        %2879 = vmatprep.subr.mxu0 0.0
        %2880 = vmatpush1.msra.mxu0 0.0
        %2881 = vmatprep.subr.mxu0 0.0
        %2882 = vmatpush1.msra.mxu0 0.0
        %2883 = vmatprep.subr.mxu0 0.0
        %2884 = vmatpush1.msra.mxu0 0.0
        %2885 = vmatprep.subr.mxu0 0.0
        %2886 = vmatpush1.msra.mxu0 0.0
        %2887 = vmatprep.subr.mxu0 0.0
        %2888 = vmatpush1.msra.mxu0 0.0
        %2889 = vmatprep.subr.mxu0 0.0
        %2890 = vmatpush1.msra.mxu0 0.0
        %2891 = vmatprep.subr.mxu0 0.0
        %2892 = vmatpush1.msra.mxu0 0.0
        %2893 = vmatprep.subr.mxu0 0.0
        %2894 = vmatpush1.msra.mxu0 0.0
        %2895 = vmatprep.subr.mxu0 0.0
        %2896 = vmatpush1.msra.mxu0 0.0
        %2897 = vmatprep.subr.mxu0 0.0
        %2898 = vmatpush1.msra.mxu0 0.0
        %2899 = vmatprep.subr.mxu0 0.0
        %2900 = vmatpush1.msra.mxu0 0.0
        %2901 = vmatprep.subr.mxu0 0.0
        %2902 = vmatpush1.msra.mxu0 0.0
        %2903 = vmatprep.subr.mxu0 0.0
        %2904 = vmatpush1.msra.mxu0 0.0
        %2905 = vmatprep.subr.mxu0 0.0
        %2906 = vmatpush1.msra.mxu0 0.0
        %2907 = vmatprep.subr.mxu0 0.0
        %2908 = vmatpush1.msra.mxu0 0.0
        %2909 = vmatprep.subr.mxu0 0.0
        %2910 = vmatpush1.msra.mxu0 0.0
        %2911 = vmatprep.subr.mxu0 0.0
        %2912 = vmatpush1.msra.mxu0 0.0
        %2913 = vmatprep.subr.mxu0 0.0
        %2914 = vmatpush1.msra.mxu0 0.0
        %2915 = vmatprep.subr.mxu0 0.0
        %2916 = vmatpush1.msra.mxu0 0.0
        %2917 = vmatprep.subr.mxu0 0.0
        %2918 = vmatpush1.msra.mxu0 0.0
        %2919 = vmatprep.subr.mxu0 0.0
        %2920 = vmatpush1.msra.mxu0 0.0
        %2921 = vmatprep.subr.mxu0 0.0
        %2922 = vmatpush1.msra.mxu0 0.0
        %2923 = vmatprep.subr.mxu0 0.0
        %2924 = vmatpush1.msra.mxu0 0.0
        %2925 = vmatprep.subr.mxu0 0.0
        %2926 = vmatpush1.msra.mxu0 0.0
        %2927 = vmatprep.subr.mxu0 0.0
        %2928 = vmatpush1.msra.mxu0 0.0
        %2929 = vmatprep.subr.mxu0 0.0
        %2930 = vmatpush1.msra.mxu0 0.0
        %2931 = vmatprep.subr.mxu0 0.0
        %2932 = vmatpush1.msra.mxu0 0.0
        %2933 = vmatprep.subr.mxu0 0.0
        %2934 = vmatpush1.msra.mxu0 0.0
        %2935 = vmatprep.subr.mxu0 0.0
        %2936 = vmatpush1.msra.mxu0 0.0
        %2937 = vmatprep.subr.mxu0 0.0
        %2938 = vmatpush1.msra.mxu0 0.0
        %2939 = vmatprep.mubr.f32.mxu0 0.0
        %2940 = vmatmul.mubr.f32.gmra.mrb[0].mxu0 %v1524
        %v2941 = vpop.f32.mrb[0].mxu0
        %v2942 = vadd.f32 %v2871, %v2941
        %v2943 = vpop.f32.mrb[0].mxu0
        %v2944 = vadd.f32 %v2873, %v2943
        %2945 = vdwg.mxu0
        %2946 = vmatprep.subr.mxu0 0.0
        %2947 = vmatpush1.msra.mxu0 %v395
        %2948 = vmatprep.subr.mxu0 0.0
        %2949 = vmatpush1.msra.mxu0 %v406
        %2950 = vmatprep.subr.mxu0 0.0
        %2951 = vmatpush1.msra.mxu0 %v417
        %2952 = vmatprep.subr.mxu0 0.0
        %2953 = vmatpush1.msra.mxu0 %v428
        %2954 = vmatprep.subr.mxu0 0.0
        %2955 = vmatpush1.msra.mxu0 %v439
        %2956 = vmatprep.subr.mxu0 0.0
        %2957 = vmatpush1.msra.mxu0 %v450
        %2958 = vmatprep.subr.mxu0 0.0
        %2959 = vmatpush1.msra.mxu0 %v461
        %2960 = vmatprep.subr.mxu0 0.0
        %2961 = vmatpush1.msra.mxu0 %v472
        %2962 = vmatprep.subr.mxu0 0.0
        %2963 = vmatpush1.msra.mxu0 %v483
        %2964 = vmatprep.subr.mxu0 0.0
        %2965 = vmatpush1.msra.mxu0 %v494
        %2966 = vmatprep.subr.mxu0 0.0
        %2967 = vmatpush1.msra.mxu0 %v505
        %2968 = vmatprep.subr.mxu0 0.0
        %2969 = vmatpush1.msra.mxu0 %v516
        %2970 = vmatprep.subr.mxu0 0.0
        %2971 = vmatpush1.msra.mxu0 %v527
        %2972 = vmatprep.subr.mxu0 0.0
        %2973 = vmatpush1.msra.mxu0 %v538
        %2974 = vmatprep.subr.mxu0 0.0
        %2975 = vmatpush1.msra.mxu0 %v549
        %2976 = vmatprep.subr.mxu0 0.0
        %2977 = vmatpush1.msra.mxu0 %v560
        %2978 = vmatprep.subr.mxu0 0.0
        %2979 = vmatpush1.msra.mxu0 %v571
        %2980 = vmatprep.subr.mxu0 0.0
        %2981 = vmatpush1.msra.mxu0 %v582
        %2982 = vmatprep.subr.mxu0 0.0
        %2983 = vmatpush1.msra.mxu0 %v593
        %2984 = vmatprep.subr.mxu0 0.0
        %2985 = vmatpush1.msra.mxu0 %v604
        %2986 = vmatprep.subr.mxu0 0.0
        %2987 = vmatpush1.msra.mxu0 %v615
        %2988 = vmatprep.subr.mxu0 0.0
        %2989 = vmatpush1.msra.mxu0 %v626
        %2990 = vmatprep.subr.mxu0 0.0
        %2991 = vmatpush1.msra.mxu0 %v637
        %2992 = vmatprep.subr.mxu0 0.0
        %2993 = vmatpush1.msra.mxu0 %v648
        %2994 = vmatprep.subr.mxu0 0.0
        %2995 = vmatpush1.msra.mxu0 %v659
        %2996 = vmatprep.subr.mxu0 0.0
        %2997 = vmatpush1.msra.mxu0 %v670
        %2998 = vmatprep.subr.mxu0 0.0
        %2999 = vmatpush1.msra.mxu0 %v681
        %3000 = vmatprep.subr.mxu0 0.0
        %3001 = vmatpush1.msra.mxu0 %v692
        %3002 = vmatprep.subr.mxu0 0.0
        %3003 = vmatpush1.msra.mxu0 %v703
        %3004 = vmatprep.subr.mxu0 0.0
        %3005 = vmatpush1.msra.mxu0 %v714
        %3006 = vmatprep.subr.mxu0 0.0
        %3007 = vmatpush1.msra.mxu0 %v725
        %3008 = vmatprep.subr.mxu0 0.0
        %3009 = vmatpush1.msra.mxu0 %v736
        %3010 = vmatprep.mubr.f32.mxu0 %v379
        %3011 = vmatmul.mubr.f32.gmra.mrb[0].mxu0 %v378
        %v3012 = vpop.f32.mrb[0].mxu0
        %v3013 = vadd.f32 %v1510, %v3012
        %v3014 = vpop.f32.mrb[0].mxu0
        %3015 = vdwg.mxu0
        %3016 = vmatprep.subr.mxu0 0.0
        %3017 = vmatpush1.msra.mxu0 %v747
        %3018 = vmatprep.subr.mxu0 0.0
        %3019 = vmatpush1.msra.mxu0 %v758
        %3020 = vmatprep.subr.mxu0 0.0
        %3021 = vmatpush1.msra.mxu0 %v769
        %3022 = vmatprep.subr.mxu0 0.0
        %3023 = vmatpush1.msra.mxu0 %v780
        %3024 = vmatprep.subr.mxu0 0.0
        %3025 = vmatpush1.msra.mxu0 %v791
        %3026 = vmatprep.subr.mxu0 0.0
        %3027 = vmatpush1.msra.mxu0 %v802
        %3028 = vmatprep.subr.mxu0 0.0
        %3029 = vmatpush1.msra.mxu0 %v813
        %3030 = vmatprep.subr.mxu0 0.0
        %3031 = vmatpush1.msra.mxu0 %v824
        %3032 = vmatprep.subr.mxu0 0.0
        %3033 = vmatpush1.msra.mxu0 %v835
        %3034 = vmatprep.subr.mxu0 0.0
        %3035 = vmatpush1.msra.mxu0 %v846
        %3036 = vmatprep.subr.mxu0 0.0
        %3037 = vmatpush1.msra.mxu0 %v857
        %3038 = vmatprep.subr.mxu0 0.0
        %3039 = vmatpush1.msra.mxu0 %v868
        %3040 = vmatprep.subr.mxu0 0.0
        %3041 = vmatpush1.msra.mxu0 %v879
        %3042 = vmatprep.subr.mxu0 0.0
        %3043 = vmatpush1.msra.mxu0 %v890
        %3044 = vmatprep.subr.mxu0 0.0
        %3045 = vmatpush1.msra.mxu0 %v901
        %3046 = vmatprep.subr.mxu0 0.0
        %3047 = vmatpush1.msra.mxu0 %v912
        %3048 = vmatprep.subr.mxu0 0.0
        %3049 = vmatpush1.msra.mxu0 %v923
        %3050 = vmatprep.subr.mxu0 0.0
        %3051 = vmatpush1.msra.mxu0 %v934
        %3052 = vmatprep.subr.mxu0 0.0
        %3053 = vmatpush1.msra.mxu0 %v945
        %3054 = vmatprep.subr.mxu0 0.0
        %3055 = vmatpush1.msra.mxu0 %v956
        %3056 = vmatprep.subr.mxu0 0.0
        %3057 = vmatpush1.msra.mxu0 %v967
        %3058 = vmatprep.subr.mxu0 0.0
        %3059 = vmatpush1.msra.mxu0 %v978
        %3060 = vmatprep.subr.mxu0 0.0
        %3061 = vmatpush1.msra.mxu0 %v989
        %3062 = vmatprep.subr.mxu0 0.0
        %3063 = vmatpush1.msra.mxu0 %v1000
        %3064 = vmatprep.subr.mxu0 0.0
        %3065 = vmatpush1.msra.mxu0 %v1011
        %3066 = vmatprep.subr.mxu0 0.0
        %3067 = vmatpush1.msra.mxu0 %v1022
        %3068 = vmatprep.subr.mxu0 0.0
        %3069 = vmatpush1.msra.mxu0 %v1033
        %3070 = vmatprep.subr.mxu0 0.0
        %3071 = vmatpush1.msra.mxu0 %v1044
        %3072 = vmatprep.subr.mxu0 0.0
        %3073 = vmatpush1.msra.mxu0 %v1055
        %3074 = vmatprep.subr.mxu0 0.0
        %3075 = vmatpush1.msra.mxu0 %v1066
        %3076 = vmatprep.subr.mxu0 0.0
        %3077 = vmatpush1.msra.mxu0 %v1077
        %3078 = vmatprep.subr.mxu0 0.0
        %3079 = vmatpush1.msra.mxu0 %v1088
        %3080 = vmatprep.mubr.f32.mxu0 %v381
        %3081 = vmatmul.mubr.f32.gmra.mrb[0].mxu0 %v380
        %v3082 = vpop.f32.mrb[0].mxu0
        %v3083 = vadd.f32 %v3013, %v3082
        %v3084 = vpop.f32.mrb[0].mxu0
        %3085 = vdwg.mxu0
        %3086 = vmatprep.subr.mxu0 0.0
        %3087 = vmatpush1.msra.mxu0 %v1099
        %3088 = vmatprep.subr.mxu0 0.0
        %3089 = vmatpush1.msra.mxu0 %v1110
        %3090 = vmatprep.subr.mxu0 0.0
        %3091 = vmatpush1.msra.mxu0 %v1121
        %3092 = vmatprep.subr.mxu0 0.0
        %3093 = vmatpush1.msra.mxu0 %v1132
        %3094 = vmatprep.subr.mxu0 0.0
        %3095 = vmatpush1.msra.mxu0 %v1143
        %3096 = vmatprep.subr.mxu0 0.0
        %3097 = vmatpush1.msra.mxu0 %v1154
        %3098 = vmatprep.subr.mxu0 0.0
        %3099 = vmatpush1.msra.mxu0 %v1165
        %3100 = vmatprep.subr.mxu0 0.0
        %3101 = vmatpush1.msra.mxu0 %v1176
        %3102 = vmatprep.subr.mxu0 0.0
        %3103 = vmatpush1.msra.mxu0 %v1187
        %3104 = vmatprep.subr.mxu0 0.0
        %3105 = vmatpush1.msra.mxu0 %v1198
        %3106 = vmatprep.subr.mxu0 0.0
        %3107 = vmatpush1.msra.mxu0 %v1209
        %3108 = vmatprep.subr.mxu0 0.0
        %3109 = vmatpush1.msra.mxu0 %v1220
        %3110 = vmatprep.subr.mxu0 0.0
        %3111 = vmatpush1.msra.mxu0 %v1231
        %3112 = vmatprep.subr.mxu0 0.0
        %3113 = vmatpush1.msra.mxu0 %v1242
        %3114 = vmatprep.subr.mxu0 0.0
        %3115 = vmatpush1.msra.mxu0 %v1253
        %3116 = vmatprep.subr.mxu0 0.0
        %3117 = vmatpush1.msra.mxu0 %v1264
        %3118 = vmatprep.subr.mxu0 0.0
        %3119 = vmatpush1.msra.mxu0 %v1275
        %3120 = vmatprep.subr.mxu0 0.0
        %3121 = vmatpush1.msra.mxu0 %v1286
        %3122 = vmatprep.subr.mxu0 0.0
        %3123 = vmatpush1.msra.mxu0 %v1297
        %3124 = vmatprep.subr.mxu0 0.0
        %3125 = vmatpush1.msra.mxu0 %v1308
        %3126 = vmatprep.subr.mxu0 0.0
        %3127 = vmatpush1.msra.mxu0 %v1319
        %3128 = vmatprep.subr.mxu0 0.0
        %3129 = vmatpush1.msra.mxu0 %v1330
        %3130 = vmatprep.subr.mxu0 0.0
        %3131 = vmatpush1.msra.mxu0 %v1341
        %3132 = vmatprep.subr.mxu0 0.0
        %3133 = vmatpush1.msra.mxu0 %v1352
        %3134 = vmatprep.subr.mxu0 0.0
        %3135 = vmatpush1.msra.mxu0 %v1363
        %3136 = vmatprep.subr.mxu0 0.0
        %3137 = vmatpush1.msra.mxu0 %v1374
        %3138 = vmatprep.subr.mxu0 0.0
        %3139 = vmatpush1.msra.mxu0 %v1385
        %3140 = vmatprep.subr.mxu0 0.0
        %3141 = vmatpush1.msra.mxu0 %v1396
        %3142 = vmatprep.subr.mxu0 0.0
        %3143 = vmatpush1.msra.mxu0 %v1407
        %3144 = vmatprep.subr.mxu0 0.0
        %3145 = vmatpush1.msra.mxu0 %v1418
        %3146 = vmatprep.subr.mxu0 0.0
        %3147 = vmatpush1.msra.mxu0 %v1429
        %3148 = vmatprep.subr.mxu0 0.0
        %3149 = vmatpush1.msra.mxu0 %v1440
        %3150 = vmatprep.mubr.f32.mxu0 %v383
        %3151 = vmatmul.mubr.f32.gmra.mrb[0].mxu0 %v382
        %v3152 = vpop.f32.mrb[0].mxu0
        %v3153 = vadd.f32 %v3083, %v3152
        %v3154 = vpop.f32.mrb[0].mxu0
        %3155 = vdwg.mxu0
        %3156 = vmatprep.subr.mxu0 0.0
        %3157 = vmatpush1.msra.mxu0 %v1451
        %3158 = vmatprep.subr.mxu0 0.0
        %3159 = vmatpush1.msra.mxu0 %v1462
        %3160 = vmatprep.subr.mxu0 0.0
        %3161 = vmatpush1.msra.mxu0 0.0
        %3162 = vmatprep.subr.mxu0 0.0
        %3163 = vmatpush1.msra.mxu0 0.0
        %3164 = vmatprep.subr.mxu0 0.0
        %3165 = vmatpush1.msra.mxu0 0.0
        %3166 = vmatprep.subr.mxu0 0.0
        %3167 = vmatpush1.msra.mxu0 0.0
        %3168 = vmatprep.subr.mxu0 0.0
        %3169 = vmatpush1.msra.mxu0 0.0
        %3170 = vmatprep.subr.mxu0 0.0
        %3171 = vmatpush1.msra.mxu0 0.0
        %3172 = vmatprep.subr.mxu0 0.0
        %3173 = vmatpush1.msra.mxu0 0.0
        %3174 = vmatprep.subr.mxu0 0.0
        %3175 = vmatpush1.msra.mxu0 0.0
        %3176 = vmatprep.subr.mxu0 0.0
        %3177 = vmatpush1.msra.mxu0 0.0
        %3178 = vmatprep.subr.mxu0 0.0
        %3179 = vmatpush1.msra.mxu0 0.0
        %3180 = vmatprep.subr.mxu0 0.0
        %3181 = vmatpush1.msra.mxu0 0.0
        %3182 = vmatprep.subr.mxu0 0.0
        %3183 = vmatpush1.msra.mxu0 0.0
        %3184 = vmatprep.subr.mxu0 0.0
        %3185 = vmatpush1.msra.mxu0 0.0
        %3186 = vmatprep.subr.mxu0 0.0
        %3187 = vmatpush1.msra.mxu0 0.0
        %3188 = vmatprep.subr.mxu0 0.0
        %3189 = vmatpush1.msra.mxu0 0.0
        %3190 = vmatprep.subr.mxu0 0.0
        %3191 = vmatpush1.msra.mxu0 0.0
        %3192 = vmatprep.subr.mxu0 0.0
        %3193 = vmatpush1.msra.mxu0 0.0
        %3194 = vmatprep.subr.mxu0 0.0
        %3195 = vmatpush1.msra.mxu0 0.0
        %3196 = vmatprep.subr.mxu0 0.0
        %3197 = vmatpush1.msra.mxu0 0.0
        %3198 = vmatprep.subr.mxu0 0.0
        %3199 = vmatpush1.msra.mxu0 0.0
        %3200 = vmatprep.subr.mxu0 0.0
        %3201 = vmatpush1.msra.mxu0 0.0
        %3202 = vmatprep.subr.mxu0 0.0
        %3203 = vmatpush1.msra.mxu0 0.0
        %3204 = vmatprep.subr.mxu0 0.0
        %3205 = vmatpush1.msra.mxu0 0.0
        %3206 = vmatprep.subr.mxu0 0.0
        %3207 = vmatpush1.msra.mxu0 0.0
        %3208 = vmatprep.subr.mxu0 0.0
        %3209 = vmatpush1.msra.mxu0 0.0
        %3210 = vmatprep.subr.mxu0 0.0
        %3211 = vmatpush1.msra.mxu0 0.0
        %3212 = vmatprep.subr.mxu0 0.0
        %3213 = vmatpush1.msra.mxu0 0.0
        %3214 = vmatprep.subr.mxu0 0.0
        %3215 = vmatpush1.msra.mxu0 0.0
        %3216 = vmatprep.subr.mxu0 0.0
        %3217 = vmatpush1.msra.mxu0 0.0
        %3218 = vmatprep.subr.mxu0 0.0
        %3219 = vmatpush1.msra.mxu0 0.0
        %3220 = vmatprep.mubr.f32.mxu0 0.0
        %3221 = vmatmul.mubr.f32.gmra.mrb[0].mxu0 %v1524
        %v3222 = vpop.f32.mrb[0].mxu0
        %v3223 = vadd.f32 %v3153, %v3222
        %v3224 = vpop.f32.mrb[0].mxu0
        %3225 = vdwg.mxu0
        %v3226 = vmax.f32 %v1806, 0.0
        %v3227 = vmax.f32 %v1808, 0.0
        %v3228 = vmax.f32 %v2090, 0.0
        %v3229 = vmax.f32 %v2092, 0.0
        %v3230 = vmax.f32 %v2374, 0.0
        %v3231 = vmax.f32 %v2376, 0.0
        %v3232 = vmax.f32 %v2658, 0.0
        %v3233 = vmax.f32 %v2660, 0.0
        %v3234 = vmax.f32 %v2942, 0.0
        %v3235 = vmax.f32 %v2944, 0.0
        %v3236 = vmax.f32 %v3223, 0.0
        %v3237 = vld [vmem:[#allocation2] sm:$0xff]
        %v3238 = vld [vmem:[%s309] sm:$0xff]
        %v3239 = vld [vmem:[%s309 + $0x8] sm:$0xff]
        %v3240 = vld [vmem:[%s309 + $0x10] sm:$0xff]
        %v3241 = vld [vmem:[%s309 + $0x18] sm:$0xff]
        %v3242 = vld [vmem:[%s309 + $0x20] sm:$0xff]
        %v3243 = vld [vmem:[%s309 + $0x28] sm:$0xff]
        %v3244 = vld [vmem:[%s309 + $0x30] sm:$0xff]
        %v3245 = vld [vmem:[%s309 + $0x38] sm:$0xff]
        %v3246 = vld [vmem:[%s309 + $0x40] sm:$0xff]
        %v3247 = vld [vmem:[%s309 + $0x48] sm:$0xff]
        %v3248 = vld [vmem:[%s309 + $0x50] sm:$0xff]
        %v3249 = vld [vmem:[%s309 + $0x58] sm:$0xff]
        %v3250 = vld [vmem:[%s309 + $0x60] sm:$0xff]
        %v3251 = vld [vmem:[%s309 + $0x68] sm:$0xff]
        %v3252 = vld [vmem:[%s309 + $0x70] sm:$0xff]
        %v3253 = vld [vmem:[%s309 + $0x78] sm:$0xff]
        %v3254 = vld [vmem:[%s309 + $0x80] sm:$0xff]
        %v3255 = vld [vmem:[%s309 + $0x88] sm:$0xff]
        %v3256 = vld [vmem:[%s309 + $0x90] sm:$0xff]
        %v3257 = vld [vmem:[%s309 + $0x98] sm:$0xff]
        %v3258 = vld [vmem:[%s309 + $0xa0] sm:$0xff]
        %v3259 = vld [vmem:[%s309 + $0xa8] sm:$0xff]
        %v3260 = vld [vmem:[%s309 + $0xb0] sm:$0xff]
        %v3261 = vld [vmem:[%s309 + $0xb8] sm:$0xff]
        %v3262 = vld [vmem:[%s309 + $0xc0] sm:$0xff]
        %v3263 = vld [vmem:[%s309 + $0xc8] sm:$0xff]
        %v3264 = vld [vmem:[%s309 + $0xd0] sm:$0xff]
        %v3265 = vld [vmem:[%s309 + $0xd8] sm:$0xff]
        %v3266 = vld [vmem:[%s309 + $0xe0] sm:$0xff]
        %v3267 = vld [vmem:[%s309 + $0xe8] sm:$0xff]
        %v3268 = vld [vmem:[%s309 + $0xf0] sm:$0xff]
        %v3269 = vld [vmem:[%s309 + $0xf8] sm:$0xff]
        %v3270 = vld [vmem:[%s309 + $0x100] sm:$0xff]
        %v3271 = vld [vmem:[%s309 + $0x108] sm:$0xff]
        %v3272 = vld [vmem:[%s309 + $0x110] sm:$0xff]
        %v3273 = vld [vmem:[%s309 + $0x118] sm:$0xff]
        %v3274 = vld [vmem:[%s309 + $0x120] sm:$0xff]
        %v3275 = vld [vmem:[%s309 + $0x128] sm:$0xff]
        %v3276 = vld [vmem:[%s309 + $0x130] sm:$0xff]
        %v3277 = vld [vmem:[%s309 + $0x138] sm:$0xff]
        %v3278 = vld [vmem:[%s309 + $0x140] sm:$0xff]
        %v3279 = vld [vmem:[%s309 + $0x148] sm:$0xff]
        %v3280 = vld [vmem:[%s309 + $0x150] sm:$0xff]
        %v3281 = vld [vmem:[%s309 + $0x158] sm:$0xff]
        %v3282 = vld [vmem:[%s309 + $0x160] sm:$0xff]
        %v3283 = vld [vmem:[%s309 + $0x168] sm:$0xff]
        %v3284 = vld [vmem:[%s309 + $0x170] sm:$0xff]
        %v3285 = vld [vmem:[%s309 + $0x178] sm:$0xff]
        %v3286 = vld [vmem:[%s309 + $0x180] sm:$0xff]
        %v3287 = vld [vmem:[%s309 + $0x188] sm:$0xff]
        %v3288 = vld [vmem:[%s309 + $0x190] sm:$0xff]
        %v3289 = vld [vmem:[%s309 + $0x198] sm:$0xff]
        %v3290 = vld [vmem:[%s309 + $0x1a0] sm:$0xff]
        %v3291 = vld [vmem:[%s309 + $0x1a8] sm:$0xff]
        %v3292 = vld [vmem:[%s309 + $0x1b0] sm:$0xff]
        %v3293 = vld [vmem:[%s309 + $0x1b8] sm:$0xff]
        %v3294 = vld [vmem:[%s309 + $0x1c0] sm:$0xff]
        %v3295 = vld [vmem:[%s309 + $0x1c8] sm:$0xff]
        %v3296 = vld [vmem:[%s309 + $0x1d0] sm:$0xff]
        %v3297 = vld [vmem:[%s309 + $0x1d8] sm:$0xff]
        %v3298 = vld [vmem:[%s309 + $0x1e0] sm:$0xff]
        %v3299 = vld [vmem:[%s309 + $0x1e8] sm:$0xff]
        %v3300 = vld [vmem:[%s309 + $0x1f0] sm:$0xff]
        %v3301 = vld [vmem:[%s309 + $0x1f8] sm:$0xff]
        %v3302 = vld [vmem:[%s309 + $0x200] sm:$0xff]
        %v3303 = vld [vmem:[%s309 + $0x208] sm:$0xff]
        %v3304 = vld [vmem:[%s309 + $0x210] sm:$0xff]
        %v3305 = vld [vmem:[%s309 + $0x218] sm:$0xff]
        %v3306 = vld [vmem:[%s309 + $0x220] sm:$0xff]
        %v3307 = vld [vmem:[%s309 + $0x228] sm:$0xff]
        %v3308 = vld [vmem:[%s309 + $0x230] sm:$0xff]
        %v3309 = vld [vmem:[%s309 + $0x238] sm:$0xff]
        %v3310 = vld [vmem:[%s309 + $0x240] sm:$0xff]
        %v3311 = vld [vmem:[%s309 + $0x248] sm:$0xff]
        %v3312 = vld [vmem:[%s309 + $0x250] sm:$0xff]
        %v3313 = vld [vmem:[%s309 + $0x258] sm:$0xff]
        %v3314 = vld [vmem:[%s309 + $0x260] sm:$0xff]
        %v3315 = vld [vmem:[%s309 + $0x268] sm:$0xff]
        %v3316 = vld [vmem:[%s309 + $0x270] sm:$0xff]
        %v3317 = vld [vmem:[%s309 + $0x278] sm:$0xff]
        %v3318 = vld [vmem:[%s309 + $0x280] sm:$0xff]
        %v3319 = vld [vmem:[%s309 + $0x288] sm:$0xff]
        %v3320 = vld [vmem:[%s309 + $0x290] sm:$0xff]
        %v3321 = vld [vmem:[%s309 + $0x298] sm:$0xff]
        %v3322 = vld [vmem:[%s309 + $0x2a0] sm:$0xff]
        %v3323 = vld [vmem:[%s309 + $0x2a8] sm:$0xff]
        %v3324 = vld [vmem:[%s309 + $0x2b0] sm:$0xff]
        %v3325 = vld [vmem:[%s309 + $0x2b8] sm:$0xff]
        %v3326 = vld [vmem:[%s309 + $0x2c0] sm:$0xff]
        %v3327 = vld [vmem:[%s309 + $0x2c8] sm:$0xff]
        %v3328 = vld [vmem:[%s309 + $0x2d0] sm:$0xff]
        %v3329 = vld [vmem:[%s309 + $0x2d8] sm:$0xff]
        %v3330 = vld [vmem:[%s309 + $0x2e0] sm:$0xff]
        %v3331 = vld [vmem:[%s309 + $0x2e8] sm:$0xff]
        %v3332 = vld [vmem:[%s309 + $0x2f0] sm:$0xff]
        %v3333 = vld [vmem:[%s309 + $0x2f8] sm:$0xff]
        %v3334 = vld [vmem:[%s309 + $0x300] sm:$0xff]
        %v3335 = vld [vmem:[%s309 + $0x308] sm:$0xff]
        %v3336 = vld [vmem:[%s309 + $0x310] sm:$0xff]
        %v3337 = vld [vmem:[%s309 + $0x318] sm:$0xff]
        %v3338 = vld [vmem:[%s309 + $0x320] sm:$0xff]
        %v3339 = vld [vmem:[%s309 + $0x328] sm:$0xff]
        %v3340 = vld [vmem:[%s309 + $0x330] sm:$0xff]
        %v3341 = vld [vmem:[%s309 + $0x338] sm:$0xff]
        %v3342 = vld [vmem:[%s309 + $0x340] sm:$0xff]
        %v3343 = vld [vmem:[%s309 + $0x348] sm:$0xff]
        %v3344 = vld [vmem:[%s309 + $0x350] sm:$0xff]
        %v3345 = vld [vmem:[%s309 + $0x358] sm:$0xff]
        %v3346 = vld [vmem:[%s309 + $0x360] sm:$0xff]
        %v3347 = vld [vmem:[%s309 + $0x368] sm:$0xff]
        %v3348 = vld [vmem:[%s309 + $0x370] sm:$0xff]
        %v3349 = vld [vmem:[%s309 + $0x378] sm:$0xff]
        %v3350 = vld [vmem:[%s309 + $0x380] sm:$0xff]
        %v3351 = vld [vmem:[%s309 + $0x388] sm:$0xff]
        %v3352 = vld [vmem:[%s309 + $0x390] sm:$0xff]
        %v3353 = vld [vmem:[%s309 + $0x398] sm:$0xff]
        %v3354 = vld [vmem:[%s309 + $0x3a0] sm:$0xff]
        %v3355 = vld [vmem:[%s309 + $0x3a8] sm:$0xff]
        %v3356 = vld [vmem:[%s309 + $0x3b0] sm:$0xff]
        %v3357 = vld [vmem:[%s309 + $0x3b8] sm:$0xff]
        %v3358 = vld [vmem:[%s309 + $0x3c0] sm:$0xff]
        %v3359 = vld [vmem:[%s309 + $0x3c8] sm:$0xff]
        %v3360 = vld [vmem:[%s309 + $0x3d0] sm:$0xff]
        %v3361 = vld [vmem:[%s309 + $0x3d8] sm:$0xff]
        %v3362 = vld [vmem:[%s309 + $0x3e0] sm:$0xff]
        %v3363 = vld [vmem:[%s309 + $0x3e8] sm:$0xff]
        %v3364 = vld [vmem:[%s309 + $0x3f0] sm:$0xff]
        %v3365 = vld [vmem:[%s309 + $0x3f8] sm:$0xff]
        %v3366 = vld [vmem:[%s309 + $0x400] sm:$0xff]
        %v3367 = vld [vmem:[%s309 + $0x408] sm:$0xff]
        %v3368 = vld [vmem:[%s309 + $0x410] sm:$0xff]
        %v3369 = vld [vmem:[%s309 + $0x418] sm:$0xff]
        %v3370 = vld [vmem:[%s309 + $0x420] sm:$0xff]
        %v3371 = vld [vmem:[%s309 + $0x428] sm:$0xff]
        %v3372 = vld [vmem:[%s309 + $0x430] sm:$0xff]
        %v3373 = vld [vmem:[%s309 + $0x438] sm:$0xff]
        %v3374 = vld [vmem:[%s309 + $0x440] sm:$0xff]
        %v3375 = vld [vmem:[%s309 + $0x448] sm:$0xff]
        %v3376 = vld [vmem:[%s309 + $0x450] sm:$0xff]
        %v3377 = vld [vmem:[%s309 + $0x458] sm:$0xff]
        %v3378 = vld [vmem:[%s309 + $0x460] sm:$0xff]
        %v3379 = vld [vmem:[%s309 + $0x468] sm:$0xff]
        %v3380 = vld [vmem:[%s309 + $0x470] sm:$0xff]
        %v3381 = vld [vmem:[%s309 + $0x478] sm:$0xff]
        %v3382 = vld [vmem:[%s309 + $0x480] sm:$0xff]
        %v3383 = vld [vmem:[%s309 + $0x488] sm:$0xff]
        %v3384 = vld [vmem:[%s309 + $0x490] sm:$0xff]
        %v3385 = vld [vmem:[%s309 + $0x498] sm:$0xff]
        %v3386 = vld [vmem:[%s309 + $0x4a0] sm:$0xff]
        %v3387 = vld [vmem:[%s309 + $0x4a8] sm:$0xff]
        %v3388 = vld [vmem:[%s309 + $0x4b0] sm:$0xff]
        %v3389 = vld [vmem:[%s309 + $0x4b8] sm:$0xff]
        %v3390 = vld [vmem:[%s309 + $0x4c0] sm:$0xff]
        %v3391 = vld [vmem:[%s309 + $0x4c8] sm:$0xff]
        %v3392 = vld [vmem:[%s309 + $0x4d0] sm:$0xff]
        %v3393 = vld [vmem:[%s309 + $0x4d8] sm:$0xff]
        %v3394 = vld [vmem:[%s309 + $0x4e0] sm:$0xff]
        %v3395 = vld [vmem:[%s309 + $0x4e8] sm:$0xff]
        %v3396 = vld [vmem:[%s309 + $0x4f0] sm:$0xff]
        %v3397 = vld [vmem:[%s309 + $0x4f8] sm:$0xff]
        %v3398 = vld [vmem:[%s309 + $0x500] sm:$0xff]
        %v3399 = vld [vmem:[%s309 + $0x508] sm:$0xff]
        %v3400 = vld [vmem:[%s309 + $0x510] sm:$0xff]
        %v3401 = vld [vmem:[%s309 + $0x518] sm:$0xff]
        %v3402 = vld [vmem:[%s309 + $0x520] sm:$0xff]
        %v3403 = vld [vmem:[%s309 + $0x528] sm:$0xff]
        %v3404 = vld [vmem:[%s309 + $0x530] sm:$0xff]
        %v3405 = vld [vmem:[%s309 + $0x538] sm:$0xff]
        %v3406 = vld [vmem:[%s309 + $0x540] sm:$0xff]
        %v3407 = vld [vmem:[%s309 + $0x548] sm:$0xff]
        %v3408 = vld [vmem:[%s309 + $0x550] sm:$0xff]
        %v3409 = vld [vmem:[%s309 + $0x558] sm:$0xff]
        %v3410 = vld [vmem:[%s309 + $0x560] sm:$0xff]
        %v3411 = vld [vmem:[%s309 + $0x568] sm:$0xff]
        %v3412 = vld [vmem:[%s309 + $0x570] sm:$0xff]
        %v3413 = vld [vmem:[%s309 + $0x578] sm:$0xff]
        %3414 = vmatprep.subr.mxu0 0.0
        %3415 = vmatpush1.msra.mxu0 %v3238
        %3416 = vmatprep.subr.mxu0 0.0
        %3417 = vmatpush1.msra.mxu0 %v3239
        %3418 = vmatprep.subr.mxu0 0.0
        %3419 = vmatpush1.msra.mxu0 %v3240
        %3420 = vmatprep.subr.mxu0 0.0
        %3421 = vmatpush1.msra.mxu0 %v3241
        %3422 = vmatprep.subr.mxu0 0.0
        %3423 = vmatpush1.msra.mxu0 %v3242
        %3424 = vmatprep.subr.mxu0 0.0
        %3425 = vmatpush1.msra.mxu0 %v3243
        %3426 = vmatprep.subr.mxu0 0.0
        %3427 = vmatpush1.msra.mxu0 %v3244
        %3428 = vmatprep.subr.mxu0 0.0
        %3429 = vmatpush1.msra.mxu0 %v3245
        %3430 = vmatprep.subr.mxu0 0.0
        %3431 = vmatpush1.msra.mxu0 %v3246
        %3432 = vmatprep.subr.mxu0 0.0
        %3433 = vmatpush1.msra.mxu0 %v3247
        %3434 = vmatprep.subr.mxu0 0.0
        %3435 = vmatpush1.msra.mxu0 %v3248
        %3436 = vmatprep.subr.mxu0 0.0
        %3437 = vmatpush1.msra.mxu0 %v3249
        %3438 = vmatprep.subr.mxu0 0.0
        %3439 = vmatpush1.msra.mxu0 %v3250
        %3440 = vmatprep.subr.mxu0 0.0
        %3441 = vmatpush1.msra.mxu0 %v3251
        %3442 = vmatprep.subr.mxu0 0.0
        %3443 = vmatpush1.msra.mxu0 %v3252
        %3444 = vmatprep.subr.mxu0 0.0
        %3445 = vmatpush1.msra.mxu0 %v3253
        %3446 = vmatprep.subr.mxu0 0.0
        %3447 = vmatpush1.msra.mxu0 %v3254
        %3448 = vmatprep.subr.mxu0 0.0
        %3449 = vmatpush1.msra.mxu0 %v3255
        %3450 = vmatprep.subr.mxu0 0.0
        %3451 = vmatpush1.msra.mxu0 %v3256
        %3452 = vmatprep.subr.mxu0 0.0
        %3453 = vmatpush1.msra.mxu0 %v3257
        %3454 = vmatprep.subr.mxu0 0.0
        %3455 = vmatpush1.msra.mxu0 %v3258
        %3456 = vmatprep.subr.mxu0 0.0
        %3457 = vmatpush1.msra.mxu0 %v3259
        %3458 = vmatprep.subr.mxu0 0.0
        %3459 = vmatpush1.msra.mxu0 %v3260
        %3460 = vmatprep.subr.mxu0 0.0
        %3461 = vmatpush1.msra.mxu0 %v3261
        %3462 = vmatprep.subr.mxu0 0.0
        %3463 = vmatpush1.msra.mxu0 %v3262
        %3464 = vmatprep.subr.mxu0 0.0
        %3465 = vmatpush1.msra.mxu0 %v3263
        %3466 = vmatprep.subr.mxu0 0.0
        %3467 = vmatpush1.msra.mxu0 %v3264
        %3468 = vmatprep.subr.mxu0 0.0
        %3469 = vmatpush1.msra.mxu0 %v3265
        %3470 = vmatprep.subr.mxu0 0.0
        %3471 = vmatpush1.msra.mxu0 %v3266
        %3472 = vmatprep.subr.mxu0 0.0
        %3473 = vmatpush1.msra.mxu0 %v3267
        %3474 = vmatprep.subr.mxu0 0.0
        %3475 = vmatpush1.msra.mxu0 %v3268
        %3476 = vmatprep.subr.mxu0 0.0
        %3477 = vmatpush1.msra.mxu0 %v3269
        %3478 = vmatprep.mubr.f32.mxu0 %v3227
        %3479 = vmatmul.mubr.f32.gmra.mrb[0].mxu0 %v3226
        %v3480 = vpop.f32.mrb[0].mxu0
        %v3481 = vadd.f32 0.0, %v3480
        %v3482 = vpop.f32.mrb[0].mxu0
        %3483 = vdwg.mxu0
        %3484 = vmatprep.subr.mxu0 0.0
        %3485 = vmatpush1.msra.mxu0 %v3270
        %3486 = vmatprep.subr.mxu0 0.0
        %3487 = vmatpush1.msra.mxu0 %v3271
        %3488 = vmatprep.subr.mxu0 0.0
        %3489 = vmatpush1.msra.mxu0 %v3272
        %3490 = vmatprep.subr.mxu0 0.0
        %3491 = vmatpush1.msra.mxu0 %v3273
        %3492 = vmatprep.subr.mxu0 0.0
        %3493 = vmatpush1.msra.mxu0 %v3274
        %3494 = vmatprep.subr.mxu0 0.0
        %3495 = vmatpush1.msra.mxu0 %v3275
        %3496 = vmatprep.subr.mxu0 0.0
        %3497 = vmatpush1.msra.mxu0 %v3276
        %3498 = vmatprep.subr.mxu0 0.0
        %3499 = vmatpush1.msra.mxu0 %v3277
        %3500 = vmatprep.subr.mxu0 0.0
        %3501 = vmatpush1.msra.mxu0 %v3278
        %3502 = vmatprep.subr.mxu0 0.0
        %3503 = vmatpush1.msra.mxu0 %v3279
        %3504 = vmatprep.subr.mxu0 0.0
        %3505 = vmatpush1.msra.mxu0 %v3280
        %3506 = vmatprep.subr.mxu0 0.0
        %3507 = vmatpush1.msra.mxu0 %v3281
        %3508 = vmatprep.subr.mxu0 0.0
        %3509 = vmatpush1.msra.mxu0 %v3282
        %3510 = vmatprep.subr.mxu0 0.0
        %3511 = vmatpush1.msra.mxu0 %v3283
        %3512 = vmatprep.subr.mxu0 0.0
        %3513 = vmatpush1.msra.mxu0 %v3284
        %3514 = vmatprep.subr.mxu0 0.0
        %3515 = vmatpush1.msra.mxu0 %v3285
        %3516 = vmatprep.subr.mxu0 0.0
        %3517 = vmatpush1.msra.mxu0 %v3286
        %3518 = vmatprep.subr.mxu0 0.0
        %3519 = vmatpush1.msra.mxu0 %v3287
        %3520 = vmatprep.subr.mxu0 0.0
        %3521 = vmatpush1.msra.mxu0 %v3288
        %3522 = vmatprep.subr.mxu0 0.0
        %3523 = vmatpush1.msra.mxu0 %v3289
        %3524 = vmatprep.subr.mxu0 0.0
        %3525 = vmatpush1.msra.mxu0 %v3290
        %3526 = vmatprep.subr.mxu0 0.0
        %3527 = vmatpush1.msra.mxu0 %v3291
        %3528 = vmatprep.subr.mxu0 0.0
        %3529 = vmatpush1.msra.mxu0 %v3292
        %3530 = vmatprep.subr.mxu0 0.0
        %3531 = vmatpush1.msra.mxu0 %v3293
        %3532 = vmatprep.subr.mxu0 0.0
        %3533 = vmatpush1.msra.mxu0 %v3294
        %3534 = vmatprep.subr.mxu0 0.0
        %3535 = vmatpush1.msra.mxu0 %v3295
        %3536 = vmatprep.subr.mxu0 0.0
        %3537 = vmatpush1.msra.mxu0 %v3296
        %3538 = vmatprep.subr.mxu0 0.0
        %3539 = vmatpush1.msra.mxu0 %v3297
        %3540 = vmatprep.subr.mxu0 0.0
        %3541 = vmatpush1.msra.mxu0 %v3298
        %3542 = vmatprep.subr.mxu0 0.0
        %3543 = vmatpush1.msra.mxu0 %v3299
        %3544 = vmatprep.subr.mxu0 0.0
        %3545 = vmatpush1.msra.mxu0 %v3300
        %3546 = vmatprep.subr.mxu0 0.0
        %3547 = vmatpush1.msra.mxu0 %v3301
        %3548 = vmatprep.mubr.f32.mxu0 %v3229
        %3549 = vmatmul.mubr.f32.gmra.mrb[0].mxu0 %v3228
        %v3550 = vpop.f32.mrb[0].mxu0
        %v3551 = vadd.f32 %v3481, %v3550
        %v3552 = vpop.f32.mrb[0].mxu0
        %3553 = vdwg.mxu0
        %3554 = vmatprep.subr.mxu0 0.0
        %3555 = vmatpush1.msra.mxu0 %v3302
        %3556 = vmatprep.subr.mxu0 0.0
        %3557 = vmatpush1.msra.mxu0 %v3303
        %3558 = vmatprep.subr.mxu0 0.0
        %3559 = vmatpush1.msra.mxu0 %v3304
        %3560 = vmatprep.subr.mxu0 0.0
        %3561 = vmatpush1.msra.mxu0 %v3305
        %3562 = vmatprep.subr.mxu0 0.0
        %3563 = vmatpush1.msra.mxu0 %v3306
        %3564 = vmatprep.subr.mxu0 0.0
        %3565 = vmatpush1.msra.mxu0 %v3307
        %3566 = vmatprep.subr.mxu0 0.0
        %3567 = vmatpush1.msra.mxu0 %v3308
        %3568 = vmatprep.subr.mxu0 0.0
        %3569 = vmatpush1.msra.mxu0 %v3309
        %3570 = vmatprep.subr.mxu0 0.0
        %3571 = vmatpush1.msra.mxu0 %v3310
        %3572 = vmatprep.subr.mxu0 0.0
        %3573 = vmatpush1.msra.mxu0 %v3311
        %3574 = vmatprep.subr.mxu0 0.0
        %3575 = vmatpush1.msra.mxu0 %v3312
        %3576 = vmatprep.subr.mxu0 0.0
        %3577 = vmatpush1.msra.mxu0 %v3313
        %3578 = vmatprep.subr.mxu0 0.0
        %3579 = vmatpush1.msra.mxu0 %v3314
        %3580 = vmatprep.subr.mxu0 0.0
        %3581 = vmatpush1.msra.mxu0 %v3315
        %3582 = vmatprep.subr.mxu0 0.0
        %3583 = vmatpush1.msra.mxu0 %v3316
        %3584 = vmatprep.subr.mxu0 0.0
        %3585 = vmatpush1.msra.mxu0 %v3317
        %3586 = vmatprep.subr.mxu0 0.0
        %3587 = vmatpush1.msra.mxu0 %v3318
        %3588 = vmatprep.subr.mxu0 0.0
        %3589 = vmatpush1.msra.mxu0 %v3319
        %3590 = vmatprep.subr.mxu0 0.0
        %3591 = vmatpush1.msra.mxu0 %v3320
        %3592 = vmatprep.subr.mxu0 0.0
        %3593 = vmatpush1.msra.mxu0 %v3321
        %3594 = vmatprep.subr.mxu0 0.0
        %3595 = vmatpush1.msra.mxu0 %v3322
        %3596 = vmatprep.subr.mxu0 0.0
        %3597 = vmatpush1.msra.mxu0 %v3323
        %3598 = vmatprep.subr.mxu0 0.0
        %3599 = vmatpush1.msra.mxu0 %v3324
        %3600 = vmatprep.subr.mxu0 0.0
        %3601 = vmatpush1.msra.mxu0 %v3325
        %3602 = vmatprep.subr.mxu0 0.0
        %3603 = vmatpush1.msra.mxu0 %v3326
        %3604 = vmatprep.subr.mxu0 0.0
        %3605 = vmatpush1.msra.mxu0 %v3327
        %3606 = vmatprep.subr.mxu0 0.0
        %3607 = vmatpush1.msra.mxu0 %v3328
        %3608 = vmatprep.subr.mxu0 0.0
        %3609 = vmatpush1.msra.mxu0 %v3329
        %3610 = vmatprep.subr.mxu0 0.0
        %3611 = vmatpush1.msra.mxu0 %v3330
        %3612 = vmatprep.subr.mxu0 0.0
        %3613 = vmatpush1.msra.mxu0 %v3331
        %3614 = vmatprep.subr.mxu0 0.0
        %3615 = vmatpush1.msra.mxu0 %v3332
        %3616 = vmatprep.subr.mxu0 0.0
        %3617 = vmatpush1.msra.mxu0 %v3333
        %3618 = vmatprep.mubr.f32.mxu0 %v3231
        %3619 = vmatmul.mubr.f32.gmra.mrb[0].mxu0 %v3230
        %v3620 = vpop.f32.mrb[0].mxu0
        %v3621 = vadd.f32 %v3551, %v3620
        %v3622 = vpop.f32.mrb[0].mxu0
        %3623 = vdwg.mxu0
        %3624 = vmatprep.subr.mxu0 0.0
        %3625 = vmatpush1.msra.mxu0 %v3334
        %3626 = vmatprep.subr.mxu0 0.0
        %3627 = vmatpush1.msra.mxu0 %v3335
        %3628 = vmatprep.subr.mxu0 0.0
        %3629 = vmatpush1.msra.mxu0 %v3336
        %3630 = vmatprep.subr.mxu0 0.0
        %3631 = vmatpush1.msra.mxu0 %v3337
        %3632 = vmatprep.subr.mxu0 0.0
        %3633 = vmatpush1.msra.mxu0 %v3338
        %3634 = vmatprep.subr.mxu0 0.0
        %3635 = vmatpush1.msra.mxu0 %v3339
        %3636 = vmatprep.subr.mxu0 0.0
        %3637 = vmatpush1.msra.mxu0 %v3340
        %3638 = vmatprep.subr.mxu0 0.0
        %3639 = vmatpush1.msra.mxu0 %v3341
        %3640 = vmatprep.subr.mxu0 0.0
        %3641 = vmatpush1.msra.mxu0 %v3342
        %3642 = vmatprep.subr.mxu0 0.0
        %3643 = vmatpush1.msra.mxu0 %v3343
        %3644 = vmatprep.subr.mxu0 0.0
        %3645 = vmatpush1.msra.mxu0 %v3344
        %3646 = vmatprep.subr.mxu0 0.0
        %3647 = vmatpush1.msra.mxu0 %v3345
        %3648 = vmatprep.subr.mxu0 0.0
        %3649 = vmatpush1.msra.mxu0 %v3346
        %3650 = vmatprep.subr.mxu0 0.0
        %3651 = vmatpush1.msra.mxu0 %v3347
        %3652 = vmatprep.subr.mxu0 0.0
        %3653 = vmatpush1.msra.mxu0 %v3348
        %3654 = vmatprep.subr.mxu0 0.0
        %3655 = vmatpush1.msra.mxu0 %v3349
        %3656 = vmatprep.subr.mxu0 0.0
        %3657 = vmatpush1.msra.mxu0 %v3350
        %3658 = vmatprep.subr.mxu0 0.0
        %3659 = vmatpush1.msra.mxu0 %v3351
        %3660 = vmatprep.subr.mxu0 0.0
        %3661 = vmatpush1.msra.mxu0 %v3352
        %3662 = vmatprep.subr.mxu0 0.0
        %3663 = vmatpush1.msra.mxu0 %v3353
        %3664 = vmatprep.subr.mxu0 0.0
        %3665 = vmatpush1.msra.mxu0 %v3354
        %3666 = vmatprep.subr.mxu0 0.0
        %3667 = vmatpush1.msra.mxu0 %v3355
        %3668 = vmatprep.subr.mxu0 0.0
        %3669 = vmatpush1.msra.mxu0 %v3356
        %3670 = vmatprep.subr.mxu0 0.0
        %3671 = vmatpush1.msra.mxu0 %v3357
        %3672 = vmatprep.subr.mxu0 0.0
        %3673 = vmatpush1.msra.mxu0 %v3358
        %3674 = vmatprep.subr.mxu0 0.0
        %3675 = vmatpush1.msra.mxu0 %v3359
        %3676 = vmatprep.subr.mxu0 0.0
        %3677 = vmatpush1.msra.mxu0 %v3360
        %3678 = vmatprep.subr.mxu0 0.0
        %3679 = vmatpush1.msra.mxu0 %v3361
        %3680 = vmatprep.subr.mxu0 0.0
        %3681 = vmatpush1.msra.mxu0 %v3362
        %3682 = vmatprep.subr.mxu0 0.0
        %3683 = vmatpush1.msra.mxu0 %v3363
        %3684 = vmatprep.subr.mxu0 0.0
        %3685 = vmatpush1.msra.mxu0 %v3364
        %3686 = vmatprep.subr.mxu0 0.0
        %3687 = vmatpush1.msra.mxu0 %v3365
        %3688 = vmatprep.mubr.f32.mxu0 %v3233
        %3689 = vmatmul.mubr.f32.gmra.mrb[0].mxu0 %v3232
        %v3690 = vpop.f32.mrb[0].mxu0
        %v3691 = vadd.f32 %v3621, %v3690
        %v3692 = vpop.f32.mrb[0].mxu0
        %3693 = vdwg.mxu0
        %3694 = vmatprep.subr.mxu0 0.0
        %3695 = vmatpush1.msra.mxu0 %v3366
        %3696 = vmatprep.subr.mxu0 0.0
        %3697 = vmatpush1.msra.mxu0 %v3367
        %3698 = vmatprep.subr.mxu0 0.0
        %3699 = vmatpush1.msra.mxu0 %v3368
        %3700 = vmatprep.subr.mxu0 0.0
        %3701 = vmatpush1.msra.mxu0 %v3369
        %3702 = vmatprep.subr.mxu0 0.0
        %3703 = vmatpush1.msra.mxu0 %v3370
        %3704 = vmatprep.subr.mxu0 0.0
        %3705 = vmatpush1.msra.mxu0 %v3371
        %3706 = vmatprep.subr.mxu0 0.0
        %3707 = vmatpush1.msra.mxu0 %v3372
        %3708 = vmatprep.subr.mxu0 0.0
        %3709 = vmatpush1.msra.mxu0 %v3373
        %3710 = vmatprep.subr.mxu0 0.0
        %3711 = vmatpush1.msra.mxu0 %v3374
        %3712 = vmatprep.subr.mxu0 0.0
        %3713 = vmatpush1.msra.mxu0 %v3375
        %3714 = vmatprep.subr.mxu0 0.0
        %3715 = vmatpush1.msra.mxu0 %v3376
        %3716 = vmatprep.subr.mxu0 0.0
        %3717 = vmatpush1.msra.mxu0 %v3377
        %3718 = vmatprep.subr.mxu0 0.0
        %3719 = vmatpush1.msra.mxu0 %v3378
        %3720 = vmatprep.subr.mxu0 0.0
        %3721 = vmatpush1.msra.mxu0 %v3379
        %3722 = vmatprep.subr.mxu0 0.0
        %3723 = vmatpush1.msra.mxu0 %v3380
        %3724 = vmatprep.subr.mxu0 0.0
        %3725 = vmatpush1.msra.mxu0 %v3381
        %3726 = vmatprep.subr.mxu0 0.0
        %3727 = vmatpush1.msra.mxu0 %v3382
        %3728 = vmatprep.subr.mxu0 0.0
        %3729 = vmatpush1.msra.mxu0 %v3383
        %3730 = vmatprep.subr.mxu0 0.0
        %3731 = vmatpush1.msra.mxu0 %v3384
        %3732 = vmatprep.subr.mxu0 0.0
        %3733 = vmatpush1.msra.mxu0 %v3385
        %3734 = vmatprep.subr.mxu0 0.0
        %3735 = vmatpush1.msra.mxu0 %v3386
        %3736 = vmatprep.subr.mxu0 0.0
        %3737 = vmatpush1.msra.mxu0 %v3387
        %3738 = vmatprep.subr.mxu0 0.0
        %3739 = vmatpush1.msra.mxu0 %v3388
        %3740 = vmatprep.subr.mxu0 0.0
        %3741 = vmatpush1.msra.mxu0 %v3389
        %3742 = vmatprep.subr.mxu0 0.0
        %3743 = vmatpush1.msra.mxu0 %v3390
        %3744 = vmatprep.subr.mxu0 0.0
        %3745 = vmatpush1.msra.mxu0 %v3391
        %3746 = vmatprep.subr.mxu0 0.0
        %3747 = vmatpush1.msra.mxu0 %v3392
        %3748 = vmatprep.subr.mxu0 0.0
        %3749 = vmatpush1.msra.mxu0 %v3393
        %3750 = vmatprep.subr.mxu0 0.0
        %3751 = vmatpush1.msra.mxu0 %v3394
        %3752 = vmatprep.subr.mxu0 0.0
        %3753 = vmatpush1.msra.mxu0 %v3395
        %3754 = vmatprep.subr.mxu0 0.0
        %3755 = vmatpush1.msra.mxu0 %v3396
        %3756 = vmatprep.subr.mxu0 0.0
        %3757 = vmatpush1.msra.mxu0 %v3397
        %3758 = vmatprep.mubr.f32.mxu0 %v3235
        %3759 = vmatmul.mubr.f32.gmra.mrb[0].mxu0 %v3234
        %v3760 = vpop.f32.mrb[0].mxu0
        %v3761 = vadd.f32 %v3691, %v3760
        %v3762 = vpop.f32.mrb[0].mxu0
        %3763 = vdwg.mxu0
        %3764 = vmatprep.subr.mxu0 0.0
        %3765 = vmatpush1.msra.mxu0 %v3398
        %3766 = vmatprep.subr.mxu0 0.0
        %3767 = vmatpush1.msra.mxu0 %v3399
        %3768 = vmatprep.subr.mxu0 0.0
        %3769 = vmatpush1.msra.mxu0 %v3400
        %3770 = vmatprep.subr.mxu0 0.0
        %3771 = vmatpush1.msra.mxu0 %v3401
        %3772 = vmatprep.subr.mxu0 0.0
        %3773 = vmatpush1.msra.mxu0 %v3402
        %3774 = vmatprep.subr.mxu0 0.0
        %3775 = vmatpush1.msra.mxu0 %v3403
        %3776 = vmatprep.subr.mxu0 0.0
        %3777 = vmatpush1.msra.mxu0 %v3404
        %3778 = vmatprep.subr.mxu0 0.0
        %3779 = vmatpush1.msra.mxu0 %v3405
        %3780 = vmatprep.subr.mxu0 0.0
        %3781 = vmatpush1.msra.mxu0 %v3406
        %3782 = vmatprep.subr.mxu0 0.0
        %3783 = vmatpush1.msra.mxu0 %v3407
        %3784 = vmatprep.subr.mxu0 0.0
        %3785 = vmatpush1.msra.mxu0 %v3408
        %3786 = vmatprep.subr.mxu0 0.0
        %3787 = vmatpush1.msra.mxu0 %v3409
        %3788 = vmatprep.subr.mxu0 0.0
        %3789 = vmatpush1.msra.mxu0 %v3410
        %3790 = vmatprep.subr.mxu0 0.0
        %3791 = vmatpush1.msra.mxu0 %v3411
        %3792 = vmatprep.subr.mxu0 0.0
        %3793 = vmatpush1.msra.mxu0 %v3412
        %3794 = vmatprep.subr.mxu0 0.0
        %3795 = vmatpush1.msra.mxu0 %v3413
        %3796 = vmatprep.subr.mxu0 0.0
        %3797 = vmatpush1.msra.mxu0 0.0
        %3798 = vmatprep.subr.mxu0 0.0
        %3799 = vmatpush1.msra.mxu0 0.0
        %3800 = vmatprep.subr.mxu0 0.0
        %3801 = vmatpush1.msra.mxu0 0.0
        %3802 = vmatprep.subr.mxu0 0.0
        %3803 = vmatpush1.msra.mxu0 0.0
        %3804 = vmatprep.subr.mxu0 0.0
        %3805 = vmatpush1.msra.mxu0 0.0
        %3806 = vmatprep.subr.mxu0 0.0
        %3807 = vmatpush1.msra.mxu0 0.0
        %3808 = vmatprep.subr.mxu0 0.0
        %3809 = vmatpush1.msra.mxu0 0.0
        %3810 = vmatprep.subr.mxu0 0.0
        %3811 = vmatpush1.msra.mxu0 0.0
        %3812 = vmatprep.subr.mxu0 0.0
        %3813 = vmatpush1.msra.mxu0 0.0
        %3814 = vmatprep.subr.mxu0 0.0
        %3815 = vmatpush1.msra.mxu0 0.0
        %3816 = vmatprep.subr.mxu0 0.0
        %3817 = vmatpush1.msra.mxu0 0.0
        %3818 = vmatprep.subr.mxu0 0.0
        %3819 = vmatpush1.msra.mxu0 0.0
        %3820 = vmatprep.subr.mxu0 0.0
        %3821 = vmatpush1.msra.mxu0 0.0
        %3822 = vmatprep.subr.mxu0 0.0
        %3823 = vmatpush1.msra.mxu0 0.0
        %3824 = vmatprep.subr.mxu0 0.0
        %3825 = vmatpush1.msra.mxu0 0.0
        %3826 = vmatprep.subr.mxu0 0.0
        %3827 = vmatpush1.msra.mxu0 0.0
        %3828 = vmatprep.mubr.f32.mxu0 0.0
        %3829 = vmatmul.mubr.f32.gmra.mrb[0].mxu0 %v3236
        %v3830 = vpop.f32.mrb[0].mxu0
        %v3831 = vadd.f32 %v3761, %v3830
        %v3832 = vpop.f32.mrb[0].mxu0
        %3833 = vdwg.mxu0
        %v3834 = vadd.f32 %v3237, %v3831
        %3835 = vst [vmem:[#allocation2] sm:$0xff] %v3834
        %p3836 = scmp.eq.s32.totalorder %s28, 3
        // Predicated region
        $region61: #{neural_network_forward.1} parent=39 // pred_check
          %p3837 = pneg %p3836
        $region62: #{neural_network_forward.1} parent=39 // pred_check_branch
          %3839 = sbr.rel (%p3837) target = $region64
        $region63: #{neural_network_forward.1} parent=39 // pred_region
          %v3840 = vld [vmem:[#allocation2] sm:$0xff]
          %3841 = vst [vmem:[%s365] sm:$0xff] %v3840
        $region64: #{neural_network_forward.1} parent=39 // pred_fallthru
          _
        %p3842 = scmp.lt.s32.totalorder %s27, 0
        %s3843 = scalar_select %p3842, %s27, 0
        %s3844 = smul.addr %s3843, 8
        %s3845 = scalar_lea.vmem %s5, %s3844
        // Predicated region
        $region65: #{neural_network_forward.1} parent=39 // pred_check
          %p3846 = pneg %p178
        $region66: #{neural_network_forward.1} parent=39 // pred_check_branch
          %3848 = sbr.rel (%p3846) target = $region68
        $region67: #{neural_network_forward.1} parent=39 // pred_region
          _
        $region68: #{neural_network_forward.1} parent=39 // pred_fallthru
          _
        // Predicated region
        $region69: #{neural_network_forward.1} parent=39 // pred_check
          %p3849 = pneg %p178
        $region70: #{neural_network_forward.1} parent=39 // pred_check_branch
          %3851 = sbr.rel (%p3849) target = $region72
        $region71: #{neural_network_forward.1} parent=39 // pred_region
          %p3852 = scmp.lt.s32.totalorder %s27, 0
          %s3853 = scalar_select %p3852, %s27, 0
          %s3854 = smul.addr %s3853, 8
          %s3855 = scalar_lea.vmem %s5, %s3854
        $region72: #{neural_network_forward.1} parent=39 // pred_fallthru
          _
      $region40: #{neural_network_forward.1} parent=5 // pred_fallthru
        _
      %p3856 = scmp.le.s32.totalorder 2, %s18
      // Predicated region
      $region73: #{neural_network_forward.1} parent=5 // pred_check
        %p3857 = pneg %p3856
      $region74: #{neural_network_forward.1} parent=5 // pred_check_branch
        %3859 = sbr.rel (%p3857) target = $region76
      $region75: #{neural_network_forward.1} parent=5 // pred_region
        %s3860 = ssub.s32 %s18, 2
      $region76: #{neural_network_forward.1} parent=5 // pred_fallthru
        _
    $region6: #{neural_network_forward.1} parent=1 // loop_footer
      %s22 = sadd.s32 1, %s18
    $region7: #{neural_network_forward.1} parent=1 // loop_footer_branch
      %17 = sbr.rel target = $region3
    $region8: #{neural_network_forward.1} parent=1 // loop_exit
      _
    %3861 = vsyncpa [#allocation4], 1
    %s3862 = scalar_lea.sflag [#allocation4], 1
    %3863 = vsyncpa %s3862, 1
    %3864 = vsyncpa [#allocation6], 1
    %s3865 = scalar_lea.sflag [#allocation6], 1
    %3866 = vsyncpa %s3865, 1
    %3867 = vsyncpa [#allocation9], 1

</llo_original>
